<compile_context>
chip_gen: v6e
topology: v6e:2x2x1
jax: 0.10.0
libtpu: 0.0.40
codegen_flags: <defaults>
</compile_context>

<pallas_src>
import math
import functools

import jax
import jax.numpy as jnp
from jax import lax
from jax.experimental import pallas as pl
from jax.experimental.pallas import tpu as pltpu


def _round_up(x, m):
    return (x + m - 1) // m * m


def _row_blocks(m, max_block=256):
    """Pad rows to sublane alignment; prefer a single big block over many tiny steps."""
    mp = _round_up(m, 8)
    if mp <= max_block:
        return mp, mp
    mp = _round_up(m, max_block)
    return mp, max_block


def _ln_f32(z, g, b, eps=1e-5):
    mu = jnp.mean(z, axis=-1, keepdims=True)
    var = jnp.mean((z - mu) ** 2, axis=-1, keepdims=True)
    return (z - mu) * lax.rsqrt(var + eps) * g + b


_PAR = pltpu.CompilerParams(dimension_semantics=("parallel",))


# ----------------------------- Pallas kernels -----------------------------

def _img_adapter_kernel(x_ref, w1_ref, b1_ref, w2_ref, b2_ref,
                        w3_ref, b3_ref, g_ref, bt_ref, o_ref):
    """visual_compressor (two 1x1 convs + ReLU) fused with visual_adapter
    (Linear + LayerNorm + ReLU), token-major, bf16 MXU / f32 accumulation."""
    x = x_ref[...].astype(jnp.bfloat16)
    h = jnp.dot(x, w1_ref[...], preferred_element_type=jnp.float32) + b1_ref[...]
    h = jnp.maximum(h, 0.0).astype(jnp.bfloat16)
    h = jnp.dot(h, w2_ref[...], preferred_element_type=jnp.float32) + b2_ref[...]
    h = jnp.maximum(h, 0.0).astype(jnp.bfloat16)
    y = jnp.dot(h, w3_ref[...], preferred_element_type=jnp.float32) + b3_ref[...]
    y = _ln_f32(y, g_ref[...], bt_ref[...])
    o_ref[...] = jnp.maximum(y, 0.0).astype(o_ref.dtype)


def img_compress_adapt(x, p):
    m, c = x.shape
    d = p["vis_w"].shape[1]
    mp, tm = _row_blocks(m)
    xp = jnp.pad(x, ((0, mp - m), (0, 0))) if mp != m else x
    out = pl.pallas_call(
        _img_adapter_kernel,
        out_shape=jax.ShapeDtypeStruct((mp, d), jnp.float32),
        grid=(mp // tm,),
        in_specs=[
            pl.BlockSpec((tm, c), lambda i: (i, 0)),
            pl.BlockSpec((c, d), lambda i: (0, 0)),
            pl.BlockSpec((1, d), lambda i: (0, 0)),
            pl.BlockSpec((d, d), lambda i: (0, 0)),
            pl.BlockSpec((1, d), lambda i: (0, 0)),
            pl.BlockSpec((d, d), lambda i: (0, 0)),
            pl.BlockSpec((1, d), lambda i: (0, 0)),
            pl.BlockSpec((1, d), lambda i: (0, 0)),
            pl.BlockSpec((1, d), lambda i: (0, 0)),
        ],
        out_specs=pl.BlockSpec((tm, d), lambda i: (i, 0)),
        compiler_params=_PAR,
    )(xp, p["comp_w1"], p["comp_b1"].reshape(1, d),
      p["comp_w2"], p["comp_b2"].reshape(1, d),
      p["vis_w"], p["vis_b"].reshape(1, d),
      p["vis_g"].reshape(1, d), p["vis_beta"].reshape(1, d))
    return out[:m]


def _linear_ln_relu_kernel(x_ref, w_ref, b_ref, g_ref, bt_ref, o_ref):
    x = x_ref[...].astype(jnp.bfloat16)
    y = jnp.dot(x, w_ref[...], preferred_element_type=jnp.float32) + b_ref[...]
    y = _ln_f32(y, g_ref[...], bt_ref[...])
    o_ref[...] = jnp.maximum(y, 0.0).astype(o_ref.dtype)


def linear_ln_relu(x, w, b, gamma, beta):
    """nn.Sequential(Linear, LayerNorm, ReLU) fused (text / bbox adapters)."""
    m, k = x.shape
    n = w.shape[1]
    mp, tm = _row_blocks(m)
    xp = jnp.pad(x, ((0, mp - m), (0, 0))) if mp != m else x
    out = pl.pallas_call(
        _linear_ln_relu_kernel,
        out_shape=jax.ShapeDtypeStruct((mp, n), jnp.float32),
        grid=(mp // tm,),
        in_specs=[
            pl.BlockSpec((tm, k), lambda i: (i, 0)),
            pl.BlockSpec((k, n), lambda i: (0, 0)),
            pl.BlockSpec((1, n), lambda i: (0, 0)),
            pl.BlockSpec((1, n), lambda i: (0, 0)),
            pl.BlockSpec((1, n), lambda i: (0, 0)),
        ],
        out_specs=pl.BlockSpec((tm, n), lambda i: (i, 0)),
        compiler_params=_PAR,
    )(xp, w, b.reshape(1, n), gamma.reshape(1, n), beta.reshape(1, n))
    return out[:m]


def _encoder_layer_kernel(x_ref, w_in_ref, b_in_ref, w_out_ref, b_out_ref,
                          g1_ref, bt1_ref, w_ff1_ref, b_ff1_ref,
                          w_ff2_ref, b_ff2_ref, g2_ref, bt2_ref, o_ref,
                          *, nhead, s_valid, scale):
    """Fully fused nn.TransformerEncoderLayer (batch_first, post-norm, ReLU FFN,
    eval/no-dropout). One grid step = one (B*T) sequence item, [S, D] in VMEM."""
    x = x_ref[0].astype(jnp.float32)                               # [S, D]
    s, d = x.shape
    dh = d // nhead

    # --- packed QKV projection (bf16 MXU, f32 accumulate) ---
    qkv = jnp.dot(x.astype(jnp.bfloat16), w_in_ref[...],
                  preferred_element_type=jnp.float32) + b_in_ref[...]
    q = qkv[:, :d].astype(jnp.bfloat16)
    k = qkv[:, d:2 * d].astype(jnp.bfloat16)
    v = qkv[:, 2 * d:].astype(jnp.bfloat16)

    # mask padded key positions (sequence was padded 61 -> 64)
    key_valid = lax.broadcasted_iota(jnp.int32, (s, s), 1) < s_valid

    # --- per-head attention, heads sliced statically; output stays lane-dense ---
    heads = []
    for h in range(nhead):
        qh = q[:, h * dh:(h + 1) * dh]
        kh = k[:, h * dh:(h + 1) * dh]
        vh = v[:, h * dh:(h + 1) * dh]
        sc = lax.dot_general(qh, kh, (((1,), (1,)), ((), ())),
                             preferred_element_type=jnp.float32) * scale   # [S, S]
        sc = jnp.where(key_valid, sc, -1e30)
        sc = sc - jnp.max(sc, axis=-1, keepdims=True)
        p = jnp.exp(sc)
        p = p * pl.reciprocal(jnp.sum(p, axis=-1, keepdims=True), approx=True)
        heads.append(jnp.dot(p.astype(jnp.bfloat16), vh,
                             preferred_element_type=jnp.float32))
    attn = jnp.concatenate(heads, axis=-1)                          # [S, D]
    attn = jnp.dot(attn.astype(jnp.bfloat16), w_out_ref[...],
                   preferred_element_type=jnp.float32) + b_out_ref[...]

    # --- residual + LayerNorm 1 ---
    x1 = _ln_f32(x + attn, g1_ref[...], bt1_ref[...])

    # --- FFN (ReLU) ---
    h1 = jnp.dot(x1.astype(jnp.bfloat16), w_ff1_ref[...],
                 preferred_element_type=jnp.float32) + b_ff1_ref[...]
    h1 = jnp.maximum(h1, 0.0).astype(jnp.bfloat16)
    y = jnp.dot(h1, w_ff2_ref[...],
                preferred_element_type=jnp.float32) + b_ff2_ref[...]

    # --- residual + LayerNorm 2 ---
    o_ref[0] = _ln_f32(x1 + y, g2_ref[...], bt2_ref[...]).astype(o_ref.dtype)


def encoder_layer(x, p, nhead, s_valid):
    bt, s, d = x.shape
    ffn = p["w_ff1"].shape[1]
    scale = 1.0 / math.sqrt(d // nhead)
    return pl.pallas_call(
        functools.partial(_encoder_layer_kernel, nhead=nhead,
                          s_valid=s_valid, scale=scale),
        out_shape=jax.ShapeDtypeStruct((bt, s, d), x.dtype),
        grid=(bt,),
        in_specs=[
            pl.BlockSpec((1, s, d), lambda i: (i, 0, 0)),
            pl.BlockSpec((d, 3 * d), lambda i: (0, 0)),
            pl.BlockSpec((1, 3 * d), lambda i: (0, 0)),
            pl.BlockSpec((d, d), lambda i: (0, 0)),
            pl.BlockSpec((1, d), lambda i: (0, 0)),
            pl.BlockSpec((1, d), lambda i: (0, 0)),
            pl.BlockSpec((1, d), lambda i: (0, 0)),
            pl.BlockSpec((d, ffn), lambda i: (0, 0)),
            pl.BlockSpec((1, ffn), lambda i: (0, 0)),
            pl.BlockSpec((ffn, d), lambda i: (0, 0)),
            pl.BlockSpec((1, d), lambda i: (0, 0)),
            pl.BlockSpec((1, d), lambda i: (0, 0)),
            pl.BlockSpec((1, d), lambda i: (0, 0)),
        ],
        out_specs=pl.BlockSpec((1, s, d), lambda i: (i, 0, 0)),
        compiler_params=_PAR,
    )(x,
      p["w_in"], p["b_in"].reshape(1, 3 * d),
      p["w_out"], p["b_out"].reshape(1, d),
      p["g1"].reshape(1, d), p["beta1"].reshape(1, d),
      p["w_ff1"], p["b_ff1"].reshape(1, ffn),
      p["w_ff2"], p["b_ff2"].reshape(1, d),
      p["g2"].reshape(1, d), p["beta2"].reshape(1, d))


# ------------------------------- model glue --------------------------------

def positional_encode(pos, d_model=32):
    """PositionalEncoder: pe[...,0::2]=sin(pos*div_term), pe[...,1::2]=cos(...)."""
    div_term = jnp.exp(
        jnp.arange(0, d_model, 2, dtype=jnp.float32) * (-math.log(10000.0) / d_model))
    ang = pos[..., None] * div_term  # [..., d_model//2]
    return jnp.stack([jnp.sin(ang), jnp.cos(ang)], axis=-1).reshape(*pos.shape, d_model)


def get_best_of_two_bboxes(box_a, box_b):
    # TODO(synk): source of get_best_of_two_bboxes was not provided; stand-in picks,
    # per 5-tuple box, the candidate with larger 5th (confidence/area) entry.
    b, t, n = box_a.shape
    a = box_a.reshape(b, t, n // 5, 5)
    bb = box_b.reshape(b, t, n // 5, 5)
    take_a = a[..., 4:5] >= bb[..., 4:5]
    return jnp.where(take_a, a, bb).reshape(b, t, n)


def forward(params, frames, text_encoder_feats, non_visual_sensors, cfg):
    """TextCondMultiCameraVisualEncoderWDoubleDet.forward.

    frames[sensor]       : [B, T, C_enc, H, W]  (NCHW image-encoder output maps)
    text_encoder_feats   : [B, L, text_dim]     (frozen text-encoder last_hidden_state)
    non_visual_sensors[*]: [B, T, 10]           (2 boxes x 5 values)
    """
    # TODO(synk): pretrained DINOv2 image encoder not reimplemented; its output
    # feature maps are taken as the `frames` input.
    # TODO(synk): pretrained T5/SigLIP text encoder not reimplemented; its
    # last_hidden_state is taken as the `text_encoder_feats` input.
    d = cfg["d_model"]
    nhead = cfg["nhead"]
    visual_sensors = sorted(frames.keys())
    b, t = frames[visual_sensors[0]].shape[:2]
    bt = b * t

    # ----- encode_imgs: all sensors stacked along rows, one fused kernel -----
    xts = []
    hw = None
    for sensor in visual_sensors:
        x = frames[sensor]
        _, _, c, h, w = x.shape
        hw = h * w
        # NCHW -> token-major [BT*H*W, C]  (matches reshape(BT,C,HW).permute(0,2,1))
        xt = x.reshape(bt, c, hw).transpose(0, 2, 1).reshape(bt * hw, c)
        xts.append(xt)
    x_all = jnp.concatenate(xts, axis=0)                        # [ns*BT*HW, C]
    feats_all = img_compress_adapt(x_all, params)               # [ns*BT*HW, D]
    feats_all = feats_all.reshape(len(visual_sensors), bt, hw, d)
    concatenated_feats = jnp.concatenate(
        [feats_all[i] + params[f"cam_token_{s}"][None, None, :]
         for i, s in enumerate(visual_sensors)], axis=1)        # [BT, ns*HW, D]

    # ----- encode_text (text_adapter) -----
    _, l, text_dim = text_encoder_feats.shape
    text_feats = linear_ln_relu(text_encoder_feats.reshape(b * l, text_dim),
                                params["txt_w"], params["txt_b"],
                                params["txt_g"], params["txt_beta"]).reshape(b, l, d)
    text_feats_ = jnp.broadcast_to(text_feats[:, None], (b, t, l, d)).reshape(bt, l, d)

    fusion_token = jnp.broadcast_to(params["fusion_token"][None, None, :], (bt, 1, d))

    # ----- bounding boxes -----
    best_nav = get_best_of_two_bboxes(non_visual_sensors["nav_task_relevant_object_bbox"],
                                      non_visual_sensors["nav_accurate_object_bbox"])
    best_manip = get_best_of_two_bboxes(non_visual_sensors["manip_task_relevant_object_bbox"],
                                        non_visual_sensors["manip_accurate_object_bbox"])
    combined = jnp.concatenate([best_nav, best_manip], axis=2).reshape(bt, -1)  # [BT, 20]
    nb = combined.shape[1]
    pe = positional_encode(combined, 32)                         # [BT, 20, 32]
    boxes = linear_ln_relu(pe.reshape(bt * nb, 32), params["bbox_w"], params["bbox_b"],
                           params["bbox_g"], params["bbox_beta"]).reshape(bt, nb, d)
    boxes = boxes + params["coord_emb"][None]                    # Embedding(0..19)

    # ----- fusion transformer (sequence padded to a sublane-aligned length) -----
    seq = jnp.concatenate([fusion_token, concatenated_feats, text_feats_, boxes], axis=1)
    s_valid = seq.shape[1]
    s_pad = _round_up(s_valid, 8)
    if s_pad != s_valid:
        seq = jnp.pad(seq, ((0, 0), (0, s_pad - s_valid), (0, 0)))
    x = seq
    for lp in params["layers"]:
        x = encoder_layer(x, lp, nhead, s_valid)
    fused_feats = x[:, 0, :].reshape(b, t, d)
    return fused_feats, text_feats


# --------------------------- deterministic params ---------------------------

def init_params(key, *, c_enc, d_model, text_dim, ffn_dim, num_layers,
                num_bbox_tokens, visual_sensors):
    keys = iter(jax.random.split(key, 64))

    def w(shape, scale=0.05, dtype=jnp.bfloat16):
        return (scale * jax.random.normal(next(keys), shape)).astype(dtype)

    f32 = jnp.float32
    p = {
        "comp_w1": w((c_enc, d_model)), "comp_b1": jnp.zeros((d_model,), f32),
        "comp_w2": w((d_model, d_model)), "comp_b2": jnp.zeros((d_model,), f32),
        "vis_w": w((d_model, d_model)), "vis_b": jnp.zeros((d_model,), f32),
        "vis_g": jnp.ones((d_model,), f32), "vis_beta": jnp.zeros((d_model,), f32),
        "txt_w": w((text_dim, d_model)), "txt_b": jnp.zeros((d_model,), f32),
        "txt_g": jnp.ones((d_model,), f32), "txt_beta": jnp.zeros((d_model,), f32),
        "bbox_w": w((32, d_model)), "bbox_b": jnp.zeros((d_model,), f32),
        "bbox_g": jnp.ones((d_model,), f32), "bbox_beta": jnp.zeros((d_model,), f32),
        "coord_emb": w((num_bbox_tokens, d_model), scale=1.0, dtype=f32),
        "fusion_token": (0.1 * jax.random.uniform(next(keys), (d_model,))).astype(f32),
    }
    for s in visual_sensors:
        p[f"cam_token_{s}"] = (0.1 * jax.random.uniform(next(keys), (d_model,))).astype(f32)
    layers = []
    for _ in range(num_layers):
        layers.append({
            "w_in": w((d_model, 3 * d_model)), "b_in": jnp.zeros((3 * d_model,), f32),
            "w_out": w((d_model, d_model)), "b_out": jnp.zeros((d_model,), f32),
            "g1": jnp.ones((d_model,), f32), "beta1": jnp.zeros((d_model,), f32),
            "w_ff1": w((d_model, ffn_dim)), "b_ff1": jnp.zeros((ffn_dim,), f32),
            "w_ff2": w((ffn_dim, d_model)), "b_ff2": jnp.zeros((d_model,), f32),
            "g2": jnp.ones((d_model,), f32), "beta2": jnp.zeros((d_model,), f32),
        })
    p["layers"] = layers
    return p


# ----------------------------------- main -----------------------------------

if __name__ == "__main__":
    key = jax.random.PRNGKey(0)

    # small shapes consistent with the module's forward
    B, T = 2, 2
    C_ENC, HF, WF = 64, 4, 4           # stand-in image-encoder output feature map
    D_MODEL, NHEAD, FFN = 128, 8, 256  # scaled-down fusion_xformer (orig 512/8/2048)
    L_TXT, TEXT_DIM = 8, 96            # stand-in frozen text-encoder hidden states
    NUM_BBOX_TOKENS = 2 * 5 * 2        # num_boxes * 5 * num_cameras = 20

    visual_sensors = sorted(["raw_navigation_camera", "raw_manipulation_camera"])

    kf, kg, kb, kp = jax.random.split(key, 4)
    frame_keys = jax.random.split(kf, len(visual_sensors))
    frames = {s: jax.random.normal(frame_keys[i], (B, T, C_ENC, HF, WF), dtype=jnp.float32)
              for i, s in enumerate(visual_sensors)}
    goals_raw = jax.random.normal(kg, (B, L_TXT, TEXT_DIM), dtype=jnp.float32)

    bbox_names = ["nav_task_relevant_object_bbox", "nav_accurate_object_bbox",
                  "manip_task_relevant_object_bbox", "manip_accurate_object_bbox"]
    bbox_keys = jax.random.split(kb, 4)
    non_visual_sensors = {n: jax.random.uniform(bbox_keys[i], (B, T, 10), dtype=jnp.float32)
                          for i, n in enumerate(bbox_names)}

    params = init_params(kp, c_enc=C_ENC, d_model=D_MODEL, text_dim=TEXT_DIM,
                         ffn_dim=FFN, num_layers=3, num_bbox_tokens=NUM_BBOX_TOKENS,
                         visual_sensors=visual_sensors)

    cfg = {"d_model": D_MODEL, "nhead": NHEAD}
    fwd = jax.jit(lambda p, fr, tx, nv: forward(p, fr, tx, nv, cfg))
    fused_feats, text_feats = fwd(params, frames, goals_raw, non_visual_sensors)
    jax.block_until_ready((fused_feats, text_feats))

    assert fused_feats.shape == (B, T, D_MODEL), fused_feats.shape
    assert text_feats.shape == (B, L_TXT, D_MODEL), text_feats.shape
    assert bool(jnp.all(jnp.isfinite(fused_feats))), "non-finite output"
    print("KERNEL_OK")
</pallas_src>

<mosaic_0001>
module attributes {stable_mosaic.version = 11 : i64} {
  func.func @_img_adapter_kernel(%arg0: i32, %arg1: memref<128x64xf32, #tpu.memory_space<vmem>>, %arg2: memref<64x128xbf16, #tpu.memory_space<vmem>>, %arg3: memref<1x128xf32, #tpu.memory_space<vmem>>, %arg4: memref<128x128xbf16, #tpu.memory_space<vmem>>, %arg5: memref<1x128xf32, #tpu.memory_space<vmem>>, %arg6: memref<128x128xbf16, #tpu.memory_space<vmem>>, %arg7: memref<1x128xf32, #tpu.memory_space<vmem>>, %arg8: memref<1x128xf32, #tpu.memory_space<vmem>>, %arg9: memref<1x128xf32, #tpu.memory_space<vmem>>, %arg10: memref<128x128xf32, #tpu.memory_space<vmem>>) attributes {dimension_semantics = [#tpu.dimension_semantics<parallel>], iteration_bounds = array<i64: 1>, scalar_prefetch = 0 : i64, scratch_operands = 0 : i64, tpu.core_type = #tpu.core_type<tc>, window_params = [{transform_indices = @transform_0, window_bounds = array<i64: 128, 64>}, {pipeline_mode = #tpu.pipeline_mode<synchronous>, transform_indices = @transform_1, window_bounds = array<i64: 64, 128>}, {pipeline_mode = #tpu.pipeline_mode<synchronous>, transform_indices = @transform_2, window_bounds = array<i64: 1, 128>}, {pipeline_mode = #tpu.pipeline_mode<synchronous>, transform_indices = @transform_3, window_bounds = array<i64: 128, 128>}, {pipeline_mode = #tpu.pipeline_mode<synchronous>, transform_indices = @transform_4, window_bounds = array<i64: 1, 128>}, {pipeline_mode = #tpu.pipeline_mode<synchronous>, transform_indices = @transform_5, window_bounds = array<i64: 128, 128>}, {pipeline_mode = #tpu.pipeline_mode<synchronous>, transform_indices = @transform_6, window_bounds = array<i64: 1, 128>}, {pipeline_mode = #tpu.pipeline_mode<synchronous>, transform_indices = @transform_7, window_bounds = array<i64: 1, 128>}, {pipeline_mode = #tpu.pipeline_mode<synchronous>, transform_indices = @transform_8, window_bounds = array<i64: 1, 128>}, {transform_indices = @transform_9, window_bounds = array<i64: 128, 128>}]} {
    %c0 = arith.constant 0 : index
    %c0_0 = arith.constant 0 : index
    %0 = vector.load %arg1[%c0, %c0_0] : memref<128x64xf32, #tpu.memory_space<vmem>>, vector<128x64xf32>
    %1 = arith.truncf %0 : vector<128x64xf32> to vector<128x64xbf16>
    %c0_1 = arith.constant 0 : index
    %c0_2 = arith.constant 0 : index
    %2 = vector.load %arg2[%c0_1, %c0_2] : memref<64x128xbf16, #tpu.memory_space<vmem>>, vector<64x128xbf16>
    %cst = arith.constant dense<0.000000e+00> : vector<128x128xf32>
    %3 = tpu.matmul %1, %2, %cst {dimension_numbers = #tpu.dot_dimension_numbers<[1], [0], [0], [1], [0, 0, 1, 1], [], []>} : vector<128x64xbf16>, vector<64x128xbf16>, vector<128x128xf32> -> vector<128x128xf32>
    %c0_3 = arith.constant 0 : index
    %c0_4 = arith.constant 0 : index
    %4 = vector.load %arg3[%c0_3, %c0_4] : memref<1x128xf32, #tpu.memory_space<vmem>>, vector<1x128xf32>
    %5 = vector.broadcast %4 : vector<1x128xf32> to vector<128x128xf32>
    %6 = arith.addf %3, %5 : vector<128x128xf32>
    %cst_5 = arith.constant 0.000000e+00 : f32
    %7 = vector.broadcast %cst_5 : f32 to vector<128x128xf32>
    %8 = arith.maximumf %6, %7 : vector<128x128xf32>
    %9 = arith.truncf %8 : vector<128x128xf32> to vector<128x128xbf16>
    %c0_6 = arith.constant 0 : index
    %c0_7 = arith.constant 0 : index
    %10 = vector.load %arg4[%c0_6, %c0_7] : memref<128x128xbf16, #tpu.memory_space<vmem>>, vector<128x128xbf16>
    %cst_8 = arith.constant dense<0.000000e+00> : vector<128x128xf32>
    %11 = tpu.matmul %9, %10, %cst_8 {dimension_numbers = #tpu.dot_dimension_numbers<[1], [0], [0], [1], [0, 0, 1, 1], [], []>} : vector<128x128xbf16>, vector<128x128xbf16>, vector<128x128xf32> -> vector<128x128xf32>
    %c0_9 = arith.constant 0 : index
    %c0_10 = arith.constant 0 : index
    %12 = vector.load %arg5[%c0_9, %c0_10] : memref<1x128xf32, #tpu.memory_space<vmem>>, vector<1x128xf32>
    %13 = vector.broadcast %12 : vector<1x128xf32> to vector<128x128xf32>
    %14 = arith.addf %11, %13 : vector<128x128xf32>
    %cst_11 = arith.constant 0.000000e+00 : f32
    %15 = vector.broadcast %cst_11 : f32 to vector<128x128xf32>
    %16 = arith.maximumf %14, %15 : vector<128x128xf32>
    %17 = arith.truncf %16 : vector<128x128xf32> to vector<128x128xbf16>
    %c0_12 = arith.constant 0 : index
    %c0_13 = arith.constant 0 : index
    %18 = vector.load %arg6[%c0_12, %c0_13] : memref<128x128xbf16, #tpu.memory_space<vmem>>, vector<128x128xbf16>
    %cst_14 = arith.constant dense<0.000000e+00> : vector<128x128xf32>
    %19 = tpu.matmul %17, %18, %cst_14 {dimension_numbers = #tpu.dot_dimension_numbers<[1], [0], [0], [1], [0, 0, 1, 1], [], []>} : vector<128x128xbf16>, vector<128x128xbf16>, vector<128x128xf32> -> vector<128x128xf32>
    %c0_15 = arith.constant 0 : index
    %c0_16 = arith.constant 0 : index
    %20 = vector.load %arg7[%c0_15, %c0_16] : memref<1x128xf32, #tpu.memory_space<vmem>>, vector<1x128xf32>
    %21 = vector.broadcast %20 : vector<1x128xf32> to vector<128x128xf32>
    %22 = arith.addf %19, %21 : vector<128x128xf32>
    %c0_17 = arith.constant 0 : index
    %c0_18 = arith.constant 0 : index
    %23 = vector.load %arg8[%c0_17, %c0_18] : memref<1x128xf32, #tpu.memory_space<vmem>>, vector<1x128xf32>
    %c0_19 = arith.constant 0 : index
    %c0_20 = arith.constant 0 : index
    %24 = vector.load %arg9[%c0_19, %c0_20] : memref<1x128xf32, #tpu.memory_space<vmem>>, vector<1x128xf32>
    %cst_21 = arith.constant dense<0.000000e+00> : vector<128xf32>
    %25 = vector.multi_reduction <add>, %22, %cst_21 [1] : vector<128x128xf32> to vector<128xf32>
    %26 = vector.shape_cast %25 : vector<128xf32> to vector<128x1xf32>
    %cst_22 = arith.constant 1.280000e+02 : f32
    %27 = vector.broadcast %cst_22 : f32 to vector<128x1xf32>
    %28 = arith.divf %26, %27 : vector<128x1xf32>
    %29 = vector.broadcast %28 : vector<128x1xf32> to vector<128x128xf32>
    %30 = arith.subf %22, %29 : vector<128x128xf32>
    %31 = arith.mulf %30, %30 : vector<128x128xf32>
    %cst_23 = arith.constant dense<0.000000e+00> : vector<128xf32>
    %32 = vector.multi_reduction <add>, %31, %cst_23 [1] : vector<128x128xf32> to vector<128xf32>
    %33 = vector.shape_cast %32 : vector<128xf32> to vector<128x1xf32>
    %cst_24 = arith.constant 1.280000e+02 : f32
    %34 = vector.broadcast %cst_24 : f32 to vector<128x1xf32>
    %35 = arith.divf %33, %34 : vector<128x1xf32>
    %36 = vector.broadcast %28 : vector<128x1xf32> to vector<128x128xf32>
    %37 = arith.subf %22, %36 : vector<128x128xf32>
    %cst_25 = arith.constant 9.99999974E-6 : f32
    %38 = vector.broadcast %cst_25 : f32 to vector<128x1xf32>
    %39 = arith.addf %35, %38 : vector<128x1xf32>
    %40 = math.rsqrt %39 : vector<128x1xf32>
    %41 = vector.broadcast %40 : vector<128x1xf32> to vector<128x128xf32>
    %42 = arith.mulf %37, %41 : vector<128x128xf32>
    %43 = vector.broadcast %23 : vector<1x128xf32> to vector<128x128xf32>
    %44 = arith.mulf %42, %43 : vector<128x128xf32>
    %45 = vector.broadcast %24 : vector<1x128xf32> to vector<128x128xf32>
    %46 = arith.addf %44, %45 : vector<128x128xf32>
    %cst_26 = arith.constant 0.000000e+00 : f32
    %47 = vector.broadcast %cst_26 : f32 to vector<128x128xf32>
    %48 = arith.maximumf %46, %47 : vector<128x128xf32>
    %c0_27 = arith.constant 0 : index
    %c0_28 = arith.constant 0 : index
    %49 = vector.load %arg10[%c0_27, %c0_28] : memref<128x128xf32, #tpu.memory_space<vmem>>, vector<128x128xf32>
    tpu.vector_store %arg10[%c0_27, %c0_28], %48 {strides = array<i32>} : memref<128x128xf32, #tpu.memory_space<vmem>>, vector<128x128xf32>,
    return
  }
  func.func @transform_0(%arg0: i32) -> (i32, i32) {
    %c0_i32 = arith.constant 0 : i32
    %c0_i32_0 = arith.constant 0 : i32
    return %arg0, %c0_i32 : i32, i32
  }
  func.func @transform_1(%arg0: i32) -> (i32, i32) {
    %c0_i32 = arith.constant 0 : i32
    %c0_i32_0 = arith.constant 0 : i32
    %c0_i32_1 = arith.constant 0 : i32
    return %c0_i32, %c0_i32_0 : i32, i32
  }
  func.func @transform_2(%arg0: i32) -> (i32, i32) {
    %c0_i32 = arith.constant 0 : i32
    %c0_i32_0 = arith.constant 0 : i32
    %c0_i32_1 = arith.constant 0 : i32
    return %c0_i32, %c0_i32_0 : i32, i32
  }
  func.func @transform_3(%arg0: i32) -> (i32, i32) {
    %c0_i32 = arith.constant 0 : i32
    %c0_i32_0 = arith.constant 0 : i32
    %c0_i32_1 = arith.constant 0 : i32
    return %c0_i32, %c0_i32_0 : i32, i32
  }
  func.func @transform_4(%arg0: i32) -> (i32, i32) {
    %c0_i32 = arith.constant 0 : i32
    %c0_i32_0 = arith.constant 0 : i32
    %c0_i32_1 = arith.constant 0 : i32
    return %c0_i32, %c0_i32_0 : i32, i32
  }
  func.func @transform_5(%arg0: i32) -> (i32, i32) {
    %c0_i32 = arith.constant 0 : i32
    %c0_i32_0 = arith.constant 0 : i32
    %c0_i32_1 = arith.constant 0 : i32
    return %c0_i32, %c0_i32_0 : i32, i32
  }
  func.func @transform_6(%arg0: i32) -> (i32, i32) {
    %c0_i32 = arith.constant 0 : i32
    %c0_i32_0 = arith.constant 0 : i32
    %c0_i32_1 = arith.constant 0 : i32
    return %c0_i32, %c0_i32_0 : i32, i32
  }
  func.func @transform_7(%arg0: i32) -> (i32, i32) {
    %c0_i32 = arith.constant 0 : i32
    %c0_i32_0 = arith.constant 0 : i32
    %c0_i32_1 = arith.constant 0 : i32
    return %c0_i32, %c0_i32_0 : i32, i32
  }
  func.func @transform_8(%arg0: i32) -> (i32, i32) {
    %c0_i32 = arith.constant 0 : i32
    %c0_i32_0 = arith.constant 0 : i32
    %c0_i32_1 = arith.constant 0 : i32
    return %c0_i32, %c0_i32_0 : i32, i32
  }
  func.func @transform_9(%arg0: i32) -> (i32, i32) {
    %c0_i32 = arith.constant 0 : i32
    %c0_i32_0 = arith.constant 0 : i32
    return %arg0, %c0_i32 : i32, i32
  }
}

module attributes {stable_mosaic.version = 11 : i64} {
  func.func @_linear_ln_relu_kernel(%arg0: i32, %arg1: memref<80x32xf32, #tpu.memory_space<vmem>>, %arg2: memref<32x128xbf16, #tpu.memory_space<vmem>>, %arg3: memref<1x128xf32, #tpu.memory_space<vmem>>, %arg4: memref<1x128xf32, #tpu.memory_space<vmem>>, %arg5: memref<1x128xf32, #tpu.memory_space<vmem>>, %arg6: memref<80x128xf32, #tpu.memory_space<vmem>>) attributes {dimension_semantics = [#tpu.dimension_semantics<parallel>], iteration_bounds = array<i64: 1>, scalar_prefetch = 0 : i64, scratch_operands = 0 : i64, tpu.core_type = #tpu.core_type<tc>, window_params = [{transform_indices = @transform_0, window_bounds = array<i64: 80, 32>}, {pipeline_mode = #tpu.pipeline_mode<synchronous>, transform_indices = @transform_1, window_bounds = array<i64: 32, 128>}, {pipeline_mode = #tpu.pipeline_mode<synchronous>, transform_indices = @transform_2, window_bounds = array<i64: 1, 128>}, {pipeline_mode = #tpu.pipeline_mode<synchronous>, transform_indices = @transform_3, window_bounds = array<i64: 1, 128>}, {pipeline_mode = #tpu.pipeline_mode<synchronous>, transform_indices = @transform_4, window_bounds = array<i64: 1, 128>}, {transform_indices = @transform_5, window_bounds = array<i64: 80, 128>}]} {
    %c0 = arith.constant 0 : index
    %c0_0 = arith.constant 0 : index
    %0 = vector.load %arg1[%c0, %c0_0] : memref<80x32xf32, #tpu.memory_space<vmem>>, vector<80x32xf32>
    %1 = arith.truncf %0 : vector<80x32xf32> to vector<80x32xbf16>
    %c0_1 = arith.constant 0 : index
    %c0_2 = arith.constant 0 : index
    %2 = vector.load %arg2[%c0_1, %c0_2] : memref<32x128xbf16, #tpu.memory_space<vmem>>, vector<32x128xbf16>
    %cst = arith.constant dense<0.000000e+00> : vector<80x128xf32>
    %3 = tpu.matmul %1, %2, %cst {dimension_numbers = #tpu.dot_dimension_numbers<[1], [0], [0], [1], [0, 0, 1, 1], [], []>} : vector<80x32xbf16>, vector<32x128xbf16>, vector<80x128xf32> -> vector<80x128xf32>
    %c0_3 = arith.constant 0 : index
    %c0_4 = arith.constant 0 : index
    %4 = vector.load %arg3[%c0_3, %c0_4] : memref<1x128xf32, #tpu.memory_space<vmem>>, vector<1x128xf32>
    %5 = vector.broadcast %4 : vector<1x128xf32> to vector<80x128xf32>
    %6 = arith.addf %3, %5 : vector<80x128xf32>
    %c0_5 = arith.constant 0 : index
    %c0_6 = arith.constant 0 : index
    %7 = vector.load %arg4[%c0_5, %c0_6] : memref<1x128xf32, #tpu.memory_space<vmem>>, vector<1x128xf32>
    %c0_7 = arith.constant 0 : index
    %c0_8 = arith.constant 0 : index
    %8 = vector.load %arg5[%c0_7, %c0_8] : memref<1x128xf32, #tpu.memory_space<vmem>>, vector<1x128xf32>
    %cst_9 = arith.constant dense<0.000000e+00> : vector<80xf32>
    %9 = vector.multi_reduction <add>, %6, %cst_9 [1] : vector<80x128xf32> to vector<80xf32>
    %10 = vector.shape_cast %9 : vector<80xf32> to vector<80x1xf32>
    %cst_10 = arith.constant 1.280000e+02 : f32
    %11 = vector.broadcast %cst_10 : f32 to vector<80x1xf32>
    %12 = arith.divf %10, %11 : vector<80x1xf32>
    %13 = vector.broadcast %12 : vector<80x1xf32> to vector<80x128xf32>
    %14 = arith.subf %6, %13 : vector<80x128xf32>
    %15 = arith.mulf %14, %14 : vector<80x128xf32>
    %cst_11 = arith.constant dense<0.000000e+00> : vector<80xf32>
    %16 = vector.multi_reduction <add>, %15, %cst_11 [1] : vector<80x128xf32> to vector<80xf32>
    %17 = vector.shape_cast %16 : vector<80xf32> to vector<80x1xf32>
    %cst_12 = arith.constant 1.280000e+02 : f32
    %18 = vector.broadcast %cst_12 : f32 to vector<80x1xf32>
    %19 = arith.divf %17, %18 : vector<80x1xf32>
    %20 = vector.broadcast %12 : vector<80x1xf32> to vector<80x128xf32>
    %21 = arith.subf %6, %20 : vector<80x128xf32>
    %cst_13 = arith.constant 9.99999974E-6 : f32
    %22 = vector.broadcast %cst_13 : f32 to vector<80x1xf32>
    %23 = arith.addf %19, %22 : vector<80x1xf32>
    %24 = math.rsqrt %23 : vector<80x1xf32>
    %25 = vector.broadcast %24 : vector<80x1xf32> to vector<80x128xf32>
    %26 = arith.mulf %21, %25 : vector<80x128xf32>
    %27 = vector.broadcast %7 : vector<1x128xf32> to vector<80x128xf32>
    %28 = arith.mulf %26, %27 : vector<80x128xf32>
    %29 = vector.broadcast %8 : vector<1x128xf32> to vector<80x128xf32>
    %30 = arith.addf %28, %29 : vector<80x128xf32>
    %cst_14 = arith.constant 0.000000e+00 : f32
    %31 = vector.broadcast %cst_14 : f32 to vector<80x128xf32>
    %32 = arith.maximumf %30, %31 : vector<80x128xf32>
    %c0_15 = arith.constant 0 : index
    %c0_16 = arith.constant 0 : index
    %33 = vector.load %arg6[%c0_15, %c0_16] : memref<80x128xf32, #tpu.memory_space<vmem>>, vector<80x128xf32>
    tpu.vector_store %arg6[%c0_15, %c0_16], %32 {strides = array<i32>} : memref<80x128xf32, #tpu.memory_space<vmem>>, vector<80x128xf32>,
    return
  }
  func.func @transform_0(%arg0: i32) -> (i32, i32) {
    %c0_i32 = arith.constant 0 : i32
    %c0_i32_0 = arith.constant 0 : i32
    return %arg0, %c0_i32 : i32, i32
  }
  func.func @transform_1(%arg0: i32) -> (i32, i32) {
    %c0_i32 = arith.constant 0 : i32
    %c0_i32_0 = arith.constant 0 : i32
    %c0_i32_1 = arith.constant 0 : i32
    return %c0_i32, %c0_i32_0 : i32, i32
  }
  func.func @transform_2(%arg0: i32) -> (i32, i32) {
    %c0_i32 = arith.constant 0 : i32
    %c0_i32_0 = arith.constant 0 : i32
    %c0_i32_1 = arith.constant 0 : i32
    return %c0_i32, %c0_i32_0 : i32, i32
  }
  func.func @transform_3(%arg0: i32) -> (i32, i32) {
    %c0_i32 = arith.constant 0 : i32
    %c0_i32_0 = arith.constant 0 : i32
    %c0_i32_1 = arith.constant 0 : i32
    return %c0_i32, %c0_i32_0 : i32, i32
  }
  func.func @transform_4(%arg0: i32) -> (i32, i32) {
    %c0_i32 = arith.constant 0 : i32
    %c0_i32_0 = arith.constant 0 : i32
    %c0_i32_1 = arith.constant 0 : i32
    return %c0_i32, %c0_i32_0 : i32, i32
  }
  func.func @transform_5(%arg0: i32) -> (i32, i32) {
    %c0_i32 = arith.constant 0 : i32
    %c0_i32_0 = arith.constant 0 : i32
    return %arg0, %c0_i32 : i32, i32
  }
}

module attributes {stable_mosaic.version = 11 : i64} {
  func.func @_linear_ln_relu_kernel(%arg0: i32, %arg1: memref<16x96xf32, #tpu.memory_space<vmem>>, %arg2: memref<96x128xbf16, #tpu.memory_space<vmem>>, %arg3: memref<1x128xf32, #tpu.memory_space<vmem>>, %arg4: memref<1x128xf32, #tpu.memory_space<vmem>>, %arg5: memref<1x128xf32, #tpu.memory_space<vmem>>, %arg6: memref<16x128xf32, #tpu.memory_space<vmem>>) attributes {dimension_semantics = [#tpu.dimension_semantics<parallel>], iteration_bounds = array<i64: 1>, scalar_prefetch = 0 : i64, scratch_operands = 0 : i64, tpu.core_type = #tpu.core_type<tc>, window_params = [{transform_indices = @transform_0, window_bounds = array<i64: 16, 96>}, {pipeline_mode = #tpu.pipeline_mode<synchronous>, transform_indices = @transform_1, window_bounds = array<i64: 96, 128>}, {pipeline_mode = #tpu.pipeline_mode<synchronous>, transform_indices = @transform_2, window_bounds = array<i64: 1, 128>}, {pipeline_mode = #tpu.pipeline_mode<synchronous>, transform_indices = @transform_3, window_bounds = array<i64: 1, 128>}, {pipeline_mode = #tpu.pipeline_mode<synchronous>, transform_indices = @transform_4, window_bounds = array<i64: 1, 128>}, {transform_indices = @transform_5, window_bounds = array<i64: 16, 128>}]} {
    %c0 = arith.constant 0 : index
    %c0_0 = arith.constant 0 : index
    %0 = vector.load %arg1[%c0, %c0_0] : memref<16x96xf32, #tpu.memory_space<vmem>>, vector<16x96xf32>
    %1 = arith.truncf %0 : vector<16x96xf32> to vector<16x96xbf16>
    %c0_1 = arith.constant 0 : index
    %c0_2 = arith.constant 0 : index
    %2 = vector.load %arg2[%c0_1, %c0_2] : memref<96x128xbf16, #tpu.memory_space<vmem>>, vector<96x128xbf16>
    %cst = arith.constant dense<0.000000e+00> : vector<16x128xf32>
    %3 = tpu.matmul %1, %2, %cst {dimension_numbers = #tpu.dot_dimension_numbers<[1], [0], [0], [1], [0, 0, 1, 1], [], []>} : vector<16x96xbf16>, vector<96x128xbf16>, vector<16x128xf32> -> vector<16x128xf32>
    %c0_3 = arith.constant 0 : index
    %c0_4 = arith.constant 0 : index
    %4 = vector.load %arg3[%c0_3, %c0_4] : memref<1x128xf32, #tpu.memory_space<vmem>>, vector<1x128xf32>
    %5 = vector.broadcast %4 : vector<1x128xf32> to vector<16x128xf32>
    %6 = arith.addf %3, %5 : vector<16x128xf32>
    %c0_5 = arith.constant 0 : index
    %c0_6 = arith.constant 0 : index
    %7 = vector.load %arg4[%c0_5, %c0_6] : memref<1x128xf32, #tpu.memory_space<vmem>>, vector<1x128xf32>
    %c0_7 = arith.constant 0 : index
    %c0_8 = arith.constant 0 : index
    %8 = vector.load %arg5[%c0_7, %c0_8] : memref<1x128xf32, #tpu.memory_space<vmem>>, vector<1x128xf32>
    %cst_9 = arith.constant dense<0.000000e+00> : vector<16xf32>
    %9 = vector.multi_reduction <add>, %6, %cst_9 [1] : vector<16x128xf32> to vector<16xf32>
    %10 = vector.shape_cast %9 : vector<16xf32> to vector<16x1xf32>
    %cst_10 = arith.constant 1.280000e+02 : f32
    %11 = vector.broadcast %cst_10 : f32 to vector<16x1xf32>
    %12 = arith.divf %10, %11 : vector<16x1xf32>
    %13 = vector.broadcast %12 : vector<16x1xf32> to vector<16x128xf32>
    %14 = arith.subf %6, %13 : vector<16x128xf32>
    %15 = arith.mulf %14, %14 : vector<16x128xf32>
    %cst_11 = arith.constant dense<0.000000e+00> : vector<16xf32>
    %16 = vector.multi_reduction <add>, %15, %cst_11 [1] : vector<16x128xf32> to vector<16xf32>
    %17 = vector.shape_cast %16 : vector<16xf32> to vector<16x1xf32>
    %cst_12 = arith.constant 1.280000e+02 : f32
    %18 = vector.broadcast %cst_12 : f32 to vector<16x1xf32>
    %19 = arith.divf %17, %18 : vector<16x1xf32>
    %20 = vector.broadcast %12 : vector<16x1xf32> to vector<16x128xf32>
    %21 = arith.subf %6, %20 : vector<16x128xf32>
    %cst_13 = arith.constant 9.99999974E-6 : f32
    %22 = vector.broadcast %cst_13 : f32 to vector<16x1xf32>
    %23 = arith.addf %19, %22 : vector<16x1xf32>
    %24 = math.rsqrt %23 : vector<16x1xf32>
    %25 = vector.broadcast %24 : vector<16x1xf32> to vector<16x128xf32>
    %26 = arith.mulf %21, %25 : vector<16x128xf32>
    %27 = vector.broadcast %7 : vector<1x128xf32> to vector<16x128xf32>
    %28 = arith.mulf %26, %27 : vector<16x128xf32>
    %29 = vector.broadcast %8 : vector<1x128xf32> to vector<16x128xf32>
    %30 = arith.addf %28, %29 : vector<16x128xf32>
    %cst_14 = arith.constant 0.000000e+00 : f32
    %31 = vector.broadcast %cst_14 : f32 to vector<16x128xf32>
    %32 = arith.maximumf %30, %31 : vector<16x128xf32>
    %c0_15 = arith.constant 0 : index
    %c0_16 = arith.constant 0 : index
    %33 = vector.load %arg6[%c0_15, %c0_16] : memref<16x128xf32, #tpu.memory_space<vmem>>, vector<16x128xf32>
    tpu.vector_store %arg6[%c0_15, %c0_16], %32 {strides = array<i32>} : memref<16x128xf32, #tpu.memory_space<vmem>>, vector<16x128xf32>,
    return
  }
  func.func @transform_0(%arg0: i32) -> (i32, i32) {
    %c0_i32 = arith.constant 0 : i32
    %c0_i32_0 = arith.constant 0 : i32
    return %arg0, %c0_i32 : i32, i32
  }
  func.func @transform_1(%arg0: i32) -> (i32, i32) {
    %c0_i32 = arith.constant 0 : i32
    %c0_i32_0 = arith.constant 0 : i32
    %c0_i32_1 = arith.constant 0 : i32
    return %c0_i32, %c0_i32_0 : i32, i32
  }
  func.func @transform_2(%arg0: i32) -> (i32, i32) {
    %c0_i32 = arith.constant 0 : i32
    %c0_i32_0 = arith.constant 0 : i32
    %c0_i32_1 = arith.constant 0 : i32
    return %c0_i32, %c0_i32_0 : i32, i32
  }
  func.func @transform_3(%arg0: i32) -> (i32, i32) {
    %c0_i32 = arith.constant 0 : i32
    %c0_i32_0 = arith.constant 0 : i32
    %c0_i32_1 = arith.constant 0 : i32
    return %c0_i32, %c0_i32_0 : i32, i32
  }
  func.func @transform_4(%arg0: i32) -> (i32, i32) {
    %c0_i32 = arith.constant 0 : i32
    %c0_i32_0 = arith.constant 0 : i32
    %c0_i32_1 = arith.constant 0 : i32
    return %c0_i32, %c0_i32_0 : i32, i32
  }
  func.func @transform_5(%arg0: i32) -> (i32, i32) {
    %c0_i32 = arith.constant 0 : i32
    %c0_i32_0 = arith.constant 0 : i32
    return %arg0, %c0_i32 : i32, i32
  }
}

module attributes {stable_mosaic.version = 11 : i64} {
  func.func @_encoder_layer_kernel(%arg0: i32, %arg1: memref<1x64x128xf32, #tpu.memory_space<vmem>>, %arg2: memref<128x384xbf16, #tpu.memory_space<vmem>>, %arg3: memref<1x384xf32, #tpu.memory_space<vmem>>, %arg4: memref<128x128xbf16, #tpu.memory_space<vmem>>, %arg5: memref<1x128xf32, #tpu.memory_space<vmem>>, %arg6: memref<1x128xf32, #tpu.memory_space<vmem>>, %arg7: memref<1x128xf32, #tpu.memory_space<vmem>>, %arg8: memref<128x256xbf16, #tpu.memory_space<vmem>>, %arg9: memref<1x256xf32, #tpu.memory_space<vmem>>, %arg10: memref<256x128xbf16, #tpu.memory_space<vmem>>, %arg11: memref<1x128xf32, #tpu.memory_space<vmem>>, %arg12: memref<1x128xf32, #tpu.memory_space<vmem>>, %arg13: memref<1x128xf32, #tpu.memory_space<vmem>>, %arg14: memref<1x64x128xf32, #tpu.memory_space<vmem>>) attributes {dimension_semantics = [#tpu.dimension_semantics<parallel>], iteration_bounds = array<i64: 4>, scalar_prefetch = 0 : i64, scratch_operands = 0 : i64, tpu.core_type = #tpu.core_type<tc>, window_params = [{transform_indices = @transform_0, window_bounds = array<i64: 1, 64, 128>}, {pipeline_mode = #tpu.pipeline_mode<synchronous>, transform_indices = @transform_1, window_bounds = array<i64: 128, 384>}, {pipeline_mode = #tpu.pipeline_mode<synchronous>, transform_indices = @transform_2, window_bounds = array<i64: 1, 384>}, {pipeline_mode = #tpu.pipeline_mode<synchronous>, transform_indices = @transform_3, window_bounds = array<i64: 128, 128>}, {pipeline_mode = #tpu.pipeline_mode<synchronous>, transform_indices = @transform_4, window_bounds = array<i64: 1, 128>}, {pipeline_mode = #tpu.pipeline_mode<synchronous>, transform_indices = @transform_5, window_bounds = array<i64: 1, 128>}, {pipeline_mode = #tpu.pipeline_mode<synchronous>, transform_indices = @transform_6, window_bounds = array<i64: 1, 128>}, {pipeline_mode = #tpu.pipeline_mode<synchronous>, transform_indices = @transform_7, window_bounds = array<i64: 128, 256>}, {pipeline_mode = #tpu.pipeline_mode<synchronous>, transform_indices = @transform_8, window_bounds = array<i64: 1, 256>}, {pipeline_mode = #tpu.pipeline_mode<synchronous>, transform_indices = @transform_9, window_bounds = array<i64: 256, 128>}, {pipeline_mode = #tpu.pipeline_mode<synchronous>, transform_indices = @transform_10, window_bounds = array<i64: 1, 128>}, {pipeline_mode = #tpu.pipeline_mode<synchronous>, transform_indices = @transform_11, window_bounds = array<i64: 1, 128>}, {pipeline_mode = #tpu.pipeline_mode<synchronous>, transform_indices = @transform_12, window_bounds = array<i64: 1, 128>}, {transform_indices = @transform_13, window_bounds = array<i64: 1, 64, 128>}]} {
    %c0 = arith.constant 0 : index
    %c0_0 = arith.constant 0 : index
    %c0_1 = arith.constant 0 : index
    %0 = vector.load %arg1[%c0, %c0_0, %c0_1] : memref<1x64x128xf32, #tpu.memory_space<vmem>>, vector<1x64x128xf32>
    %1 = vector.shape_cast %0 : vector<1x64x128xf32> to vector<64x128xf32>
    %2 = arith.truncf %1 : vector<64x128xf32> to vector<64x128xbf16>
    %c0_2 = arith.constant 0 : index
    %c0_3 = arith.constant 0 : index
    %3 = vector.load %arg2[%c0_2, %c0_3] : memref<128x384xbf16, #tpu.memory_space<vmem>>, vector<128x384xbf16>
    %cst = arith.constant dense<0.000000e+00> : vector<64x384xf32>
    %4 = tpu.matmul %2, %3, %cst {dimension_numbers = #tpu.dot_dimension_numbers<[1], [0], [0], [1], [0, 0, 1, 1], [], []>} : vector<64x128xbf16>, vector<128x384xbf16>, vector<64x384xf32> -> vector<64x384xf32>
    %c0_4 = arith.constant 0 : index
    %c0_5 = arith.constant 0 : index
    %5 = vector.load %arg3[%c0_4, %c0_5] : memref<1x384xf32, #tpu.memory_space<vmem>>, vector<1x384xf32>
    %6 = vector.broadcast %5 : vector<1x384xf32> to vector<64x384xf32>
    %7 = arith.addf %4, %6 : vector<64x384xf32>
    %8 = vector.extract_strided_slice %7 {offsets = [0, 0], sizes = [64, 128], strides = [1, 1]} : vector<64x384xf32> to vector<64x128xf32>
    %9 = arith.truncf %8 : vector<64x128xf32> to vector<64x128xbf16>
    %10 = vector.extract_strided_slice %7 {offsets = [0, 128], sizes = [64, 128], strides = [1, 1]} : vector<64x384xf32> to vector<64x128xf32>
    %11 = arith.truncf %10 : vector<64x128xf32> to vector<64x128xbf16>
    %12 = vector.extract_strided_slice %7 {offsets = [0, 256], sizes = [64, 128], strides = [1, 1]} : vector<64x384xf32> to vector<64x128xf32>
    %13 = arith.truncf %12 : vector<64x128xf32> to vector<64x128xbf16>
    %14 = tpu.iota {dimensions = array<i32: 1>} : vector<64x64xi32>
    %c61_i32 = arith.constant 61 : i32
    %15 = vector.broadcast %c61_i32 : i32 to vector<64x64xi32>
    %16 = arith.cmpi slt, %14, %15 : vector<64x64xi32>
    %17 = vector.extract_strided_slice %9 {offsets = [0, 0], sizes = [64, 16], strides = [1, 1]} : vector<64x128xbf16> to vector<64x16xbf16>
    %18 = vector.extract_strided_slice %11 {offsets = [0, 0], sizes = [64, 16], strides = [1, 1]} : vector<64x128xbf16> to vector<64x16xbf16>
    %19 = vector.extract_strided_slice %13 {offsets = [0, 0], sizes = [64, 16], strides = [1, 1]} : vector<64x128xbf16> to vector<64x16xbf16>
    %cst_6 = arith.constant dense<0.000000e+00> : vector<64x64xf32>
    %20 = tpu.matmul %17, %18, %cst_6 {dimension_numbers = #tpu.dot_dimension_numbers<[1], [1], [0], [0], [0, 0, 1, 0], [], []>} : vector<64x16xbf16>, vector<64x16xbf16>, vector<64x64xf32> -> vector<64x64xf32>
    %cst_7 = arith.constant 2.500000e-01 : f32
    %21 = vector.broadcast %cst_7 : f32 to vector<64x64xf32>
    %22 = arith.mulf %20, %21 : vector<64x64xf32>
    %cst_8 = arith.constant -1.000000e+30 : f32
    %23 = vector.broadcast %cst_8 : f32 to vector<64x64xf32>
    %24 = arith.select %16, %22, %23 : vector<64x64xi1>, vector<64x64xf32>
    %cst_9 = arith.constant dense<0xFF800000> : vector<64xf32>
    %25 = vector.multi_reduction <maximumf>, %24, %cst_9 [1] : vector<64x64xf32> to vector<64xf32>
    %26 = vector.shape_cast %25 : vector<64xf32> to vector<64x1xf32>
    %27 = vector.broadcast %26 : vector<64x1xf32> to vector<64x64xf32>
    %28 = arith.subf %24, %27 : vector<64x64xf32>
    %29 = math.exp %28 : vector<64x64xf32>
    %cst_10 = arith.constant dense<0.000000e+00> : vector<64xf32>
    %30 = vector.multi_reduction <add>, %29, %cst_10 [1] : vector<64x64xf32> to vector<64xf32>
    %31 = vector.shape_cast %30 : vector<64xf32> to vector<64x1xf32>
    %32 = tpu.reciprocal %31 {approx = true} : vector<64x1xf32> -> vector<64x1xf32>
    %33 = vector.broadcast %32 : vector<64x1xf32> to vector<64x64xf32>
    %34 = arith.mulf %29, %33 : vector<64x64xf32>
    %35 = arith.truncf %34 : vector<64x64xf32> to vector<64x64xbf16>
    %cst_11 = arith.constant dense<0.000000e+00> : vector<64x16xf32>
    %36 = tpu.matmul %35, %19, %cst_11 {dimension_numbers = #tpu.dot_dimension_numbers<[1], [0], [0], [1], [0, 0, 1, 1], [], []>} : vector<64x64xbf16>, vector<64x16xbf16>, vector<64x16xf32> -> vector<64x16xf32>
    %37 = vector.extract_strided_slice %9 {offsets = [0, 16], sizes = [64, 16], strides = [1, 1]} : vector<64x128xbf16> to vector<64x16xbf16>
    %38 = vector.extract_strided_slice %11 {offsets = [0, 16], sizes = [64, 16], strides = [1, 1]} : vector<64x128xbf16> to vector<64x16xbf16>
    %39 = vector.extract_strided_slice %13 {offsets = [0, 16], sizes = [64, 16], strides = [1, 1]} : vector<64x128xbf16> to vector<64x16xbf16>
    %cst_12 = arith.constant dense<0.000000e+00> : vector<64x64xf32>
    %40 = tpu.matmul %37, %38, %cst_12 {dimension_numbers = #tpu.dot_dimension_numbers<[1], [1], [0], [0], [0, 0, 1, 0], [], []>} : vector<64x16xbf16>, vector<64x16xbf16>, vector<64x64xf32> -> vector<64x64xf32>
    %cst_13 = arith.constant 2.500000e-01 : f32
    %41 = vector.broadcast %cst_13 : f32 to vector<64x64xf32>
    %42 = arith.mulf %40, %41 : vector<64x64xf32>
    %cst_14 = arith.constant -1.000000e+30 : f32
    %43 = vector.broadcast %cst_14 : f32 to vector<64x64xf32>
    %44 = arith.select %16, %42, %43 : vector<64x64xi1>, vector<64x64xf32>
    %cst_15 = arith.constant dense<0xFF800000> : vector<64xf32>
    %45 = vector.multi_reduction <maximumf>, %44, %cst_15 [1] : vector<64x64xf32> to vector<64xf32>
    %46 = vector.shape_cast %45 : vector<64xf32> to vector<64x1xf32>
    %47 = vector.broadcast %46 : vector<64x1xf32> to vector<64x64xf32>
    %48 = arith.subf %44, %47 : vector<64x64xf32>
    %49 = math.exp %48 : vector<64x64xf32>
    %cst_16 = arith.constant dense<0.000000e+00> : vector<64xf32>
    %50 = vector.multi_reduction <add>, %49, %cst_16 [1] : vector<64x64xf32> to vector<64xf32>
    %51 = vector.shape_cast %50 : vector<64xf32> to vector<64x1xf32>
    %52 = tpu.reciprocal %51 {approx = true} : vector<64x1xf32> -> vector<64x1xf32>
    %53 = vector.broadcast %52 : vector<64x1xf32> to vector<64x64xf32>
    %54 = arith.mulf %49, %53 : vector<64x64xf32>
    %55 = arith.truncf %54 : vector<64x64xf32> to vector<64x64xbf16>
    %cst_17 = arith.constant dense<0.000000e+00> : vector<64x16xf32>
    %56 = tpu.matmul %55, %39, %cst_17 {dimension_numbers = #tpu.dot_dimension_numbers<[1], [0], [0], [1], [0, 0, 1, 1], [], []>} : vector<64x64xbf16>, vector<64x16xbf16>, vector<64x16xf32> -> vector<64x16xf32>
    %57 = vector.extract_strided_slice %9 {offsets = [0, 32], sizes = [64, 16], strides = [1, 1]} : vector<64x128xbf16> to vector<64x16xbf16>
    %58 = vector.extract_strided_slice %11 {offsets = [0, 32], sizes = [64, 16], strides = [1, 1]} : vector<64x128xbf16> to vector<64x16xbf16>
    %59 = vector.extract_strided_slice %13 {offsets = [0, 32], sizes = [64, 16], strides = [1, 1]} : vector<64x128xbf16> to vector<64x16xbf16>
    %cst_18 = arith.constant dense<0.000000e+00> : vector<64x64xf32>
    %60 = tpu.matmul %57, %58, %cst_18 {dimension_numbers = #tpu.dot_dimension_numbers<[1], [1], [0], [0], [0, 0, 1, 0], [], []>} : vector<64x16xbf16>, vector<64x16xbf16>, vector<64x64xf32> -> vector<64x64xf32>
    %cst_19 = arith.constant 2.500000e-01 : f32
    %61 = vector.broadcast %cst_19 : f32 to vector<64x64xf32>
    %62 = arith.mulf %60, %61 : vector<64x64xf32>
    %cst_20 = arith.constant -1.000000e+30 : f32
    %63 = vector.broadcast %cst_20 : f32 to vector<64x64xf32>
    %64 = arith.select %16, %62, %63 : vector<64x64xi1>, vector<64x64xf32>
    %cst_21 = arith.constant dense<0xFF800000> : vector<64xf32>
    %65 = vector.multi_reduction <maximumf>, %64, %cst_21 [1] : vector<64x64xf32> to vector<64xf32>
    %66 = vector.shape_cast %65 : vector<64xf32> to vector<64x1xf32>
    %67 = vector.broadcast %66 : vector<64x1xf32> to vector<64x64xf32>
    %68 = arith.subf %64, %67 : vector<64x64xf32>
    %69 = math.exp %68 : vector<64x64xf32>
    %cst_22 = arith.constant dense<0.000000e+00> : vector<64xf32>
    %70 = vector.multi_reduction <add>, %69, %cst_22 [1] : vector<64x64xf32> to vector<64xf32>
    %71 = vector.shape_cast %70 : vector<64xf32> to vector<64x1xf32>
    %72 = tpu.reciprocal %71 {approx = true} : vector<64x1xf32> -> vector<64x1xf32>
    %73 = vector.broadcast %72 : vector<64x1xf32> to vector<64x64xf32>
    %74 = arith.mulf %69, %73 : vector<64x64xf32>
    %75 = arith.truncf %74 : vector<64x64xf32> to vector<64x64xbf16>
    %cst_23 = arith.constant dense<0.000000e+00> : vector<64x16xf32>
    %76 = tpu.matmul %75, %59, %cst_23 {dimension_numbers = #tpu.dot_dimension_numbers<[1], [0], [0], [1], [0, 0, 1, 1], [], []>} : vector<64x64xbf16>, vector<64x16xbf16>, vector<64x16xf32> -> vector<64x16xf32>
    %77 = vector.extract_strided_slice %9 {offsets = [0, 48], sizes = [64, 16], strides = [1, 1]} : vector<64x128xbf16> to vector<64x16xbf16>
    %78 = vector.extract_strided_slice %11 {offsets = [0, 48], sizes = [64, 16], strides = [1, 1]} : vector<64x128xbf16> to vector<64x16xbf16>
    %79 = vector.extract_strided_slice %13 {offsets = [0, 48], sizes = [64, 16], strides = [1, 1]} : vector<64x128xbf16> to vector<64x16xbf16>
    %cst_24 = arith.constant dense<0.000000e+00> : vector<64x64xf32>
    %80 = tpu.matmul %77, %78, %cst_24 {dimension_numbers = #tpu.dot_dimension_numbers<[1], [1], [0], [0], [0, 0, 1, 0], [], []>} : vector<64x16xbf16>, vector<64x16xbf16>, vector<64x64xf32> -> vector<64x64xf32>
    %cst_25 = arith.constant 2.500000e-01 : f32
    %81 = vector.broadcast %cst_25 : f32 to vector<64x64xf32>
    %82 = arith.mulf %80, %81 : vector<64x64xf32>
    %cst_26 = arith.constant -1.000000e+30 : f32
    %83 = vector.broadcast %cst_26 : f32 to vector<64x64xf32>
    %84 = arith.select %16, %82, %83 : vector<64x64xi1>, vector<64x64xf32>
    %cst_27 = arith.constant dense<0xFF800000> : vector<64xf32>
    %85 = vector.multi_reduction <maximumf>, %84, %cst_27 [1] : vector<64x64xf32> to vector<64xf32>
    %86 = vector.shape_cast %85 : vector<64xf32> to vector<64x1xf32>
    %87 = vector.broadcast %86 : vector<64x1xf32> to vector<64x64xf32>
    %88 = arith.subf %84, %87 : vector<64x64xf32>
    %89 = math.exp %88 : vector<64x64xf32>
    %cst_28 = arith.constant dense<0.000000e+00> : vector<64xf32>
    %90 = vector.multi_reduction <add>, %89, %cst_28 [1] : vector<64x64xf32> to vector<64xf32>
    %91 = vector.shape_cast %90 : vector<64xf32> to vector<64x1xf32>
    %92 = tpu.reciprocal %91 {approx = true} : vector<64x1xf32> -> vector<64x1xf32>
    %93 = vector.broadcast %92 : vector<64x1xf32> to vector<64x64xf32>
    %94 = arith.mulf %89, %93 : vector<64x64xf32>
    %95 = arith.truncf %94 : vector<64x64xf32> to vector<64x64xbf16>
    %cst_29 = arith.constant dense<0.000000e+00> : vector<64x16xf32>
    %96 = tpu.matmul %95, %79, %cst_29 {dimension_numbers = #tpu.dot_dimension_numbers<[1], [0], [0], [1], [0, 0, 1, 1], [], []>} : vector<64x64xbf16>, vector<64x16xbf16>, vector<64x16xf32> -> vector<64x16xf32>
    %97 = vector.extract_strided_slice %9 {offsets = [0, 64], sizes = [64, 16], strides = [1, 1]} : vector<64x128xbf16> to vector<64x16xbf16>
    %98 = vector.extract_strided_slice %11 {offsets = [0, 64], sizes = [64, 16], strides = [1, 1]} : vector<64x128xbf16> to vector<64x16xbf16>
    %99 = vector.extract_strided_slice %13 {offsets = [0, 64], sizes = [64, 16], strides = [1, 1]} : vector<64x128xbf16> to vector<64x16xbf16>
    %cst_30 = arith.constant dense<0.000000e+00> : vector<64x64xf32>
    %100 = tpu.matmul %97, %98, %cst_30 {dimension_numbers = #tpu.dot_dimension_numbers<[1], [1], [0], [0], [0, 0, 1, 0], [], []>} : vector<64x16xbf16>, vector<64x16xbf16>, vector<64x64xf32> -> vector<64x64xf32>
    %cst_31 = arith.constant 2.500000e-01 : f32
    %101 = vector.broadcast %cst_31 : f32 to vector<64x64xf32>
    %102 = arith.mulf %100, %101 : vector<64x64xf32>
    %cst_32 = arith.constant -1.000000e+30 : f32
    %103 = vector.broadcast %cst_32 : f32 to vector<64x64xf32>
    %104 = arith.select %16, %102, %103 : vector<64x64xi1>, vector<64x64xf32>
    %cst_33 = arith.constant dense<0xFF800000> : vector<64xf32>
    %105 = vector.multi_reduction <maximumf>, %104, %cst_33 [1] : vector<64x64xf32> to vector<64xf32>
    %106 = vector.shape_cast %105 : vector<64xf32> to vector<64x1xf32>
    %107 = vector.broadcast %106 : vector<64x1xf32> to vector<64x64xf32>
    %108 = arith.subf %104, %107 : vector<64x64xf32>
    %109 = math.exp %108 : vector<64x64xf32>
    %cst_34 = arith.constant dense<0.000000e+00> : vector<64xf32>
    %110 = vector.multi_reduction <add>, %109, %cst_34 [1] : vector<64x64xf32> to vector<64xf32>
    %111 = vector.shape_cast %110 : vector<64xf32> to vector<64x1xf32>
    %112 = tpu.reciprocal %111 {approx = true} : vector<64x1xf32> -> vector<64x1xf32>
    %113 = vector.broadcast %112 : vector<64x1xf32> to vector<64x64xf32>
    %114 = arith.mulf %109, %113 : vector<64x64xf32>
    %115 = arith.truncf %114 : vector<64x64xf32> to vector<64x64xbf16>
    %cst_35 = arith.constant dense<0.000000e+00> : vector<64x16xf32>
    %116 = tpu.matmul %115, %99, %cst_35 {dimension_numbers = #tpu.dot_dimension_numbers<[1], [0], [0], [1], [0, 0, 1, 1], [], []>} : vector<64x64xbf16>, vector<64x16xbf16>, vector<64x16xf32> -> vector<64x16xf32>
    %117 = vector.extract_strided_slice %9 {offsets = [0, 80], sizes = [64, 16], strides = [1, 1]} : vector<64x128xbf16> to vector<64x16xbf16>
    %118 = vector.extract_strided_slice %11 {offsets = [0, 80], sizes = [64, 16], strides = [1, 1]} : vector<64x128xbf16> to vector<64x16xbf16>
    %119 = vector.extract_strided_slice %13 {offsets = [0, 80], sizes = [64, 16], strides = [1, 1]} : vector<64x128xbf16> to vector<64x16xbf16>
    %cst_36 = arith.constant dense<0.000000e+00> : vector<64x64xf32>
    %120 = tpu.matmul %117, %118, %cst_36 {dimension_numbers = #tpu.dot_dimension_numbers<[1], [1], [0], [0], [0, 0, 1, 0], [], []>} : vector<64x16xbf16>, vector<64x16xbf16>, vector<64x64xf32> -> vector<64x64xf32>
    %cst_37 = arith.constant 2.500000e-01 : f32
    %121 = vector.broadcast %cst_37 : f32 to vector<64x64xf32>
    %122 = arith.mulf %120, %121 : vector<64x64xf32>
    %cst_38 = arith.constant -1.000000e+30 : f32
    %123 = vector.broadcast %cst_38 : f32 to vector<64x64xf32>
    %124 = arith.select %16, %122, %123 : vector<64x64xi1>, vector<64x64xf32>
    %cst_39 = arith.constant dense<0xFF800000> : vector<64xf32>
    %125 = vector.multi_reduction <maximumf>, %124, %cst_39 [1] : vector<64x64xf32> to vector<64xf32>
    %126 = vector.shape_cast %125 : vector<64xf32> to vector<64x1xf32>
    %127 = vector.broadcast %126 : vector<64x1xf32> to vector<64x64xf32>
    %128 = arith.subf %124, %127 : vector<64x64xf32>
    %129 = math.exp %128 : vector<64x64xf32>
    %cst_40 = arith.constant dense<0.000000e+00> : vector<64xf32>
    %130 = vector.multi_reduction <add>, %129, %cst_40 [1] : vector<64x64xf32> to vector<64xf32>
    %131 = vector.shape_cast %130 : vector<64xf32> to vector<64x1xf32>
    %132 = tpu.reciprocal %131 {approx = true} : vector<64x1xf32> -> vector<64x1xf32>
    %133 = vector.broadcast %132 : vector<64x1xf32> to vector<64x64xf32>
    %134 = arith.mulf %129, %133 : vector<64x64xf32>
    %135 = arith.truncf %134 : vector<64x64xf32> to vector<64x64xbf16>
    %cst_41 = arith.constant dense<0.000000e+00> : vector<64x16xf32>
    %136 = tpu.matmul %135, %119, %cst_41 {dimension_numbers = #tpu.dot_dimension_numbers<[1], [0], [0], [1], [0, 0, 1, 1], [], []>} : vector<64x64xbf16>, vector<64x16xbf16>, vector<64x16xf32> -> vector<64x16xf32>
    %137 = vector.extract_strided_slice %9 {offsets = [0, 96], sizes = [64, 16], strides = [1, 1]} : vector<64x128xbf16> to vector<64x16xbf16>
    %138 = vector.extract_strided_slice %11 {offsets = [0, 96], sizes = [64, 16], strides = [1, 1]} : vector<64x128xbf16> to vector<64x16xbf16>
    %139 = vector.extract_strided_slice %13 {offsets = [0, 96], sizes = [64, 16], strides = [1, 1]} : vector<64x128xbf16> to vector<64x16xbf16>
    %cst_42 = arith.constant dense<0.000000e+00> : vector<64x64xf32>
    %140 = tpu.matmul %137, %138, %cst_42 {dimension_numbers = #tpu.dot_dimension_numbers<[1], [1], [0], [0], [0, 0, 1, 0], [], []>} : vector<64x16xbf16>, vector<64x16xbf16>, vector<64x64xf32> -> vector<64x64xf32>
    %cst_43 = arith.constant 2.500000e-01 : f32
    %141 = vector.broadcast %cst_43 : f32 to vector<64x64xf32>
    %142 = arith.mulf %140, %141 : vector<64x64xf32>
    %cst_44 = arith.constant -1.000000e+30 : f32
    %143 = vector.broadcast %cst_44 : f32 to vector<64x64xf32>
    %144 = arith.select %16, %142, %143 : vector<64x64xi1>, vector<64x64xf32>
    %cst_45 = arith.constant dense<0xFF800000> : vector<64xf32>
    %145 = vector.multi_reduction <maximumf>, %144, %cst_45 [1] : vector<64x64xf32> to vector<64xf32>
    %146 = vector.shape_cast %145 : vector<64xf32> to vector<64x1xf32>
    %147 = vector.broadcast %146 : vector<64x1xf32> to vector<64x64xf32>
    %148 = arith.subf %144, %147 : vector<64x64xf32>
    %149 = math.exp %148 : vector<64x64xf32>
    %cst_46 = arith.constant dense<0.000000e+00> : vector<64xf32>
    %150 = vector.multi_reduction <add>, %149, %cst_46 [1] : vector<64x64xf32> to vector<64xf32>
    %151 = vector.shape_cast %150 : vector<64xf32> to vector<64x1xf32>
    %152 = tpu.reciprocal %151 {approx = true} : vector<64x1xf32> -> vector<64x1xf32>
    %153 = vector.broadcast %152 : vector<64x1xf32> to vector<64x64xf32>
    %154 = arith.mulf %149, %153 : vector<64x64xf32>
    %155 = arith.truncf %154 : vector<64x64xf32> to vector<64x64xbf16>
    %cst_47 = arith.constant dense<0.000000e+00> : vector<64x16xf32>
    %156 = tpu.matmul %155, %139, %cst_47 {dimension_numbers = #tpu.dot_dimension_numbers<[1], [0], [0], [1], [0, 0, 1, 1], [], []>} : vector<64x64xbf16>, vector<64x16xbf16>, vector<64x16xf32> -> vector<64x16xf32>
    %157 = vector.extract_strided_slice %9 {offsets = [0, 112], sizes = [64, 16], strides = [1, 1]} : vector<64x128xbf16> to vector<64x16xbf16>
    %158 = vector.extract_strided_slice %11 {offsets = [0, 112], sizes = [64, 16], strides = [1, 1]} : vector<64x128xbf16> to vector<64x16xbf16>
    %159 = vector.extract_strided_slice %13 {offsets = [0, 112], sizes = [64, 16], strides = [1, 1]} : vector<64x128xbf16> to vector<64x16xbf16>
    %cst_48 = arith.constant dense<0.000000e+00> : vector<64x64xf32>
    %160 = tpu.matmul %157, %158, %cst_48 {dimension_numbers = #tpu.dot_dimension_numbers<[1], [1], [0], [0], [0, 0, 1, 0], [], []>} : vector<64x16xbf16>, vector<64x16xbf16>, vector<64x64xf32> -> vector<64x64xf32>
    %cst_49 = arith.constant 2.500000e-01 : f32
    %161 = vector.broadcast %cst_49 : f32 to vector<64x64xf32>
    %162 = arith.mulf %160, %161 : vector<64x64xf32>
    %cst_50 = arith.constant -1.000000e+30 : f32
    %163 = vector.broadcast %cst_50 : f32 to vector<64x64xf32>
    %164 = arith.select %16, %162, %163 : vector<64x64xi1>, vector<64x64xf32>
    %cst_51 = arith.constant dense<0xFF800000> : vector<64xf32>
    %165 = vector.multi_reduction <maximumf>, %164, %cst_51 [1] : vector<64x64xf32> to vector<64xf32>
    %166 = vector.shape_cast %165 : vector<64xf32> to vector<64x1xf32>
    %167 = vector.broadcast %166 : vector<64x1xf32> to vector<64x64xf32>
    %168 = arith.subf %164, %167 : vector<64x64xf32>
    %169 = math.exp %168 : vector<64x64xf32>
    %cst_52 = arith.constant dense<0.000000e+00> : vector<64xf32>
    %170 = vector.multi_reduction <add>, %169, %cst_52 [1] : vector<64x64xf32> to vector<64xf32>
    %171 = vector.shape_cast %170 : vector<64xf32> to vector<64x1xf32>
    %172 = tpu.reciprocal %171 {approx = true} : vector<64x1xf32> -> vector<64x1xf32>
    %173 = vector.broadcast %172 : vector<64x1xf32> to vector<64x64xf32>
    %174 = arith.mulf %169, %173 : vector<64x64xf32>
    %175 = arith.truncf %174 : vector<64x64xf32> to vector<64x64xbf16>
    %cst_53 = arith.constant dense<0.000000e+00> : vector<64x16xf32>
    %176 = tpu.matmul %175, %159, %cst_53 {dimension_numbers = #tpu.dot_dimension_numbers<[1], [0], [0], [1], [0, 0, 1, 1], [], []>} : vector<64x64xbf16>, vector<64x16xbf16>, vector<64x16xf32> -> vector<64x16xf32>
    %177 = tpu.concatenate %36, %56, %76, %96, %116, %136, %156, %176 in 1 : vector<64x16xf32>, vector<64x16xf32>, vector<64x16xf32>, vector<64x16xf32>, vector<64x16xf32>, vector<64x16xf32>, vector<64x16xf32>, vector<64x16xf32> -> vector<64x128xf32>
    %178 = arith.truncf %177 : vector<64x128xf32> to vector<64x128xbf16>
    %c0_54 = arith.constant 0 : index
    %c0_55 = arith.constant 0 : index
    %179 = vector.load %arg4[%c0_54, %c0_55] : memref<128x128xbf16, #tpu.memory_space<vmem>>, vector<128x128xbf16>
    %cst_56 = arith.constant dense<0.000000e+00> : vector<64x128xf32>
    %180 = tpu.matmul %178, %179, %cst_56 {dimension_numbers = #tpu.dot_dimension_numbers<[1], [0], [0], [1], [0, 0, 1, 1], [], []>} : vector<64x128xbf16>, vector<128x128xbf16>, vector<64x128xf32> -> vector<64x128xf32>
    %c0_57 = arith.constant 0 : index
    %c0_58 = arith.constant 0 : index
    %181 = vector.load %arg5[%c0_57, %c0_58] : memref<1x128xf32, #tpu.memory_space<vmem>>, vector<1x128xf32>
    %182 = vector.broadcast %181 : vector<1x128xf32> to vector<64x128xf32>
    %183 = arith.addf %180, %182 : vector<64x128xf32>
    %184 = arith.addf %1, %183 : vector<64x128xf32>
    %c0_59 = arith.constant 0 : index
    %c0_60 = arith.constant 0 : index
    %185 = vector.load %arg6[%c0_59, %c0_60] : memref<1x128xf32, #tpu.memory_space<vmem>>, vector<1x128xf32>
    %c0_61 = arith.constant 0 : index
    %c0_62 = arith.constant 0 : index
    %186 = vector.load %arg7[%c0_61, %c0_62] : memref<1x128xf32, #tpu.memory_space<vmem>>, vector<1x128xf32>
    %cst_63 = arith.constant dense<0.000000e+00> : vector<64xf32>
    %187 = vector.multi_reduction <add>, %184, %cst_63 [1] : vector<64x128xf32> to vector<64xf32>
    %188 = vector.shape_cast %187 : vector<64xf32> to vector<64x1xf32>
    %cst_64 = arith.constant 1.280000e+02 : f32
    %189 = vector.broadcast %cst_64 : f32 to vector<64x1xf32>
    %190 = arith.divf %188, %189 : vector<64x1xf32>
    %191 = vector.broadcast %190 : vector<64x1xf32> to vector<64x128xf32>
    %192 = arith.subf %184, %191 : vector<64x128xf32>
    %193 = arith.mulf %192, %192 : vector<64x128xf32>
    %cst_65 = arith.constant dense<0.000000e+00> : vector<64xf32>
    %194 = vector.multi_reduction <add>, %193, %cst_65 [1] : vector<64x128xf32> to vector<64xf32>
    %195 = vector.shape_cast %194 : vector<64xf32> to vector<64x1xf32>
    %cst_66 = arith.constant 1.280000e+02 : f32
    %196 = vector.broadcast %cst_66 : f32 to vector<64x1xf32>
    %197 = arith.divf %195, %196 : vector<64x1xf32>
    %198 = vector.broadcast %190 : vector<64x1xf32> to vector<64x128xf32>
    %199 = arith.subf %184, %198 : vector<64x128xf32>
    %cst_67 = arith.constant 9.99999974E-6 : f32
    %200 = vector.broadcast %cst_67 : f32 to vector<64x1xf32>
    %201 = arith.addf %197, %200 : vector<64x1xf32>
    %202 = math.rsqrt %201 : vector<64x1xf32>
    %203 = vector.broadcast %202 : vector<64x1xf32> to vector<64x128xf32>
    %204 = arith.mulf %199, %203 : vector<64x128xf32>
    %205 = vector.broadcast %185 : vector<1x128xf32> to vector<64x128xf32>
    %206 = arith.mulf %204, %205 : vector<64x128xf32>
    %207 = vector.broadcast %186 : vector<1x128xf32> to vector<64x128xf32>
    %208 = arith.addf %206, %207 : vector<64x128xf32>
    %209 = arith.truncf %208 : vector<64x128xf32> to vector<64x128xbf16>
    %c0_68 = arith.constant 0 : index
    %c0_69 = arith.constant 0 : index
    %210 = vector.load %arg8[%c0_68, %c0_69] : memref<128x256xbf16, #tpu.memory_space<vmem>>, vector<128x256xbf16>
    %cst_70 = arith.constant dense<0.000000e+00> : vector<64x256xf32>
    %211 = tpu.matmul %209, %210, %cst_70 {dimension_numbers = #tpu.dot_dimension_numbers<[1], [0], [0], [1], [0, 0, 1, 1], [], []>} : vector<64x128xbf16>, vector<128x256xbf16>, vector<64x256xf32> -> vector<64x256xf32>
    %c0_71 = arith.constant 0 : index
    %c0_72 = arith.constant 0 : index
    %212 = vector.load %arg9[%c0_71, %c0_72] : memref<1x256xf32, #tpu.memory_space<vmem>>, vector<1x256xf32>
    %213 = vector.broadcast %212 : vector<1x256xf32> to vector<64x256xf32>
    %214 = arith.addf %211, %213 : vector<64x256xf32>
    %cst_73 = arith.constant 0.000000e+00 : f32
    %215 = vector.broadcast %cst_73 : f32 to vector<64x256xf32>
    %216 = arith.maximumf %214, %215 : vector<64x256xf32>
    %217 = arith.truncf %216 : vector<64x256xf32> to vector<64x256xbf16>
    %c0_74 = arith.constant 0 : index
    %c0_75 = arith.constant 0 : index
    %218 = vector.load %arg10[%c0_74, %c0_75] : memref<256x128xbf16, #tpu.memory_space<vmem>>, vector<256x128xbf16>
    %cst_76 = arith.constant dense<0.000000e+00> : vector<64x128xf32>
    %219 = tpu.matmul %217, %218, %cst_76 {dimension_numbers = #tpu.dot_dimension_numbers<[1], [0], [0], [1], [0, 0, 1, 1], [], []>} : vector<64x256xbf16>, vector<256x128xbf16>, vector<64x128xf32> -> vector<64x128xf32>
    %c0_77 = arith.constant 0 : index
    %c0_78 = arith.constant 0 : index
    %220 = vector.load %arg11[%c0_77, %c0_78] : memref<1x128xf32, #tpu.memory_space<vmem>>, vector<1x128xf32>
    %221 = vector.broadcast %220 : vector<1x128xf32> to vector<64x128xf32>
    %222 = arith.addf %219, %221 : vector<64x128xf32>
    %223 = arith.addf %208, %222 : vector<64x128xf32>
    %c0_79 = arith.constant 0 : index
    %c0_80 = arith.constant 0 : index
    %224 = vector.load %arg12[%c0_79, %c0_80] : memref<1x128xf32, #tpu.memory_space<vmem>>, vector<1x128xf32>
    %c0_81 = arith.constant 0 : index
    %c0_82 = arith.constant 0 : index
    %225 = vector.load %arg13[%c0_81, %c0_82] : memref<1x128xf32, #tpu.memory_space<vmem>>, vector<1x128xf32>
    %cst_83 = arith.constant dense<0.000000e+00> : vector<64xf32>
    %226 = vector.multi_reduction <add>, %223, %cst_83 [1] : vector<64x128xf32> to vector<64xf32>
    %227 = vector.shape_cast %226 : vector<64xf32> to vector<64x1xf32>
    %cst_84 = arith.constant 1.280000e+02 : f32
    %228 = vector.broadcast %cst_84 : f32 to vector<64x1xf32>
    %229 = arith.divf %227, %228 : vector<64x1xf32>
    %230 = vector.broadcast %229 : vector<64x1xf32> to vector<64x128xf32>
    %231 = arith.subf %223, %230 : vector<64x128xf32>
    %232 = arith.mulf %231, %231 : vector<64x128xf32>
    %cst_85 = arith.constant dense<0.000000e+00> : vector<64xf32>
    %233 = vector.multi_reduction <add>, %232, %cst_85 [1] : vector<64x128xf32> to vector<64xf32>
    %234 = vector.shape_cast %233 : vector<64xf32> to vector<64x1xf32>
    %cst_86 = arith.constant 1.280000e+02 : f32
    %235 = vector.broadcast %cst_86 : f32 to vector<64x1xf32>
    %236 = arith.divf %234, %235 : vector<64x1xf32>
    %237 = vector.broadcast %229 : vector<64x1xf32> to vector<64x128xf32>
    %238 = arith.subf %223, %237 : vector<64x128xf32>
    %cst_87 = arith.constant 9.99999974E-6 : f32
    %239 = vector.broadcast %cst_87 : f32 to vector<64x1xf32>
    %240 = arith.addf %236, %239 : vector<64x1xf32>
    %241 = math.rsqrt %240 : vector<64x1xf32>
    %242 = vector.broadcast %241 : vector<64x1xf32> to vector<64x128xf32>
    %243 = arith.mulf %238, %242 : vector<64x128xf32>
    %244 = vector.broadcast %224 : vector<1x128xf32> to vector<64x128xf32>
    %245 = arith.mulf %243, %244 : vector<64x128xf32>
    %246 = vector.broadcast %225 : vector<1x128xf32> to vector<64x128xf32>
    %247 = arith.addf %245, %246 : vector<64x128xf32>
    %c0_88 = arith.constant 0 : index
    %c0_89 = arith.constant 0 : index
    %c0_90 = arith.constant 0 : index
    %248 = vector.load %arg14[%c0_88, %c0_89, %c0_90] : memref<1x64x128xf32, #tpu.memory_space<vmem>>, vector<1x64x128xf32>
    %249 = vector.shape_cast %248 : vector<1x64x128xf32> to vector<64x128xf32>
    %250 = vector.shape_cast %247 : vector<64x128xf32> to vector<1x64x128xf32>
    tpu.vector_store %arg14[%c0_88, %c0_89, %c0_90], %250 {strides = array<i32>} : memref<1x64x128xf32, #tpu.memory_space<vmem>>, vector<1x64x128xf32>,
    return
  }
  func.func @transform_0(%arg0: i32) -> (i32, i32, i32) {
    %c0_i32 = arith.constant 0 : i32
    %c0_i32_0 = arith.constant 0 : i32
    %c0_i32_1 = arith.constant 0 : i32
    return %arg0, %c0_i32, %c0_i32_0 : i32, i32, i32
  }
  func.func @transform_1(%arg0: i32) -> (i32, i32) {
    %c0_i32 = arith.constant 0 : i32
    %c0_i32_0 = arith.constant 0 : i32
    %c0_i32_1 = arith.constant 0 : i32
    return %c0_i32, %c0_i32_0 : i32, i32
  }
  func.func @transform_2(%arg0: i32) -> (i32, i32) {
    %c0_i32 = arith.constant 0 : i32
    %c0_i32_0 = arith.constant 0 : i32
    %c0_i32_1 = arith.constant 0 : i32
    return %c0_i32, %c0_i32_0 : i32, i32
  }
  func.func @transform_3(%arg0: i32) -> (i32, i32) {
    %c0_i32 = arith.constant 0 : i32
    %c0_i32_0 = arith.constant 0 : i32
    %c0_i32_1 = arith.constant 0 : i32
    return %c0_i32, %c0_i32_0 : i32, i32
  }
  func.func @transform_4(%arg0: i32) -> (i32, i32) {
    %c0_i32 = arith.constant 0 : i32
    %c0_i32_0 = arith.constant 0 : i32
    %c0_i32_1 = arith.constant 0 : i32
    return %c0_i32, %c0_i32_0 : i32, i32
  }
  func.func @transform_5(%arg0: i32) -> (i32, i32) {
    %c0_i32 = arith.constant 0 : i32
    %c0_i32_0 = arith.constant 0 : i32
    %c0_i32_1 = arith.constant 0 : i32
    return %c0_i32, %c0_i32_0 : i32, i32
  }
  func.func @transform_6(%arg0: i32) -> (i32, i32) {
    %c0_i32 = arith.constant 0 : i32
    %c0_i32_0 = arith.constant 0 : i32
    %c0_i32_1 = arith.constant 0 : i32
    return %c0_i32, %c0_i32_0 : i32, i32
  }
  func.func @transform_7(%arg0: i32) -> (i32, i32) {
    %c0_i32 = arith.constant 0 : i32
    %c0_i32_0 = arith.constant 0 : i32
    %c0_i32_1 = arith.constant 0 : i32
    return %c0_i32, %c0_i32_0 : i32, i32
  }
  func.func @transform_8(%arg0: i32) -> (i32, i32) {
    %c0_i32 = arith.constant 0 : i32
    %c0_i32_0 = arith.constant 0 : i32
    %c0_i32_1 = arith.constant 0 : i32
    return %c0_i32, %c0_i32_0 : i32, i32
  }
  func.func @transform_9(%arg0: i32) -> (i32, i32) {
    %c0_i32 = arith.constant 0 : i32
    %c0_i32_0 = arith.constant 0 : i32
    %c0_i32_1 = arith.constant 0 : i32
    return %c0_i32, %c0_i32_0 : i32, i32
  }
  func.func @transform_10(%arg0: i32) -> (i32, i32) {
    %c0_i32 = arith.constant 0 : i32
    %c0_i32_0 = arith.constant 0 : i32
    %c0_i32_1 = arith.constant 0 : i32
    return %c0_i32, %c0_i32_0 : i32, i32
  }
  func.func @transform_11(%arg0: i32) -> (i32, i32) {
    %c0_i32 = arith.constant 0 : i32
    %c0_i32_0 = arith.constant 0 : i32
    %c0_i32_1 = arith.constant 0 : i32
    return %c0_i32, %c0_i32_0 : i32, i32
  }
  func.func @transform_12(%arg0: i32) -> (i32, i32) {
    %c0_i32 = arith.constant 0 : i32
    %c0_i32_0 = arith.constant 0 : i32
    %c0_i32_1 = arith.constant 0 : i32
    return %c0_i32, %c0_i32_0 : i32, i32
  }
  func.func @transform_13(%arg0: i32) -> (i32, i32, i32) {
    %c0_i32 = arith.constant 0 : i32
    %c0_i32_0 = arith.constant 0 : i32
    %c0_i32_1 = arith.constant 0 : i32
    return %arg0, %c0_i32, %c0_i32_0 : i32, i32, i32
  }
}

</mosaic_0001>

<llo_original>
// kernel: _lambda_.6
$region0: #{_lambda_.6}
  #allocation0 [shape = 'u32[]', space=smem, size = 0x4, offset = 0x4, fixed_abs, tag = 'smem constant byte address 0x4 - core index']
  #allocation1 [shape = 'u32[144,128]{1,0:T(1,128)}', space=vmem, size = 0x12000, scoped, tag = 'internal scratch']
  %s0 = inlined_call_operand.vmem [shape: f32[128,64], index: 0, kind: input, shape index: {}]
  %s1 = inlined_call_operand.vmem [shape: bf16[64,128], index: 1, kind: input, shape index: {}]
  %s2 = inlined_call_operand.vmem [shape: f32[1,128], index: 2, kind: input, shape index: {}]
  %s3 = inlined_call_operand.vmem [shape: bf16[128,128], index: 3, kind: input, shape index: {}]
  %s4 = inlined_call_operand.vmem [shape: f32[1,128], index: 4, kind: input, shape index: {}]
  %s5 = inlined_call_operand.vmem [shape: bf16[128,128], index: 5, kind: input, shape index: {}]
  %s6 = inlined_call_operand.vmem [shape: f32[1,128], index: 6, kind: input, shape index: {}]
  %s7 = inlined_call_operand.vmem [shape: f32[1,128], index: 7, kind: input, shape index: {}]
  %s8 = inlined_call_operand.vmem [shape: f32[1,128], index: 8, kind: input, shape index: {}]
  %s9 = inlined_call_operand.vmem [shape: f32[128,128], index: 9, kind: output, shape index: {}]
  %s10 = sld [smem:[#allocation0]]
  $region46: #{_lambda_.6} parent=0
    _
  %s12 = ssub.s32 1, %s10
  %s13 = scalar_select 0, %s12, %s10
  // Predicated region
  $region2: #{_lambda_.6} parent=0 // pred_check
    _
  $region3: #{_lambda_.6} parent=0 // pred_check_branch
    %15 = sbr.rel (0) target = $region5
  $region4: #{_lambda_.6} parent=0 // pred_region
    _
  $region5: #{_lambda_.6} parent=0 // pred_fallthru
    _
  // Predicated region
  $region6: #{_lambda_.6} parent=0 // pred_check
    _
  $region7: #{_lambda_.6} parent=0 // pred_check_branch
    %17 = sbr.rel (0) target = $region9
  $region8: #{_lambda_.6} parent=0 // pred_region
    _
  $region9: #{_lambda_.6} parent=0 // pred_fallthru
    _
  // Predicated region
  $region10: #{_lambda_.6} parent=0 // pred_check
    _
  $region11: #{_lambda_.6} parent=0 // pred_check_branch
    %19 = sbr.rel (0) target = $region13
  $region12: #{_lambda_.6} parent=0 // pred_region
    _
  $region13: #{_lambda_.6} parent=0 // pred_fallthru
    _
  // Predicated region
  $region14: #{_lambda_.6} parent=0 // pred_check
    _
  $region15: #{_lambda_.6} parent=0 // pred_check_branch
    %21 = sbr.rel (0) target = $region17
  $region16: #{_lambda_.6} parent=0 // pred_region
    _
  $region17: #{_lambda_.6} parent=0 // pred_fallthru
    _
  // Predicated region
  $region18: #{_lambda_.6} parent=0 // pred_check
    _
  $region19: #{_lambda_.6} parent=0 // pred_check_branch
    %23 = sbr.rel (0) target = $region21
  $region20: #{_lambda_.6} parent=0 // pred_region
    _
  $region21: #{_lambda_.6} parent=0 // pred_fallthru
    _
  // Predicated region
  $region22: #{_lambda_.6} parent=0 // pred_check
    _
  $region23: #{_lambda_.6} parent=0 // pred_check_branch
    %25 = sbr.rel (0) target = $region25
  $region24: #{_lambda_.6} parent=0 // pred_region
    _
  $region25: #{_lambda_.6} parent=0 // pred_fallthru
    _
  // Predicated region
  $region26: #{_lambda_.6} parent=0 // pred_check
    _
  $region27: #{_lambda_.6} parent=0 // pred_check_branch
    %27 = sbr.rel (0) target = $region29
  $region28: #{_lambda_.6} parent=0 // pred_region
    _
  $region29: #{_lambda_.6} parent=0 // pred_fallthru
    _
  // Predicated region
  $region30: #{_lambda_.6} parent=0 // pred_check
    _
  $region31: #{_lambda_.6} parent=0 // pred_check_branch
    %29 = sbr.rel (0) target = $region33
  $region32: #{_lambda_.6} parent=0 // pred_region
    _
  $region33: #{_lambda_.6} parent=0 // pred_fallthru
    _
  // Predicated region
  $region34: #{_lambda_.6} parent=0 // pred_check
    _
  $region35: #{_lambda_.6} parent=0 // pred_check_branch
    %31 = sbr.rel (0) target = $region37
  $region36: #{_lambda_.6} parent=0 // pred_region
    _
  $region37: #{_lambda_.6} parent=0 // pred_fallthru
    _
  %v33 = vld [vmem:[%s0] sm:$0xff]
  %v34 = vld [vmem:[%s0 + $0x8] sm:$0xff]
  %v35 = vld [vmem:[%s0 + $0x10] sm:$0xff]
  %v36 = vld [vmem:[%s0 + $0x18] sm:$0xff]
  %v37 = vld [vmem:[%s0 + $0x20] sm:$0xff]
  %v38 = vld [vmem:[%s0 + $0x28] sm:$0xff]
  %v39 = vld [vmem:[%s0 + $0x30] sm:$0xff]
  %v40 = vld [vmem:[%s0 + $0x38] sm:$0xff]
  %v41 = vld [vmem:[%s0 + $0x40] sm:$0xff]
  %v42 = vld [vmem:[%s0 + $0x48] sm:$0xff]
  %v43 = vld [vmem:[%s0 + $0x50] sm:$0xff]
  %v44 = vld [vmem:[%s0 + $0x58] sm:$0xff]
  %v45 = vld [vmem:[%s0 + $0x60] sm:$0xff]
  %v46 = vld [vmem:[%s0 + $0x68] sm:$0xff]
  %v47 = vld [vmem:[%s0 + $0x70] sm:$0xff]
  %v48 = vld [vmem:[%s0 + $0x78] sm:$0xff]
  %v49 = vpack.c.bf16 %v34, %v33
  %v50 = vpack.c.bf16 %v36, %v35
  %v51 = vpack.c.bf16 %v38, %v37
  %v52 = vpack.c.bf16 %v40, %v39
  %v53 = vpack.c.bf16 %v42, %v41
  %v54 = vpack.c.bf16 %v44, %v43
  %v55 = vpack.c.bf16 %v46, %v45
  %v56 = vpack.c.bf16 %v48, %v47
  %v57 = vld [vmem:[%s1] sm:$0xf]
  %v58 = vld [vmem:[%s1 + $0x4] sm:$0xf]
  %v59 = vld [vmem:[%s1 + $0x8] sm:$0xf]
  %v60 = vld [vmem:[%s1 + $0xc] sm:$0xf]
  %v61 = vld [vmem:[%s1 + $0x10] sm:$0xf]
  %v62 = vld [vmem:[%s1 + $0x14] sm:$0xf]
  %v63 = vld [vmem:[%s1 + $0x18] sm:$0xf]
  %v64 = vld [vmem:[%s1 + $0x1c] sm:$0xf]
  %v65 = vld [vmem:[%s2] sm:$0x1]
  %v67 = vlaneseq
  %v68 = vshrl.u32 %v67, 7
  %v69 = vsub.s32 0, %v68
  %v70 = vrot.slane %v65, %v69
  %v80 = vunpack.c.l.b16 %v57
  %v81 = vunpack.c.l.b16 %v58
  %v82 = vunpack.c.l.b16 %v59
  %v83 = vunpack.c.l.b16 %v60
  %v84 = vunpack.c.l.b16 %v61
  %v85 = vunpack.c.l.b16 %v62
  %v86 = vunpack.c.l.b16 %v63
  %v87 = vunpack.c.l.b16 %v64
  %v88 = vpack.c.b16 %v81, %v80
  %v89 = vpack.c.b16 %v83, %v82
  %v90 = vpack.c.b16 %v85, %v84
  %v91 = vpack.c.b16 %v87, %v86
  %vm96 = vcmask 523264
  %v98 = vsel %vm96, %v49, 0
  %v101 = vsel %vm96, %v50, 0
  %v104 = vsel %vm96, %v51, 0
  %v107 = vsel %vm96, %v52, 0
  %v110 = vsel %vm96, %v53, 0
  %v113 = vsel %vm96, %v54, 0
  %v116 = vsel %vm96, %v55, 0
  %v119 = vsel %vm96, %v56, 0
  %121 = vmatprep.subr.bf16.mxu0 0
  %122 = vmatpush1.bf16.msra.mxu0 0
  %123 = vmatprep.subr.bf16.mxu0 0
  %124 = vmatpush1.bf16.msra.mxu0 0
  %125 = vmatprep.subr.bf16.mxu0 0
  %126 = vmatpush1.bf16.msra.mxu0 0
  %127 = vmatprep.subr.bf16.mxu0 0
  %128 = vmatpush1.bf16.msra.mxu0 0
  %129 = vmatprep.subr.bf16.mxu0 0
  %130 = vmatpush1.bf16.msra.mxu0 %v91
  %131 = vmatprep.subr.bf16.mxu0 0
  %132 = vmatpush1.bf16.msra.mxu0 %v90
  %133 = vmatprep.subr.bf16.mxu0 0
  %134 = vmatpush1.bf16.msra.mxu0 %v89
  %135 = vmatprep.subr.bf16.mxu0 0
  %136 = vmatpush1.bf16.msra.mxu0 %v88
  %137 = vmatprep.subr.bf16.mxu0 0
  %138 = vmatpush2.bf16.msra.mxu0 0
  %139 = vmatprep.subr.bf16.mxu0 0
  %140 = vmatpush2.bf16.msra.mxu0 0
  %141 = vmatprep.subr.bf16.mxu0 0
  %142 = vmatpush2.bf16.msra.mxu0 0
  %143 = vmatprep.subr.bf16.mxu0 0
  %144 = vmatpush2.bf16.msra.mxu0 0
  %145 = vmatprep.subr.bf16.mxu0 0
  %146 = vmatpush2.bf16.msra.mxu0 0
  %147 = vmatprep.subr.bf16.mxu0 0
  %148 = vmatpush2.bf16.msra.mxu0 0
  %149 = vmatprep.subr.bf16.mxu0 0
  %150 = vmatpush2.bf16.msra.mxu0 0
  %151 = vmatprep.subr.bf16.mxu0 0
  %152 = vmatpush2.bf16.msra.mxu0 0
  %153 = vmatprep.mubr.bf16.mxu0 0
  %154 = vmatmul.mubr.bf16.gmra.mxu0 %v98
  %v155 = vpop.f32.mrf.mxu0
  %v156 = vadd.f32 %v70, %v155
  %v157 = vpop.f32.mrf.mxu0
  %v158 = vpop.f32.mrf.mxu0
  %v159 = vadd.f32 %v70, %v158
  %v160 = vpop.f32.mrf.mxu0
  %161 = vmatprep.mubr.bf16.mxu0 0
  %162 = vmatmul.mubr.bf16.gmra.mxu0 %v101
  %v163 = vpop.f32.mrf.mxu0
  %v164 = vadd.f32 %v70, %v163
  %v165 = vpop.f32.mrf.mxu0
  %v166 = vpop.f32.mrf.mxu0
  %v167 = vadd.f32 %v70, %v166
  %v168 = vpop.f32.mrf.mxu0
  %169 = vmatprep.mubr.bf16.mxu0 0
  %170 = vmatmul.mubr.bf16.gmra.mxu0 %v104
  %v171 = vpop.f32.mrf.mxu0
  %v172 = vadd.f32 %v70, %v171
  %v173 = vpop.f32.mrf.mxu0
  %v174 = vpop.f32.mrf.mxu0
  %v175 = vadd.f32 %v70, %v174
  %v176 = vpop.f32.mrf.mxu0
  %177 = vmatprep.mubr.bf16.mxu0 0
  %178 = vmatmul.mubr.bf16.gmra.mxu0 %v107
  %v179 = vpop.f32.mrf.mxu0
  %v180 = vadd.f32 %v70, %v179
  %v181 = vpop.f32.mrf.mxu0
  %v182 = vpop.f32.mrf.mxu0
  %v183 = vadd.f32 %v70, %v182
  %v184 = vpop.f32.mrf.mxu0
  %185 = vmatprep.mubr.bf16.mxu0 0
  %186 = vmatmul.mubr.bf16.gmra.mxu0 %v110
  %v187 = vpop.f32.mrf.mxu0
  %v188 = vadd.f32 %v70, %v187
  %v189 = vpop.f32.mrf.mxu0
  %v190 = vpop.f32.mrf.mxu0
  %v191 = vadd.f32 %v70, %v190
  %v192 = vpop.f32.mrf.mxu0
  %193 = vmatprep.mubr.bf16.mxu0 0
  %194 = vmatmul.mubr.bf16.gmra.mxu0 %v113
  %v195 = vpop.f32.mrf.mxu0
  %v196 = vadd.f32 %v70, %v195
  %v197 = vpop.f32.mrf.mxu0
  %v198 = vpop.f32.mrf.mxu0
  %v199 = vadd.f32 %v70, %v198
  %v200 = vpop.f32.mrf.mxu0
  %201 = vmatprep.mubr.bf16.mxu0 0
  %202 = vmatmul.mubr.bf16.gmra.mxu0 %v116
  %v203 = vpop.f32.mrf.mxu0
  %v204 = vadd.f32 %v70, %v203
  %v205 = vpop.f32.mrf.mxu0
  %v206 = vpop.f32.mrf.mxu0
  %v207 = vadd.f32 %v70, %v206
  %v208 = vpop.f32.mrf.mxu0
  %209 = vmatprep.mubr.bf16.mxu0 0
  %210 = vmatmul.mubr.bf16.gmra.mxu0 %v119
  %v211 = vpop.f32.mrf.mxu0
  %v212 = vadd.f32 %v70, %v211
  %v213 = vpop.f32.mrf.mxu0
  %v214 = vpop.f32.mrf.mxu0
  %v215 = vadd.f32 %v70, %v214
  %v216 = vpop.f32.mrf.mxu0
  %217 = vdwg.mxu0
  %v218 = vmax.f32 %v156, 0.0
  %v219 = vmax.f32 %v159, 0.0
  %v220 = vmax.f32 %v164, 0.0
  %v221 = vmax.f32 %v167, 0.0
  %v222 = vmax.f32 %v172, 0.0
  %v223 = vmax.f32 %v175, 0.0
  %v224 = vmax.f32 %v180, 0.0
  %v225 = vmax.f32 %v183, 0.0
  %v226 = vmax.f32 %v188, 0.0
  %v227 = vmax.f32 %v191, 0.0
  %v228 = vmax.f32 %v196, 0.0
  %v229 = vmax.f32 %v199, 0.0
  %v230 = vmax.f32 %v204, 0.0
  %v231 = vmax.f32 %v207, 0.0
  %v232 = vmax.f32 %v212, 0.0
  %v233 = vmax.f32 %v215, 0.0
  %v234 = vpack.c.bf16 %v219, %v218
  %v235 = vpack.c.bf16 %v221, %v220
  %v236 = vpack.c.bf16 %v223, %v222
  %v237 = vpack.c.bf16 %v225, %v224
  %v238 = vpack.c.bf16 %v227, %v226
  %v239 = vpack.c.bf16 %v229, %v228
  %v240 = vpack.c.bf16 %v231, %v230
  %v241 = vpack.c.bf16 %v233, %v232
  %v242 = vld [vmem:[%s3] sm:$0xf]
  %v243 = vld [vmem:[%s3 + $0x4] sm:$0xf]
  %v244 = vld [vmem:[%s3 + $0x8] sm:$0xf]
  %v245 = vld [vmem:[%s3 + $0xc] sm:$0xf]
  %v246 = vld [vmem:[%s3 + $0x10] sm:$0xf]
  %v247 = vld [vmem:[%s3 + $0x14] sm:$0xf]
  %v248 = vld [vmem:[%s3 + $0x18] sm:$0xf]
  %v249 = vld [vmem:[%s3 + $0x1c] sm:$0xf]
  %v250 = vld [vmem:[%s3 + $0x20] sm:$0xf]
  %v251 = vld [vmem:[%s3 + $0x24] sm:$0xf]
  %v252 = vld [vmem:[%s3 + $0x28] sm:$0xf]
  %v253 = vld [vmem:[%s3 + $0x2c] sm:$0xf]
  %v254 = vld [vmem:[%s3 + $0x30] sm:$0xf]
  %v255 = vld [vmem:[%s3 + $0x34] sm:$0xf]
  %v256 = vld [vmem:[%s3 + $0x38] sm:$0xf]
  %v257 = vld [vmem:[%s3 + $0x3c] sm:$0xf]
  %v258 = vld [vmem:[%s4] sm:$0x1]
  %v260 = vlaneseq
  %v261 = vshrl.u32 %v260, 7
  %v262 = vsub.s32 0, %v261
  %v263 = vrot.slane %v258, %v262
  %v281 = vunpack.c.l.b16 %v242
  %v282 = vunpack.c.l.b16 %v243
  %v283 = vunpack.c.l.b16 %v244
  %v284 = vunpack.c.l.b16 %v245
  %v285 = vunpack.c.l.b16 %v246
  %v286 = vunpack.c.l.b16 %v247
  %v287 = vunpack.c.l.b16 %v248
  %v288 = vunpack.c.l.b16 %v249
  %v289 = vunpack.c.l.b16 %v250
  %v290 = vunpack.c.l.b16 %v251
  %v291 = vunpack.c.l.b16 %v252
  %v292 = vunpack.c.l.b16 %v253
  %v293 = vunpack.c.l.b16 %v254
  %v294 = vunpack.c.l.b16 %v255
  %v295 = vunpack.c.l.b16 %v256
  %v296 = vunpack.c.l.b16 %v257
  %v297 = vpack.c.b16 %v282, %v281
  %v298 = vpack.c.b16 %v284, %v283
  %v299 = vpack.c.b16 %v286, %v285
  %v300 = vpack.c.b16 %v288, %v287
  %v301 = vpack.c.b16 %v290, %v289
  %v302 = vpack.c.b16 %v292, %v291
  %v303 = vpack.c.b16 %v294, %v293
  %v304 = vpack.c.b16 %v296, %v295
  %313 = vmatprep.subr.bf16.mxu0 0
  %314 = vmatpush1.bf16.msra.mxu0 %v304
  %315 = vmatprep.subr.bf16.mxu0 0
  %316 = vmatpush1.bf16.msra.mxu0 %v303
  %317 = vmatprep.subr.bf16.mxu0 0
  %318 = vmatpush1.bf16.msra.mxu0 %v302
  %319 = vmatprep.subr.bf16.mxu0 0
  %320 = vmatpush1.bf16.msra.mxu0 %v301
  %321 = vmatprep.subr.bf16.mxu0 0
  %322 = vmatpush1.bf16.msra.mxu0 %v300
  %323 = vmatprep.subr.bf16.mxu0 0
  %324 = vmatpush1.bf16.msra.mxu0 %v299
  %325 = vmatprep.subr.bf16.mxu0 0
  %326 = vmatpush1.bf16.msra.mxu0 %v298
  %327 = vmatprep.subr.bf16.mxu0 0
  %328 = vmatpush1.bf16.msra.mxu0 %v297
  %329 = vmatprep.subr.bf16.mxu0 0
  %330 = vmatpush2.bf16.msra.mxu0 0
  %331 = vmatprep.subr.bf16.mxu0 0
  %332 = vmatpush2.bf16.msra.mxu0 0
  %333 = vmatprep.subr.bf16.mxu0 0
  %334 = vmatpush2.bf16.msra.mxu0 0
  %335 = vmatprep.subr.bf16.mxu0 0
  %336 = vmatpush2.bf16.msra.mxu0 0
  %337 = vmatprep.subr.bf16.mxu0 0
  %338 = vmatpush2.bf16.msra.mxu0 0
  %339 = vmatprep.subr.bf16.mxu0 0
  %340 = vmatpush2.bf16.msra.mxu0 0
  %341 = vmatprep.subr.bf16.mxu0 0
  %342 = vmatpush2.bf16.msra.mxu0 0
  %343 = vmatprep.subr.bf16.mxu0 0
  %344 = vmatpush2.bf16.msra.mxu0 0
  %345 = vmatprep.mubr.bf16.mxu0 0
  %346 = vmatmul.mubr.bf16.gmra.mxu0 %v234
  %v347 = vpop.f32.mrf.mxu0
  %v348 = vadd.f32 %v263, %v347
  %v349 = vpop.f32.mrf.mxu0
  %v350 = vpop.f32.mrf.mxu0
  %v351 = vadd.f32 %v263, %v350
  %v352 = vpop.f32.mrf.mxu0
  %353 = vmatprep.mubr.bf16.mxu0 0
  %354 = vmatmul.mubr.bf16.gmra.mxu0 %v235
  %v355 = vpop.f32.mrf.mxu0
  %v356 = vadd.f32 %v263, %v355
  %v357 = vpop.f32.mrf.mxu0
  %v358 = vpop.f32.mrf.mxu0
  %v359 = vadd.f32 %v263, %v358
  %v360 = vpop.f32.mrf.mxu0
  %361 = vmatprep.mubr.bf16.mxu0 0
  %362 = vmatmul.mubr.bf16.gmra.mxu0 %v236
  %v363 = vpop.f32.mrf.mxu0
  %v364 = vadd.f32 %v263, %v363
  %v365 = vpop.f32.mrf.mxu0
  %v366 = vpop.f32.mrf.mxu0
  %v367 = vadd.f32 %v263, %v366
  %v368 = vpop.f32.mrf.mxu0
  %369 = vmatprep.mubr.bf16.mxu0 0
  %370 = vmatmul.mubr.bf16.gmra.mxu0 %v237
  %v371 = vpop.f32.mrf.mxu0
  %v372 = vadd.f32 %v263, %v371
  %v373 = vpop.f32.mrf.mxu0
  %v374 = vpop.f32.mrf.mxu0
  %v375 = vadd.f32 %v263, %v374
  %v376 = vpop.f32.mrf.mxu0
  %377 = vmatprep.mubr.bf16.mxu0 0
  %378 = vmatmul.mubr.bf16.gmra.mxu0 %v238
  %v379 = vpop.f32.mrf.mxu0
  %v380 = vadd.f32 %v263, %v379
  %v381 = vpop.f32.mrf.mxu0
  %v382 = vpop.f32.mrf.mxu0
  %v383 = vadd.f32 %v263, %v382
  %v384 = vpop.f32.mrf.mxu0
  %385 = vmatprep.mubr.bf16.mxu0 0
  %386 = vmatmul.mubr.bf16.gmra.mxu0 %v239
  %v387 = vpop.f32.mrf.mxu0
  %v388 = vadd.f32 %v263, %v387
  %v389 = vpop.f32.mrf.mxu0
  %v390 = vpop.f32.mrf.mxu0
  %v391 = vadd.f32 %v263, %v390
  %v392 = vpop.f32.mrf.mxu0
  %393 = vmatprep.mubr.bf16.mxu0 0
  %394 = vmatmul.mubr.bf16.gmra.mxu0 %v240
  %v395 = vpop.f32.mrf.mxu0
  %v396 = vadd.f32 %v263, %v395
  %v397 = vpop.f32.mrf.mxu0
  %v398 = vpop.f32.mrf.mxu0
  %v399 = vadd.f32 %v263, %v398
  %v400 = vpop.f32.mrf.mxu0
  %401 = vmatprep.mubr.bf16.mxu0 0
  %402 = vmatmul.mubr.bf16.gmra.mxu0 %v241
  %v403 = vpop.f32.mrf.mxu0
  %v404 = vadd.f32 %v263, %v403
  %v405 = vpop.f32.mrf.mxu0
  %v406 = vpop.f32.mrf.mxu0
  %v407 = vadd.f32 %v263, %v406
  %v408 = vpop.f32.mrf.mxu0
  %409 = vdwg.mxu0
  %v410 = vmax.f32 %v348, 0.0
  %v411 = vmax.f32 %v351, 0.0
  %v412 = vmax.f32 %v356, 0.0
  %v413 = vmax.f32 %v359, 0.0
  %v414 = vmax.f32 %v364, 0.0
  %v415 = vmax.f32 %v367, 0.0
  %v416 = vmax.f32 %v372, 0.0
  %v417 = vmax.f32 %v375, 0.0
  %v418 = vmax.f32 %v380, 0.0
  %v419 = vmax.f32 %v383, 0.0
  %v420 = vmax.f32 %v388, 0.0
  %v421 = vmax.f32 %v391, 0.0
  %v422 = vmax.f32 %v396, 0.0
  %v423 = vmax.f32 %v399, 0.0
  %v424 = vmax.f32 %v404, 0.0
  %v425 = vmax.f32 %v407, 0.0
  %v426 = vpack.c.bf16 %v411, %v410
  %v427 = vpack.c.bf16 %v413, %v412
  %v428 = vpack.c.bf16 %v415, %v414
  %v429 = vpack.c.bf16 %v417, %v416
  %v430 = vpack.c.bf16 %v419, %v418
  %v431 = vpack.c.bf16 %v421, %v420
  %v432 = vpack.c.bf16 %v423, %v422
  %v433 = vpack.c.bf16 %v425, %v424
  %v434 = vld [vmem:[%s5] sm:$0xf]
  %v435 = vld [vmem:[%s5 + $0x4] sm:$0xf]
  %v436 = vld [vmem:[%s5 + $0x8] sm:$0xf]
  %v437 = vld [vmem:[%s5 + $0xc] sm:$0xf]
  %v438 = vld [vmem:[%s5 + $0x10] sm:$0xf]
  %v439 = vld [vmem:[%s5 + $0x14] sm:$0xf]
  %v440 = vld [vmem:[%s5 + $0x18] sm:$0xf]
  %v441 = vld [vmem:[%s5 + $0x1c] sm:$0xf]
  %v442 = vld [vmem:[%s5 + $0x20] sm:$0xf]
  %v443 = vld [vmem:[%s5 + $0x24] sm:$0xf]
  %v444 = vld [vmem:[%s5 + $0x28] sm:$0xf]
  %v445 = vld [vmem:[%s5 + $0x2c] sm:$0xf]
  %v446 = vld [vmem:[%s5 + $0x30] sm:$0xf]
  %v447 = vld [vmem:[%s5 + $0x34] sm:$0xf]
  %v448 = vld [vmem:[%s5 + $0x38] sm:$0xf]
  %v449 = vld [vmem:[%s5 + $0x3c] sm:$0xf]
  %v450 = vld [vmem:[%s6] sm:$0x1]
  %v452 = vlaneseq
  %v453 = vshrl.u32 %v452, 7
  %v454 = vsub.s32 0, %v453
  %v455 = vrot.slane %v450, %v454
  %v473 = vunpack.c.l.b16 %v434
  %v474 = vunpack.c.l.b16 %v435
  %v475 = vunpack.c.l.b16 %v436
  %v476 = vunpack.c.l.b16 %v437
  %v477 = vunpack.c.l.b16 %v438
  %v478 = vunpack.c.l.b16 %v439
  %v479 = vunpack.c.l.b16 %v440
  %v480 = vunpack.c.l.b16 %v441
  %v481 = vunpack.c.l.b16 %v442
  %v482 = vunpack.c.l.b16 %v443
  %v483 = vunpack.c.l.b16 %v444
  %v484 = vunpack.c.l.b16 %v445
  %v485 = vunpack.c.l.b16 %v446
  %v486 = vunpack.c.l.b16 %v447
  %v487 = vunpack.c.l.b16 %v448
  %v488 = vunpack.c.l.b16 %v449
  %v489 = vpack.c.b16 %v474, %v473
  %v490 = vpack.c.b16 %v476, %v475
  %v491 = vpack.c.b16 %v478, %v477
  %v492 = vpack.c.b16 %v480, %v479
  %v493 = vpack.c.b16 %v482, %v481
  %v494 = vpack.c.b16 %v484, %v483
  %v495 = vpack.c.b16 %v486, %v485
  %v496 = vpack.c.b16 %v488, %v487
  %505 = vmatprep.subr.bf16.mxu0 0
  %506 = vmatpush1.bf16.msra.mxu0 %v496
  %507 = vmatprep.subr.bf16.mxu0 0
  %508 = vmatpush1.bf16.msra.mxu0 %v495
  %509 = vmatprep.subr.bf16.mxu0 0
  %510 = vmatpush1.bf16.msra.mxu0 %v494
  %511 = vmatprep.subr.bf16.mxu0 0
  %512 = vmatpush1.bf16.msra.mxu0 %v493
  %513 = vmatprep.subr.bf16.mxu0 0
  %514 = vmatpush1.bf16.msra.mxu0 %v492
  %515 = vmatprep.subr.bf16.mxu0 0
  %516 = vmatpush1.bf16.msra.mxu0 %v491
  %517 = vmatprep.subr.bf16.mxu0 0
  %518 = vmatpush1.bf16.msra.mxu0 %v490
  %519 = vmatprep.subr.bf16.mxu0 0
  %520 = vmatpush1.bf16.msra.mxu0 %v489
  %521 = vmatprep.subr.bf16.mxu0 0
  %522 = vmatpush2.bf16.msra.mxu0 0
  %523 = vmatprep.subr.bf16.mxu0 0
  %524 = vmatpush2.bf16.msra.mxu0 0
  %525 = vmatprep.subr.bf16.mxu0 0
  %526 = vmatpush2.bf16.msra.mxu0 0
  %527 = vmatprep.subr.bf16.mxu0 0
  %528 = vmatpush2.bf16.msra.mxu0 0
  %529 = vmatprep.subr.bf16.mxu0 0
  %530 = vmatpush2.bf16.msra.mxu0 0
  %531 = vmatprep.subr.bf16.mxu0 0
  %532 = vmatpush2.bf16.msra.mxu0 0
  %533 = vmatprep.subr.bf16.mxu0 0
  %534 = vmatpush2.bf16.msra.mxu0 0
  %535 = vmatprep.subr.bf16.mxu0 0
  %536 = vmatpush2.bf16.msra.mxu0 0
  %537 = vmatprep.mubr.bf16.mxu0 0
  %538 = vmatmul.mubr.bf16.gmra.mxu0 %v426
  %v539 = vpop.f32.mrf.mxu0
  %v540 = vadd.f32 %v455, %v539
  %v541 = vpop.f32.mrf.mxu0
  %v542 = vpop.f32.mrf.mxu0
  %v543 = vadd.f32 %v455, %v542
  %v544 = vpop.f32.mrf.mxu0
  %545 = vmatprep.mubr.bf16.mxu0 0
  %546 = vmatmul.mubr.bf16.gmra.mxu0 %v427
  %v547 = vpop.f32.mrf.mxu0
  %v548 = vadd.f32 %v455, %v547
  %v549 = vpop.f32.mrf.mxu0
  %v550 = vpop.f32.mrf.mxu0
  %v551 = vadd.f32 %v455, %v550
  %v552 = vpop.f32.mrf.mxu0
  %553 = vmatprep.mubr.bf16.mxu0 0
  %554 = vmatmul.mubr.bf16.gmra.mxu0 %v428
  %v555 = vpop.f32.mrf.mxu0
  %v556 = vadd.f32 %v455, %v555
  %v557 = vpop.f32.mrf.mxu0
  %v558 = vpop.f32.mrf.mxu0
  %v559 = vadd.f32 %v455, %v558
  %v560 = vpop.f32.mrf.mxu0
  %561 = vmatprep.mubr.bf16.mxu0 0
  %562 = vmatmul.mubr.bf16.gmra.mxu0 %v429
  %v563 = vpop.f32.mrf.mxu0
  %v564 = vadd.f32 %v455, %v563
  %v565 = vpop.f32.mrf.mxu0
  %v566 = vpop.f32.mrf.mxu0
  %v567 = vadd.f32 %v455, %v566
  %v568 = vpop.f32.mrf.mxu0
  %569 = vmatprep.mubr.bf16.mxu0 0
  %570 = vmatmul.mubr.bf16.gmra.mxu0 %v430
  %v571 = vpop.f32.mrf.mxu0
  %v572 = vadd.f32 %v455, %v571
  %v573 = vpop.f32.mrf.mxu0
  %v574 = vpop.f32.mrf.mxu0
  %v575 = vadd.f32 %v455, %v574
  %v576 = vpop.f32.mrf.mxu0
  %577 = vmatprep.mubr.bf16.mxu0 0
  %578 = vmatmul.mubr.bf16.gmra.mxu0 %v431
  %v579 = vpop.f32.mrf.mxu0
  %v580 = vadd.f32 %v455, %v579
  %v581 = vpop.f32.mrf.mxu0
  %v582 = vpop.f32.mrf.mxu0
  %v583 = vadd.f32 %v455, %v582
  %v584 = vpop.f32.mrf.mxu0
  %585 = vmatprep.mubr.bf16.mxu0 0
  %586 = vmatmul.mubr.bf16.gmra.mxu0 %v432
  %v587 = vpop.f32.mrf.mxu0
  %v588 = vadd.f32 %v455, %v587
  %v589 = vpop.f32.mrf.mxu0
  %v590 = vpop.f32.mrf.mxu0
  %v591 = vadd.f32 %v455, %v590
  %v592 = vpop.f32.mrf.mxu0
  %593 = vmatprep.mubr.bf16.mxu0 0
  %594 = vmatmul.mubr.bf16.gmra.mxu0 %v433
  %v595 = vpop.f32.mrf.mxu0
  %v596 = vadd.f32 %v455, %v595
  %v597 = vpop.f32.mrf.mxu0
  %v598 = vpop.f32.mrf.mxu0
  %v599 = vadd.f32 %v455, %v598
  %v600 = vpop.f32.mrf.mxu0
  %601 = vdwg.mxu0
  %v602 = vld [vmem:[%s7] sm:$0x1]
  %v603 = vld [vmem:[%s8] sm:$0x1]
  %604 = vadd.xlane.f32.xlu0 %v540
  %v605 = vpop.xlane.xlu0 %604
  %606 = vadd.xlane.f32.xlu0 %v543
  %v607 = vpop.xlane.xlu0 %606
  %608 = vadd.xlane.f32.xlu0 %v548
  %v609 = vpop.xlane.xlu0 %608
  %610 = vadd.xlane.f32.xlu0 %v551
  %v611 = vpop.xlane.xlu0 %610
  %612 = vadd.xlane.f32.xlu0 %v556
  %v613 = vpop.xlane.xlu0 %612
  %614 = vadd.xlane.f32.xlu0 %v559
  %v615 = vpop.xlane.xlu0 %614
  %616 = vadd.xlane.f32.xlu0 %v564
  %v617 = vpop.xlane.xlu0 %616
  %618 = vadd.xlane.f32.xlu0 %v567
  %v619 = vpop.xlane.xlu0 %618
  %620 = vadd.xlane.f32.xlu0 %v572
  %v621 = vpop.xlane.xlu0 %620
  %622 = vadd.xlane.f32.xlu0 %v575
  %v623 = vpop.xlane.xlu0 %622
  %624 = vadd.xlane.f32.xlu0 %v580
  %v625 = vpop.xlane.xlu0 %624
  %626 = vadd.xlane.f32.xlu0 %v583
  %v627 = vpop.xlane.xlu0 %626
  %628 = vadd.xlane.f32.xlu0 %v588
  %v629 = vpop.xlane.xlu0 %628
  %630 = vadd.xlane.f32.xlu0 %v591
  %v631 = vpop.xlane.xlu0 %630
  %632 = vadd.xlane.f32.xlu0 %v596
  %v633 = vpop.xlane.xlu0 %632
  %634 = vadd.xlane.f32.xlu0 %v599
  %v635 = vpop.xlane.xlu0 %634
  %v636 = vrcp.pop 128.0
  %v637 = vmul.f32 %v605, %v636
  %v638 = vmul.f32 %v607, %v636
  %v639 = vmul.f32 %v609, %v636
  %v640 = vmul.f32 %v611, %v636
  %v641 = vmul.f32 %v613, %v636
  %v642 = vmul.f32 %v615, %v636
  %v643 = vmul.f32 %v617, %v636
  %v644 = vmul.f32 %v619, %v636
  %v645 = vmul.f32 %v621, %v636
  %v646 = vmul.f32 %v623, %v636
  %v647 = vmul.f32 %v625, %v636
  %v648 = vmul.f32 %v627, %v636
  %v649 = vmul.f32 %v629, %v636
  %v650 = vmul.f32 %v631, %v636
  %v651 = vmul.f32 %v633, %v636
  %v652 = vmul.f32 %v635, %v636
  %v653 = vsub.f32 %v540, %v637
  %v654 = vsub.f32 %v543, %v638
  %v655 = vsub.f32 %v548, %v639
  %v656 = vsub.f32 %v551, %v640
  %v657 = vsub.f32 %v556, %v641
  %v658 = vsub.f32 %v559, %v642
  %v659 = vsub.f32 %v564, %v643
  %v660 = vsub.f32 %v567, %v644
  %v661 = vsub.f32 %v572, %v645
  %v662 = vsub.f32 %v575, %v646
  %v663 = vsub.f32 %v580, %v647
  %v664 = vsub.f32 %v583, %v648
  %v665 = vsub.f32 %v588, %v649
  %v666 = vsub.f32 %v591, %v650
  %v667 = vsub.f32 %v596, %v651
  %v668 = vsub.f32 %v599, %v652
  %v669 = vmul.f32 %v653, %v653
  %v670 = vmul.f32 %v654, %v654
  %v671 = vmul.f32 %v655, %v655
  %v672 = vmul.f32 %v656, %v656
  %v673 = vmul.f32 %v657, %v657
  %v674 = vmul.f32 %v658, %v658
  %v675 = vmul.f32 %v659, %v659
  %v676 = vmul.f32 %v660, %v660
  %v677 = vmul.f32 %v661, %v661
  %v678 = vmul.f32 %v662, %v662
  %v679 = vmul.f32 %v663, %v663
  %v680 = vmul.f32 %v664, %v664
  %v681 = vmul.f32 %v665, %v665
  %v682 = vmul.f32 %v666, %v666
  %v683 = vmul.f32 %v667, %v667
  %v684 = vmul.f32 %v668, %v668
  %685 = vadd.xlane.f32.xlu0 %v669
  %v686 = vpop.xlane.xlu0 %685
  %687 = vadd.xlane.f32.xlu0 %v670
  %v688 = vpop.xlane.xlu0 %687
  %689 = vadd.xlane.f32.xlu0 %v671
  %v690 = vpop.xlane.xlu0 %689
  %691 = vadd.xlane.f32.xlu0 %v672
  %v692 = vpop.xlane.xlu0 %691
  %693 = vadd.xlane.f32.xlu0 %v673
  %v694 = vpop.xlane.xlu0 %693
  %695 = vadd.xlane.f32.xlu0 %v674
  %v696 = vpop.xlane.xlu0 %695
  %697 = vadd.xlane.f32.xlu0 %v675
  %v698 = vpop.xlane.xlu0 %697
  %699 = vadd.xlane.f32.xlu0 %v676
  %v700 = vpop.xlane.xlu0 %699
  %701 = vadd.xlane.f32.xlu0 %v677
  %v702 = vpop.xlane.xlu0 %701
  %703 = vadd.xlane.f32.xlu0 %v678
  %v704 = vpop.xlane.xlu0 %703
  %705 = vadd.xlane.f32.xlu0 %v679
  %v706 = vpop.xlane.xlu0 %705
  %707 = vadd.xlane.f32.xlu0 %v680
  %v708 = vpop.xlane.xlu0 %707
  %709 = vadd.xlane.f32.xlu0 %v681
  %v710 = vpop.xlane.xlu0 %709
  %711 = vadd.xlane.f32.xlu0 %v682
  %v712 = vpop.xlane.xlu0 %711
  %713 = vadd.xlane.f32.xlu0 %v683
  %v714 = vpop.xlane.xlu0 %713
  %715 = vadd.xlane.f32.xlu0 %v684
  %v716 = vpop.xlane.xlu0 %715
  %v717 = vmul.f32 %v686, %v636
  %v718 = vmul.f32 %v688, %v636
  %v719 = vmul.f32 %v690, %v636
  %v720 = vmul.f32 %v692, %v636
  %v721 = vmul.f32 %v694, %v636
  %v722 = vmul.f32 %v696, %v636
  %v723 = vmul.f32 %v698, %v636
  %v724 = vmul.f32 %v700, %v636
  %v725 = vmul.f32 %v702, %v636
  %v726 = vmul.f32 %v704, %v636
  %v727 = vmul.f32 %v706, %v636
  %v728 = vmul.f32 %v708, %v636
  %v729 = vmul.f32 %v710, %v636
  %v730 = vmul.f32 %v712, %v636
  %v731 = vmul.f32 %v714, %v636
  %v732 = vmul.f32 %v716, %v636
  %v733 = vadd.f32 %v717, 1e-05
  %v734 = vadd.f32 %v718, 1e-05
  %v735 = vadd.f32 %v719, 1e-05
  %v736 = vadd.f32 %v720, 1e-05
  %v737 = vadd.f32 %v721, 1e-05
  %v738 = vadd.f32 %v722, 1e-05
  %v739 = vadd.f32 %v723, 1e-05
  %v740 = vadd.f32 %v724, 1e-05
  %v741 = vadd.f32 %v725, 1e-05
  %v742 = vadd.f32 %v726, 1e-05
  %v743 = vadd.f32 %v727, 1e-05
  %v744 = vadd.f32 %v728, 1e-05
  %v745 = vadd.f32 %v729, 1e-05
  %v746 = vadd.f32 %v730, 1e-05
  %v747 = vadd.f32 %v731, 1e-05
  %v748 = vadd.f32 %v732, 1e-05
  %v749 = vrsqrt.pop %v733
  %v750 = vrsqrt.pop %v734
  %v751 = vrsqrt.pop %v735
  %v752 = vrsqrt.pop %v736
  %v753 = vrsqrt.pop %v737
  %v754 = vrsqrt.pop %v738
  %v755 = vrsqrt.pop %v739
  %v756 = vrsqrt.pop %v740
  %v757 = vrsqrt.pop %v741
  %v758 = vrsqrt.pop %v742
  %v759 = vrsqrt.pop %v743
  %v760 = vrsqrt.pop %v744
  %v761 = vrsqrt.pop %v745
  %v762 = vrsqrt.pop %v746
  %v763 = vrsqrt.pop %v747
  %v764 = vrsqrt.pop %v748
  %v765 = vmul.f32 %v653, %v749
  %v766 = vmul.f32 %v654, %v750
  %v767 = vmul.f32 %v655, %v751
  %v768 = vmul.f32 %v656, %v752
  %v769 = vmul.f32 %v657, %v753
  %v770 = vmul.f32 %v658, %v754
  %v771 = vmul.f32 %v659, %v755
  %v772 = vmul.f32 %v660, %v756
  %v773 = vmul.f32 %v661, %v757
  %v774 = vmul.f32 %v662, %v758
  %v775 = vmul.f32 %v663, %v759
  %v776 = vmul.f32 %v664, %v760
  %v777 = vmul.f32 %v665, %v761
  %v778 = vmul.f32 %v666, %v762
  %v779 = vmul.f32 %v667, %v763
  %v780 = vmul.f32 %v668, %v764
  %v782 = vlaneseq
  %v783 = vshrl.u32 %v782, 7
  %v784 = vsub.s32 0, %v783
  %v785 = vrot.slane %v602, %v784
  %v787 = vmul.f32 %v765, %v785
  %v788 = vmul.f32 %v766, %v785
  %v789 = vmul.f32 %v767, %v785
  %v790 = vmul.f32 %v768, %v785
  %v791 = vmul.f32 %v769, %v785
  %v792 = vmul.f32 %v770, %v785
  %v793 = vmul.f32 %v771, %v785
  %v794 = vmul.f32 %v772, %v785
  %v795 = vmul.f32 %v773, %v785
  %v796 = vmul.f32 %v774, %v785
  %v797 = vmul.f32 %v775, %v785
  %v798 = vmul.f32 %v776, %v785
  %v799 = vmul.f32 %v777, %v785
  %v800 = vmul.f32 %v778, %v785
  %v801 = vmul.f32 %v779, %v785
  %v802 = vmul.f32 %v780, %v785
  %v804 = vlaneseq
  %v805 = vshrl.u32 %v804, 7
  %v806 = vsub.s32 0, %v805
  %v807 = vrot.slane %v603, %v806
  %v809 = vadd.f32 %v787, %v807
  %v810 = vadd.f32 %v788, %v807
  %v811 = vadd.f32 %v789, %v807
  %v812 = vadd.f32 %v790, %v807
  %v813 = vadd.f32 %v791, %v807
  %v814 = vadd.f32 %v792, %v807
  %v815 = vadd.f32 %v793, %v807
  %v816 = vadd.f32 %v794, %v807
  %v817 = vadd.f32 %v795, %v807
  %v818 = vadd.f32 %v796, %v807
  %v819 = vadd.f32 %v797, %v807
  %v820 = vadd.f32 %v798, %v807
  %v821 = vadd.f32 %v799, %v807
  %v822 = vadd.f32 %v800, %v807
  %v823 = vadd.f32 %v801, %v807
  %v824 = vadd.f32 %v802, %v807
  %v825 = vmax.f32 %v809, 0.0
  %v826 = vmax.f32 %v810, 0.0
  %v827 = vmax.f32 %v811, 0.0
  %v828 = vmax.f32 %v812, 0.0
  %v829 = vmax.f32 %v813, 0.0
  %v830 = vmax.f32 %v814, 0.0
  %v831 = vmax.f32 %v815, 0.0
  %v832 = vmax.f32 %v816, 0.0
  %v833 = vmax.f32 %v817, 0.0
  %v834 = vmax.f32 %v818, 0.0
  %v835 = vmax.f32 %v819, 0.0
  %v836 = vmax.f32 %v820, 0.0
  %v837 = vmax.f32 %v821, 0.0
  %v838 = vmax.f32 %v822, 0.0
  %v839 = vmax.f32 %v823, 0.0
  %v840 = vmax.f32 %v824, 0.0
  %841 = vst [vmem:[%s9] sm:$0xff] %v825
  %842 = vst [vmem:[%s9 + $0x8] sm:$0xff] %v826
  %843 = vst [vmem:[%s9 + $0x10] sm:$0xff] %v827
  %844 = vst [vmem:[%s9 + $0x18] sm:$0xff] %v828
  %845 = vst [vmem:[%s9 + $0x20] sm:$0xff] %v829
  %846 = vst [vmem:[%s9 + $0x28] sm:$0xff] %v830
  %847 = vst [vmem:[%s9 + $0x30] sm:$0xff] %v831
  %848 = vst [vmem:[%s9 + $0x38] sm:$0xff] %v832
  %849 = vst [vmem:[%s9 + $0x40] sm:$0xff] %v833
  %850 = vst [vmem:[%s9 + $0x48] sm:$0xff] %v834
  %851 = vst [vmem:[%s9 + $0x50] sm:$0xff] %v835
  %852 = vst [vmem:[%s9 + $0x58] sm:$0xff] %v836
  %853 = vst [vmem:[%s9 + $0x60] sm:$0xff] %v837
  %854 = vst [vmem:[%s9 + $0x68] sm:$0xff] %v838
  %855 = vst [vmem:[%s9 + $0x70] sm:$0xff] %v839
  %856 = vst [vmem:[%s9 + $0x78] sm:$0xff] %v840
  // Predicated region
  $region38: #{_lambda_.6} parent=0 // pred_check
    _
  $region39: #{_lambda_.6} parent=0 // pred_check_branch
    %858 = sbr.rel (0) target = $region41
  $region40: #{_lambda_.6} parent=0 // pred_region
    _
  $region41: #{_lambda_.6} parent=0 // pred_fallthru
    _
  // Predicated region
  $region42: #{_lambda_.6} parent=0 // pred_check
    _
  $region43: #{_lambda_.6} parent=0 // pred_check_branch
    %860 = sbr.rel (0) target = $region45
  $region44: #{_lambda_.6} parent=0 // pred_region
    _
  $region45: #{_lambda_.6} parent=0 // pred_fallthru
    _

// kernel: _lambda_.8
$region0: #{_lambda_.8}
  #allocation0 [shape = 'u32[]', space=smem, size = 0x4, offset = 0x4, fixed_abs, tag = 'smem constant byte address 0x4 - core index']
  #allocation1 [shape = 'u32[144,128]{1,0:T(1,128)}', space=vmem, size = 0x12000, scoped, tag = 'internal scratch']
  %s0 = inlined_call_operand.vmem [shape: f32[80,32], index: 0, kind: input, shape index: {}]
  %s1 = inlined_call_operand.vmem [shape: bf16[32,128], index: 1, kind: input, shape index: {}]
  %s2 = inlined_call_operand.vmem [shape: f32[1,128], index: 2, kind: input, shape index: {}]
  %s3 = inlined_call_operand.vmem [shape: f32[1,128], index: 3, kind: input, shape index: {}]
  %s4 = inlined_call_operand.vmem [shape: f32[1,128], index: 4, kind: input, shape index: {}]
  %s5 = inlined_call_operand.vmem [shape: f32[80,128], index: 5, kind: output, shape index: {}]
  %s6 = sld [smem:[#allocation0]]
  $region30: #{_lambda_.8} parent=0
    _
  %s8 = ssub.s32 1, %s6
  %s9 = scalar_select 0, %s8, %s6
  // Predicated region
  $region2: #{_lambda_.8} parent=0 // pred_check
    _
  $region3: #{_lambda_.8} parent=0 // pred_check_branch
    %11 = sbr.rel (0) target = $region5
  $region4: #{_lambda_.8} parent=0 // pred_region
    _
  $region5: #{_lambda_.8} parent=0 // pred_fallthru
    _
  // Predicated region
  $region6: #{_lambda_.8} parent=0 // pred_check
    _
  $region7: #{_lambda_.8} parent=0 // pred_check_branch
    %13 = sbr.rel (0) target = $region9
  $region8: #{_lambda_.8} parent=0 // pred_region
    _
  $region9: #{_lambda_.8} parent=0 // pred_fallthru
    _
  // Predicated region
  $region10: #{_lambda_.8} parent=0 // pred_check
    _
  $region11: #{_lambda_.8} parent=0 // pred_check_branch
    %15 = sbr.rel (0) target = $region13
  $region12: #{_lambda_.8} parent=0 // pred_region
    _
  $region13: #{_lambda_.8} parent=0 // pred_fallthru
    _
  // Predicated region
  $region14: #{_lambda_.8} parent=0 // pred_check
    _
  $region15: #{_lambda_.8} parent=0 // pred_check_branch
    %17 = sbr.rel (0) target = $region17
  $region16: #{_lambda_.8} parent=0 // pred_region
    _
  $region17: #{_lambda_.8} parent=0 // pred_fallthru
    _
  // Predicated region
  $region18: #{_lambda_.8} parent=0 // pred_check
    _
  $region19: #{_lambda_.8} parent=0 // pred_check_branch
    %19 = sbr.rel (0) target = $region21
  $region20: #{_lambda_.8} parent=0 // pred_region
    _
  $region21: #{_lambda_.8} parent=0 // pred_fallthru
    _
  %v21 = vld [vmem:[%s0] sm:$0xff]
  %v22 = vld [vmem:[%s0 + $0x8] sm:$0xff]
  %v23 = vld [vmem:[%s0 + $0x10] sm:$0xff]
  %v24 = vld [vmem:[%s0 + $0x18] sm:$0xff]
  %v25 = vld [vmem:[%s0 + $0x20] sm:$0xff]
  %v26 = vld [vmem:[%s0 + $0x28] sm:$0xff]
  %v27 = vld [vmem:[%s0 + $0x30] sm:$0xff]
  %v28 = vld [vmem:[%s0 + $0x38] sm:$0xff]
  %v29 = vld [vmem:[%s0 + $0x40] sm:$0xff]
  %v30 = vld [vmem:[%s0 + $0x48] sm:$0xff]
  %v31 = vpack.c.bf16 %v22, %v21
  %v32 = vpack.c.bf16 %v24, %v23
  %v33 = vpack.c.bf16 %v26, %v25
  %v34 = vpack.c.bf16 %v28, %v27
  %v35 = vpack.c.bf16 %v30, %v29
  %v36 = vld [vmem:[%s1] sm:$0xf]
  %v37 = vld [vmem:[%s1 + $0x4] sm:$0xf]
  %v38 = vld [vmem:[%s1 + $0x8] sm:$0xf]
  %v39 = vld [vmem:[%s1 + $0xc] sm:$0xf]
  %v40 = vld [vmem:[%s2] sm:$0x1]
  %v42 = vlaneseq
  %v43 = vshrl.u32 %v42, 7
  %v44 = vsub.s32 0, %v43
  %v45 = vrot.slane %v40, %v44
  %v51 = vunpack.c.l.b16 %v36
  %v52 = vunpack.c.l.b16 %v37
  %v53 = vunpack.c.l.b16 %v38
  %v54 = vunpack.c.l.b16 %v39
  %v55 = vpack.c.b16 %v52, %v51
  %v56 = vpack.c.b16 %v54, %v53
  %vm59 = vcmask 261120
  %v61 = vsel %vm59, %v31, 0
  %v64 = vsel %vm59, %v32, 0
  %v67 = vsel %vm59, %v33, 0
  %v70 = vsel %vm59, %v34, 0
  %v73 = vsel %vm59, %v35, 0
  %75 = vmatprep.subr.bf16.mxu0 0
  %76 = vmatpush1.bf16.msra.mxu0 0
  %77 = vmatprep.subr.bf16.mxu0 0
  %78 = vmatpush1.bf16.msra.mxu0 0
  %79 = vmatprep.subr.bf16.mxu0 0
  %80 = vmatpush1.bf16.msra.mxu0 0
  %81 = vmatprep.subr.bf16.mxu0 0
  %82 = vmatpush1.bf16.msra.mxu0 0
  %83 = vmatprep.subr.bf16.mxu0 0
  %84 = vmatpush1.bf16.msra.mxu0 0
  %85 = vmatprep.subr.bf16.mxu0 0
  %86 = vmatpush1.bf16.msra.mxu0 0
  %87 = vmatprep.subr.bf16.mxu0 0
  %88 = vmatpush1.bf16.msra.mxu0 %v56
  %89 = vmatprep.subr.bf16.mxu0 0
  %90 = vmatpush1.bf16.msra.mxu0 %v55
  %91 = vmatprep.subr.bf16.mxu0 0
  %92 = vmatpush2.bf16.msra.mxu0 0
  %93 = vmatprep.subr.bf16.mxu0 0
  %94 = vmatpush2.bf16.msra.mxu0 0
  %95 = vmatprep.subr.bf16.mxu0 0
  %96 = vmatpush2.bf16.msra.mxu0 0
  %97 = vmatprep.subr.bf16.mxu0 0
  %98 = vmatpush2.bf16.msra.mxu0 0
  %99 = vmatprep.subr.bf16.mxu0 0
  %100 = vmatpush2.bf16.msra.mxu0 0
  %101 = vmatprep.subr.bf16.mxu0 0
  %102 = vmatpush2.bf16.msra.mxu0 0
  %103 = vmatprep.subr.bf16.mxu0 0
  %104 = vmatpush2.bf16.msra.mxu0 0
  %105 = vmatprep.subr.bf16.mxu0 0
  %106 = vmatpush2.bf16.msra.mxu0 0
  %107 = vmatprep.mubr.bf16.mxu0 0
  %108 = vmatmul.mubr.bf16.gmra.mxu0 %v61
  %v109 = vpop.f32.mrf.mxu0
  %v110 = vadd.f32 %v45, %v109
  %v111 = vpop.f32.mrf.mxu0
  %v112 = vpop.f32.mrf.mxu0
  %v113 = vadd.f32 %v45, %v112
  %v114 = vpop.f32.mrf.mxu0
  %115 = vmatprep.mubr.bf16.mxu0 0
  %116 = vmatmul.mubr.bf16.gmra.mxu0 %v64
  %v117 = vpop.f32.mrf.mxu0
  %v118 = vadd.f32 %v45, %v117
  %v119 = vpop.f32.mrf.mxu0
  %v120 = vpop.f32.mrf.mxu0
  %v121 = vadd.f32 %v45, %v120
  %v122 = vpop.f32.mrf.mxu0
  %123 = vmatprep.mubr.bf16.mxu0 0
  %124 = vmatmul.mubr.bf16.gmra.mxu0 %v67
  %v125 = vpop.f32.mrf.mxu0
  %v126 = vadd.f32 %v45, %v125
  %v127 = vpop.f32.mrf.mxu0
  %v128 = vpop.f32.mrf.mxu0
  %v129 = vadd.f32 %v45, %v128
  %v130 = vpop.f32.mrf.mxu0
  %131 = vmatprep.mubr.bf16.mxu0 0
  %132 = vmatmul.mubr.bf16.gmra.mxu0 %v70
  %v133 = vpop.f32.mrf.mxu0
  %v134 = vadd.f32 %v45, %v133
  %v135 = vpop.f32.mrf.mxu0
  %v136 = vpop.f32.mrf.mxu0
  %v137 = vadd.f32 %v45, %v136
  %v138 = vpop.f32.mrf.mxu0
  %139 = vmatprep.mubr.bf16.mxu0 0
  %140 = vmatmul.mubr.bf16.gmra.mxu0 %v73
  %v141 = vpop.f32.mrf.mxu0
  %v142 = vadd.f32 %v45, %v141
  %v143 = vpop.f32.mrf.mxu0
  %v144 = vpop.f32.mrf.mxu0
  %v145 = vadd.f32 %v45, %v144
  %v146 = vpop.f32.mrf.mxu0
  %147 = vdwg.mxu0
  %v148 = vld [vmem:[%s3] sm:$0x1]
  %v149 = vld [vmem:[%s4] sm:$0x1]
  %150 = vadd.xlane.f32.xlu0 %v110
  %v151 = vpop.xlane.xlu0 %150
  %152 = vadd.xlane.f32.xlu0 %v113
  %v153 = vpop.xlane.xlu0 %152
  %154 = vadd.xlane.f32.xlu0 %v118
  %v155 = vpop.xlane.xlu0 %154
  %156 = vadd.xlane.f32.xlu0 %v121
  %v157 = vpop.xlane.xlu0 %156
  %158 = vadd.xlane.f32.xlu0 %v126
  %v159 = vpop.xlane.xlu0 %158
  %160 = vadd.xlane.f32.xlu0 %v129
  %v161 = vpop.xlane.xlu0 %160
  %162 = vadd.xlane.f32.xlu0 %v134
  %v163 = vpop.xlane.xlu0 %162
  %164 = vadd.xlane.f32.xlu0 %v137
  %v165 = vpop.xlane.xlu0 %164
  %166 = vadd.xlane.f32.xlu0 %v142
  %v167 = vpop.xlane.xlu0 %166
  %168 = vadd.xlane.f32.xlu0 %v145
  %v169 = vpop.xlane.xlu0 %168
  %v170 = vrcp.pop 128.0
  %v171 = vmul.f32 %v151, %v170
  %v172 = vmul.f32 %v153, %v170
  %v173 = vmul.f32 %v155, %v170
  %v174 = vmul.f32 %v157, %v170
  %v175 = vmul.f32 %v159, %v170
  %v176 = vmul.f32 %v161, %v170
  %v177 = vmul.f32 %v163, %v170
  %v178 = vmul.f32 %v165, %v170
  %v179 = vmul.f32 %v167, %v170
  %v180 = vmul.f32 %v169, %v170
  %v181 = vsub.f32 %v110, %v171
  %v182 = vsub.f32 %v113, %v172
  %v183 = vsub.f32 %v118, %v173
  %v184 = vsub.f32 %v121, %v174
  %v185 = vsub.f32 %v126, %v175
  %v186 = vsub.f32 %v129, %v176
  %v187 = vsub.f32 %v134, %v177
  %v188 = vsub.f32 %v137, %v178
  %v189 = vsub.f32 %v142, %v179
  %v190 = vsub.f32 %v145, %v180
  %v191 = vmul.f32 %v181, %v181
  %v192 = vmul.f32 %v182, %v182
  %v193 = vmul.f32 %v183, %v183
  %v194 = vmul.f32 %v184, %v184
  %v195 = vmul.f32 %v185, %v185
  %v196 = vmul.f32 %v186, %v186
  %v197 = vmul.f32 %v187, %v187
  %v198 = vmul.f32 %v188, %v188
  %v199 = vmul.f32 %v189, %v189
  %v200 = vmul.f32 %v190, %v190
  %201 = vadd.xlane.f32.xlu0 %v191
  %v202 = vpop.xlane.xlu0 %201
  %203 = vadd.xlane.f32.xlu0 %v192
  %v204 = vpop.xlane.xlu0 %203
  %205 = vadd.xlane.f32.xlu0 %v193
  %v206 = vpop.xlane.xlu0 %205
  %207 = vadd.xlane.f32.xlu0 %v194
  %v208 = vpop.xlane.xlu0 %207
  %209 = vadd.xlane.f32.xlu0 %v195
  %v210 = vpop.xlane.xlu0 %209
  %211 = vadd.xlane.f32.xlu0 %v196
  %v212 = vpop.xlane.xlu0 %211
  %213 = vadd.xlane.f32.xlu0 %v197
  %v214 = vpop.xlane.xlu0 %213
  %215 = vadd.xlane.f32.xlu0 %v198
  %v216 = vpop.xlane.xlu0 %215
  %217 = vadd.xlane.f32.xlu0 %v199
  %v218 = vpop.xlane.xlu0 %217
  %219 = vadd.xlane.f32.xlu0 %v200
  %v220 = vpop.xlane.xlu0 %219
  %v221 = vmul.f32 %v202, %v170
  %v222 = vmul.f32 %v204, %v170
  %v223 = vmul.f32 %v206, %v170
  %v224 = vmul.f32 %v208, %v170
  %v225 = vmul.f32 %v210, %v170
  %v226 = vmul.f32 %v212, %v170
  %v227 = vmul.f32 %v214, %v170
  %v228 = vmul.f32 %v216, %v170
  %v229 = vmul.f32 %v218, %v170
  %v230 = vmul.f32 %v220, %v170
  %v231 = vadd.f32 %v221, 1e-05
  %v232 = vadd.f32 %v222, 1e-05
  %v233 = vadd.f32 %v223, 1e-05
  %v234 = vadd.f32 %v224, 1e-05
  %v235 = vadd.f32 %v225, 1e-05
  %v236 = vadd.f32 %v226, 1e-05
  %v237 = vadd.f32 %v227, 1e-05
  %v238 = vadd.f32 %v228, 1e-05
  %v239 = vadd.f32 %v229, 1e-05
  %v240 = vadd.f32 %v230, 1e-05
  %v241 = vrsqrt.pop %v231
  %v242 = vrsqrt.pop %v232
  %v243 = vrsqrt.pop %v233
  %v244 = vrsqrt.pop %v234
  %v245 = vrsqrt.pop %v235
  %v246 = vrsqrt.pop %v236
  %v247 = vrsqrt.pop %v237
  %v248 = vrsqrt.pop %v238
  %v249 = vrsqrt.pop %v239
  %v250 = vrsqrt.pop %v240
  %v251 = vmul.f32 %v181, %v241
  %v252 = vmul.f32 %v182, %v242
  %v253 = vmul.f32 %v183, %v243
  %v254 = vmul.f32 %v184, %v244
  %v255 = vmul.f32 %v185, %v245
  %v256 = vmul.f32 %v186, %v246
  %v257 = vmul.f32 %v187, %v247
  %v258 = vmul.f32 %v188, %v248
  %v259 = vmul.f32 %v189, %v249
  %v260 = vmul.f32 %v190, %v250
  %v262 = vlaneseq
  %v263 = vshrl.u32 %v262, 7
  %v264 = vsub.s32 0, %v263
  %v265 = vrot.slane %v148, %v264
  %v267 = vmul.f32 %v251, %v265
  %v268 = vmul.f32 %v252, %v265
  %v269 = vmul.f32 %v253, %v265
  %v270 = vmul.f32 %v254, %v265
  %v271 = vmul.f32 %v255, %v265
  %v272 = vmul.f32 %v256, %v265
  %v273 = vmul.f32 %v257, %v265
  %v274 = vmul.f32 %v258, %v265
  %v275 = vmul.f32 %v259, %v265
  %v276 = vmul.f32 %v260, %v265
  %v278 = vlaneseq
  %v279 = vshrl.u32 %v278, 7
  %v280 = vsub.s32 0, %v279
  %v281 = vrot.slane %v149, %v280
  %v283 = vadd.f32 %v267, %v281
  %v284 = vadd.f32 %v268, %v281
  %v285 = vadd.f32 %v269, %v281
  %v286 = vadd.f32 %v270, %v281
  %v287 = vadd.f32 %v271, %v281
  %v288 = vadd.f32 %v272, %v281
  %v289 = vadd.f32 %v273, %v281
  %v290 = vadd.f32 %v274, %v281
  %v291 = vadd.f32 %v275, %v281
  %v292 = vadd.f32 %v276, %v281
  %v293 = vmax.f32 %v283, 0.0
  %v294 = vmax.f32 %v284, 0.0
  %v295 = vmax.f32 %v285, 0.0
  %v296 = vmax.f32 %v286, 0.0
  %v297 = vmax.f32 %v287, 0.0
  %v298 = vmax.f32 %v288, 0.0
  %v299 = vmax.f32 %v289, 0.0
  %v300 = vmax.f32 %v290, 0.0
  %v301 = vmax.f32 %v291, 0.0
  %v302 = vmax.f32 %v292, 0.0
  %303 = vst [vmem:[%s5] sm:$0xff] %v293
  %304 = vst [vmem:[%s5 + $0x8] sm:$0xff] %v294
  %305 = vst [vmem:[%s5 + $0x10] sm:$0xff] %v295
  %306 = vst [vmem:[%s5 + $0x18] sm:$0xff] %v296
  %307 = vst [vmem:[%s5 + $0x20] sm:$0xff] %v297
  %308 = vst [vmem:[%s5 + $0x28] sm:$0xff] %v298
  %309 = vst [vmem:[%s5 + $0x30] sm:$0xff] %v299
  %310 = vst [vmem:[%s5 + $0x38] sm:$0xff] %v300
  %311 = vst [vmem:[%s5 + $0x40] sm:$0xff] %v301
  %312 = vst [vmem:[%s5 + $0x48] sm:$0xff] %v302
  // Predicated region
  $region22: #{_lambda_.8} parent=0 // pred_check
    _
  $region23: #{_lambda_.8} parent=0 // pred_check_branch
    %314 = sbr.rel (0) target = $region25
  $region24: #{_lambda_.8} parent=0 // pred_region
    _
  $region25: #{_lambda_.8} parent=0 // pred_fallthru
    _
  // Predicated region
  $region26: #{_lambda_.8} parent=0 // pred_check
    _
  $region27: #{_lambda_.8} parent=0 // pred_check_branch
    %316 = sbr.rel (0) target = $region29
  $region28: #{_lambda_.8} parent=0 // pred_region
    _
  $region29: #{_lambda_.8} parent=0 // pred_fallthru
    _

// kernel: _lambda_.7
$region0: #{_lambda_.7}
  #allocation0 [shape = 'u32[]', space=smem, size = 0x4, offset = 0x4, fixed_abs, tag = 'smem constant byte address 0x4 - core index']
  #allocation1 [shape = 'u32[144,128]{1,0:T(1,128)}', space=vmem, size = 0x12000, scoped, tag = 'internal scratch']
  %s0 = inlined_call_operand.vmem [shape: f32[16,96], index: 0, kind: input, shape index: {}]
  %s1 = inlined_call_operand.vmem [shape: bf16[96,128], index: 1, kind: input, shape index: {}]
  %s2 = inlined_call_operand.vmem [shape: f32[1,128], index: 2, kind: input, shape index: {}]
  %s3 = inlined_call_operand.vmem [shape: f32[1,128], index: 3, kind: input, shape index: {}]
  %s4 = inlined_call_operand.vmem [shape: f32[1,128], index: 4, kind: input, shape index: {}]
  %s5 = inlined_call_operand.vmem [shape: f32[16,128], index: 5, kind: output, shape index: {}]
  %s6 = sld [smem:[#allocation0]]
  $region30: #{_lambda_.7} parent=0
    _
  %s8 = ssub.s32 1, %s6
  %s9 = scalar_select 0, %s8, %s6
  // Predicated region
  $region2: #{_lambda_.7} parent=0 // pred_check
    _
  $region3: #{_lambda_.7} parent=0 // pred_check_branch
    %11 = sbr.rel (0) target = $region5
  $region4: #{_lambda_.7} parent=0 // pred_region
    _
  $region5: #{_lambda_.7} parent=0 // pred_fallthru
    _
  // Predicated region
  $region6: #{_lambda_.7} parent=0 // pred_check
    _
  $region7: #{_lambda_.7} parent=0 // pred_check_branch
    %13 = sbr.rel (0) target = $region9
  $region8: #{_lambda_.7} parent=0 // pred_region
    _
  $region9: #{_lambda_.7} parent=0 // pred_fallthru
    _
  // Predicated region
  $region10: #{_lambda_.7} parent=0 // pred_check
    _
  $region11: #{_lambda_.7} parent=0 // pred_check_branch
    %15 = sbr.rel (0) target = $region13
  $region12: #{_lambda_.7} parent=0 // pred_region
    _
  $region13: #{_lambda_.7} parent=0 // pred_fallthru
    _
  // Predicated region
  $region14: #{_lambda_.7} parent=0 // pred_check
    _
  $region15: #{_lambda_.7} parent=0 // pred_check_branch
    %17 = sbr.rel (0) target = $region17
  $region16: #{_lambda_.7} parent=0 // pred_region
    _
  $region17: #{_lambda_.7} parent=0 // pred_fallthru
    _
  // Predicated region
  $region18: #{_lambda_.7} parent=0 // pred_check
    _
  $region19: #{_lambda_.7} parent=0 // pred_check_branch
    %19 = sbr.rel (0) target = $region21
  $region20: #{_lambda_.7} parent=0 // pred_region
    _
  $region21: #{_lambda_.7} parent=0 // pred_fallthru
    _
  %v21 = vld [vmem:[%s0] sm:$0xff]
  %v22 = vld [vmem:[%s0 + $0x8] sm:$0xff]
  %v23 = vpack.c.bf16 %v22, %v21
  %v24 = vld [vmem:[%s1] sm:$0xf]
  %v25 = vld [vmem:[%s1 + $0x4] sm:$0xf]
  %v26 = vld [vmem:[%s1 + $0x8] sm:$0xf]
  %v27 = vld [vmem:[%s1 + $0xc] sm:$0xf]
  %v28 = vld [vmem:[%s1 + $0x10] sm:$0xf]
  %v29 = vld [vmem:[%s1 + $0x14] sm:$0xf]
  %v30 = vld [vmem:[%s1 + $0x18] sm:$0xf]
  %v31 = vld [vmem:[%s1 + $0x1c] sm:$0xf]
  %v32 = vld [vmem:[%s1 + $0x20] sm:$0xf]
  %v33 = vld [vmem:[%s1 + $0x24] sm:$0xf]
  %v34 = vld [vmem:[%s1 + $0x28] sm:$0xf]
  %v35 = vld [vmem:[%s1 + $0x2c] sm:$0xf]
  %v36 = vld [vmem:[%s2] sm:$0x1]
  %v38 = vlaneseq
  %v39 = vshrl.u32 %v38, 7
  %v40 = vsub.s32 0, %v39
  %v41 = vrot.slane %v36, %v40
  %v55 = vunpack.c.l.b16 %v24
  %v56 = vunpack.c.l.b16 %v25
  %v57 = vunpack.c.l.b16 %v26
  %v58 = vunpack.c.l.b16 %v27
  %v59 = vunpack.c.l.b16 %v28
  %v60 = vunpack.c.l.b16 %v29
  %v61 = vunpack.c.l.b16 %v30
  %v62 = vunpack.c.l.b16 %v31
  %v63 = vunpack.c.l.b16 %v32
  %v64 = vunpack.c.l.b16 %v33
  %v65 = vunpack.c.l.b16 %v34
  %v66 = vunpack.c.l.b16 %v35
  %v67 = vpack.c.b16 %v56, %v55
  %v68 = vpack.c.b16 %v58, %v57
  %v69 = vpack.c.b16 %v60, %v59
  %v70 = vpack.c.b16 %v62, %v61
  %v71 = vpack.c.b16 %v64, %v63
  %v72 = vpack.c.b16 %v66, %v65
  %vm79 = vcmask 785408
  %v81 = vsel %vm79, %v23, 0
  %83 = vmatprep.subr.bf16.mxu0 0
  %84 = vmatpush1.bf16.msra.mxu0 0
  %85 = vmatprep.subr.bf16.mxu0 0
  %86 = vmatpush1.bf16.msra.mxu0 0
  %87 = vmatprep.subr.bf16.mxu0 0
  %88 = vmatpush1.bf16.msra.mxu0 %v72
  %89 = vmatprep.subr.bf16.mxu0 0
  %90 = vmatpush1.bf16.msra.mxu0 %v71
  %91 = vmatprep.subr.bf16.mxu0 0
  %92 = vmatpush1.bf16.msra.mxu0 %v70
  %93 = vmatprep.subr.bf16.mxu0 0
  %94 = vmatpush1.bf16.msra.mxu0 %v69
  %95 = vmatprep.subr.bf16.mxu0 0
  %96 = vmatpush1.bf16.msra.mxu0 %v68
  %97 = vmatprep.subr.bf16.mxu0 0
  %98 = vmatpush1.bf16.msra.mxu0 %v67
  %99 = vmatprep.subr.bf16.mxu0 0
  %100 = vmatpush2.bf16.msra.mxu0 0
  %101 = vmatprep.subr.bf16.mxu0 0
  %102 = vmatpush2.bf16.msra.mxu0 0
  %103 = vmatprep.subr.bf16.mxu0 0
  %104 = vmatpush2.bf16.msra.mxu0 0
  %105 = vmatprep.subr.bf16.mxu0 0
  %106 = vmatpush2.bf16.msra.mxu0 0
  %107 = vmatprep.subr.bf16.mxu0 0
  %108 = vmatpush2.bf16.msra.mxu0 0
  %109 = vmatprep.subr.bf16.mxu0 0
  %110 = vmatpush2.bf16.msra.mxu0 0
  %111 = vmatprep.subr.bf16.mxu0 0
  %112 = vmatpush2.bf16.msra.mxu0 0
  %113 = vmatprep.subr.bf16.mxu0 0
  %114 = vmatpush2.bf16.msra.mxu0 0
  %115 = vmatprep.mubr.bf16.mxu0 0
  %116 = vmatmul.mubr.bf16.gmra.mxu0 %v81
  %v117 = vpop.f32.mrf.mxu0
  %v118 = vadd.f32 %v41, %v117
  %v119 = vpop.f32.mrf.mxu0
  %v120 = vpop.f32.mrf.mxu0
  %v121 = vadd.f32 %v41, %v120
  %v122 = vpop.f32.mrf.mxu0
  %123 = vdwg.mxu0
  %v124 = vld [vmem:[%s3] sm:$0x1]
  %v125 = vld [vmem:[%s4] sm:$0x1]
  %126 = vadd.xlane.f32.xlu0 %v118
  %v127 = vpop.xlane.xlu0 %126
  %128 = vadd.xlane.f32.xlu0 %v121
  %v129 = vpop.xlane.xlu0 %128
  %v130 = vrcp.pop 128.0
  %v131 = vmul.f32 %v127, %v130
  %v132 = vmul.f32 %v129, %v130
  %v133 = vsub.f32 %v118, %v131
  %v134 = vsub.f32 %v121, %v132
  %v135 = vmul.f32 %v133, %v133
  %v136 = vmul.f32 %v134, %v134
  %137 = vadd.xlane.f32.xlu0 %v135
  %v138 = vpop.xlane.xlu0 %137
  %139 = vadd.xlane.f32.xlu0 %v136
  %v140 = vpop.xlane.xlu0 %139
  %v141 = vmul.f32 %v138, %v130
  %v142 = vmul.f32 %v140, %v130
  %v143 = vadd.f32 %v141, 1e-05
  %v144 = vadd.f32 %v142, 1e-05
  %v145 = vrsqrt.pop %v143
  %v146 = vrsqrt.pop %v144
  %v147 = vmul.f32 %v133, %v145
  %v148 = vmul.f32 %v134, %v146
  %v150 = vlaneseq
  %v151 = vshrl.u32 %v150, 7
  %v152 = vsub.s32 0, %v151
  %v153 = vrot.slane %v124, %v152
  %v155 = vmul.f32 %v147, %v153
  %v156 = vmul.f32 %v148, %v153
  %v158 = vlaneseq
  %v159 = vshrl.u32 %v158, 7
  %v160 = vsub.s32 0, %v159
  %v161 = vrot.slane %v125, %v160
  %v163 = vadd.f32 %v155, %v161
  %v164 = vadd.f32 %v156, %v161
  %v165 = vmax.f32 %v163, 0.0
  %v166 = vmax.f32 %v164, 0.0
  %167 = vst [vmem:[%s5] sm:$0xff] %v165
  %168 = vst [vmem:[%s5 + $0x8] sm:$0xff] %v166
  // Predicated region
  $region22: #{_lambda_.7} parent=0 // pred_check
    _
  $region23: #{_lambda_.7} parent=0 // pred_check_branch
    %170 = sbr.rel (0) target = $region25
  $region24: #{_lambda_.7} parent=0 // pred_region
    _
  $region25: #{_lambda_.7} parent=0 // pred_fallthru
    _
  // Predicated region
  $region26: #{_lambda_.7} parent=0 // pred_check
    _
  $region27: #{_lambda_.7} parent=0 // pred_check_branch
    %172 = sbr.rel (0) target = $region29
  $region28: #{_lambda_.7} parent=0 // pred_region
    _
  $region29: #{_lambda_.7} parent=0 // pred_fallthru
    _

// kernel: _lambda_.9
$region0: #{_lambda_.9}
  #allocation0 [shape = 'u32[]', space=smem, size = 0x4, offset = 0x4, fixed_abs, tag = 'smem constant byte address 0x4 - core index']
  #allocation1 [shape = 'u32[144,128]{1,0:T(1,128)}', space=vmem, size = 0x12000, scoped, tag = 'internal scratch']
  %s0 = inlined_call_operand.vmem [shape: f32[4,64,128], index: 0, kind: input, shape index: {}]
  %s1 = inlined_call_operand.vmem [shape: bf16[128,384], index: 1, kind: input, shape index: {}]
  %s2 = inlined_call_operand.vmem [shape: f32[1,384], index: 2, kind: input, shape index: {}]
  %s3 = inlined_call_operand.vmem [shape: bf16[128,128], index: 3, kind: input, shape index: {}]
  %s4 = inlined_call_operand.vmem [shape: f32[1,128], index: 4, kind: input, shape index: {}]
  %s5 = inlined_call_operand.vmem [shape: f32[1,128], index: 5, kind: input, shape index: {}]
  %s6 = inlined_call_operand.vmem [shape: f32[1,128], index: 6, kind: input, shape index: {}]
  %s7 = inlined_call_operand.vmem [shape: bf16[128,256], index: 7, kind: input, shape index: {}]
  %s8 = inlined_call_operand.vmem [shape: f32[1,256], index: 8, kind: input, shape index: {}]
  %s9 = inlined_call_operand.vmem [shape: bf16[256,128], index: 9, kind: input, shape index: {}]
  %s10 = inlined_call_operand.vmem [shape: f32[1,128], index: 10, kind: input, shape index: {}]
  %s11 = inlined_call_operand.vmem [shape: f32[1,128], index: 11, kind: input, shape index: {}]
  %s12 = inlined_call_operand.vmem [shape: f32[1,128], index: 12, kind: input, shape index: {}]
  %s13 = inlined_call_operand.vmem [shape: f32[4,64,128], index: 13, kind: output, shape index: {}]
  %s14 = sld [smem:[#allocation0]]
  $region85: #{_lambda_.9} parent=0
    _
  %s16 = ssub.s32 1, %s14
  %s17 = scalar_select 0, %s16, %s14
  loop: start=0, step=1, limit=6
  $region2: #{_lambda_.9} parent=0 // loop_pre_header
    _
  $region3: #{_lambda_.9} parent=0 // loop_header
    %s19 = sphi 0, %s23
    %p20 = scmp.ge.s32.totalorder %s19, 6
    %s29 = sphi 0, %s31
    %s32 = sphi 0, %s29
    %s33 = sphi 0, %s32
    %s49 = sphi 0, %s33
    %s53 = sphi 0, %s53
    %s55 = sphi 0, %s53
    %s56 = sphi 0, %s55
    %s70 = sphi 0, %s56
    %s74 = sphi 0, %s74
    %s76 = sphi 0, %s74
    %s77 = sphi 0, %s76
    %s91 = sphi 0, %s77
    %s95 = sphi 0, %s95
    %s97 = sphi 0, %s95
    %s98 = sphi 0, %s97
    %s112 = sphi 0, %s98
    %s116 = sphi 0, %s116
    %s118 = sphi 0, %s116
    %s119 = sphi 0, %s118
    %s133 = sphi 0, %s119
    %s137 = sphi 0, %s137
    %s139 = sphi 0, %s137
    %s140 = sphi 0, %s139
    %s154 = sphi 0, %s140
    %s158 = sphi 0, %s158
    %s160 = sphi 0, %s158
    %s161 = sphi 0, %s160
    %s175 = sphi 0, %s161
    %s179 = sphi 0, %s179
    %s181 = sphi 0, %s179
    %s182 = sphi 0, %s181
    %s196 = sphi 0, %s182
    %s200 = sphi 0, %s200
    %s202 = sphi 0, %s200
    %s203 = sphi 0, %s202
    %s217 = sphi 0, %s203
    %s221 = sphi 0, %s221
    %s223 = sphi 0, %s221
    %s224 = sphi 0, %s223
    %s238 = sphi 0, %s224
    %s242 = sphi 0, %s242
    %s244 = sphi 0, %s242
    %s245 = sphi 0, %s244
    %s259 = sphi 0, %s245
    %s263 = sphi 0, %s263
    %s265 = sphi 0, %s263
    %s266 = sphi 0, %s265
    %s280 = sphi 0, %s266
    %s284 = sphi 0, %s284
    %s286 = sphi 0, %s284
    %s287 = sphi 0, %s286
    %s301 = sphi 0, %s287
    %s307 = sphi 0, %s309
    %s310 = sphi 0, %s307
    %s311 = sphi 0, %s310
    %s327 = sphi 0, %s311
  $region4: #{_lambda_.9} parent=0 // loop_header_branch
    %22 = sbr.rel (%p20) target = $region8
  $region5: #{_lambda_.9} parent=0 // loop_body
    %s24 = ssub.s32 %s19, 1
    %s25 = ssub.s32 %s19, 2
    %s26 = sadd.s32 %s19, 1
    %s27 = ssub.s32 %s19, %s26
    %p28 = scmp.eq.s32.totalorder %s27, 0
    %s30 = sadd.s32 %s29, 1
    %s31 = scalar_select %p28, %s29, %s30
    %p34 = pneg %p28
    %p35 = scmp.eq.s32.totalorder %s19, 3
    %p36 = por %p34, %p35
    %p37 = scmp.ne.s32.totalorder %s29, %s32
    %p38 = scmp.eq.s32.totalorder %s19, 0
    %p39 = por %p37, %p38
    %p40 = scmp.ne.s32.totalorder %s29, %s32
    %p41 = scmp.eq.s32.totalorder %s24, 3
    %p42 = por %p40, %p41
    %p43 = scmp.ne.s32.totalorder %s32, %s33
    %p44 = scmp.eq.s32.totalorder %s24, 0
    %p45 = por %p43, %p44
    %p46 = scmp.ne.s32.totalorder %s32, %s33
    %p47 = scmp.eq.s32.totalorder %s25, 3
    %p48 = por %p46, %p47
    %p50 = scmp.ne.s32.totalorder %s33, %s49
    %p51 = scmp.eq.s32.totalorder %s25, 0
    %p52 = por %p50, %p51
    %s54 = sadd.s32 %s53, 1
    %p57 = scmp.eq.s32.totalorder %s19, 3
    %p58 = scmp.ne.s32.totalorder %s53, %s55
    %p59 = scmp.eq.s32.totalorder %s19, 0
    %p60 = por %p58, %p59
    %p61 = scmp.ne.s32.totalorder %s53, %s55
    %p62 = scmp.eq.s32.totalorder %s24, 3
    %p63 = por %p61, %p62
    %p64 = scmp.ne.s32.totalorder %s55, %s56
    %p65 = scmp.eq.s32.totalorder %s24, 0
    %p66 = por %p64, %p65
    %p67 = scmp.ne.s32.totalorder %s55, %s56
    %p68 = scmp.eq.s32.totalorder %s25, 3
    %p69 = por %p67, %p68
    %p71 = scmp.ne.s32.totalorder %s56, %s70
    %p72 = scmp.eq.s32.totalorder %s25, 0
    %p73 = por %p71, %p72
    %s75 = sadd.s32 %s74, 1
    %p78 = scmp.eq.s32.totalorder %s19, 3
    %p79 = scmp.ne.s32.totalorder %s74, %s76
    %p80 = scmp.eq.s32.totalorder %s19, 0
    %p81 = por %p79, %p80
    %p82 = scmp.ne.s32.totalorder %s74, %s76
    %p83 = scmp.eq.s32.totalorder %s24, 3
    %p84 = por %p82, %p83
    %p85 = scmp.ne.s32.totalorder %s76, %s77
    %p86 = scmp.eq.s32.totalorder %s24, 0
    %p87 = por %p85, %p86
    %p88 = scmp.ne.s32.totalorder %s76, %s77
    %p89 = scmp.eq.s32.totalorder %s25, 3
    %p90 = por %p88, %p89
    %p92 = scmp.ne.s32.totalorder %s77, %s91
    %p93 = scmp.eq.s32.totalorder %s25, 0
    %p94 = por %p92, %p93
    %s96 = sadd.s32 %s95, 1
    %p99 = scmp.eq.s32.totalorder %s19, 3
    %p100 = scmp.ne.s32.totalorder %s95, %s97
    %p101 = scmp.eq.s32.totalorder %s19, 0
    %p102 = por %p100, %p101
    %p103 = scmp.ne.s32.totalorder %s95, %s97
    %p104 = scmp.eq.s32.totalorder %s24, 3
    %p105 = por %p103, %p104
    %p106 = scmp.ne.s32.totalorder %s97, %s98
    %p107 = scmp.eq.s32.totalorder %s24, 0
    %p108 = por %p106, %p107
    %p109 = scmp.ne.s32.totalorder %s97, %s98
    %p110 = scmp.eq.s32.totalorder %s25, 3
    %p111 = por %p109, %p110
    %p113 = scmp.ne.s32.totalorder %s98, %s112
    %p114 = scmp.eq.s32.totalorder %s25, 0
    %p115 = por %p113, %p114
    %s117 = sadd.s32 %s116, 1
    %p120 = scmp.eq.s32.totalorder %s19, 3
    %p121 = scmp.ne.s32.totalorder %s116, %s118
    %p122 = scmp.eq.s32.totalorder %s19, 0
    %p123 = por %p121, %p122
    %p124 = scmp.ne.s32.totalorder %s116, %s118
    %p125 = scmp.eq.s32.totalorder %s24, 3
    %p126 = por %p124, %p125
    %p127 = scmp.ne.s32.totalorder %s118, %s119
    %p128 = scmp.eq.s32.totalorder %s24, 0
    %p129 = por %p127, %p128
    %p130 = scmp.ne.s32.totalorder %s118, %s119
    %p131 = scmp.eq.s32.totalorder %s25, 3
    %p132 = por %p130, %p131
    %p134 = scmp.ne.s32.totalorder %s119, %s133
    %p135 = scmp.eq.s32.totalorder %s25, 0
    %p136 = por %p134, %p135
    %s138 = sadd.s32 %s137, 1
    %p141 = scmp.eq.s32.totalorder %s19, 3
    %p142 = scmp.ne.s32.totalorder %s137, %s139
    %p143 = scmp.eq.s32.totalorder %s19, 0
    %p144 = por %p142, %p143
    %p145 = scmp.ne.s32.totalorder %s137, %s139
    %p146 = scmp.eq.s32.totalorder %s24, 3
    %p147 = por %p145, %p146
    %p148 = scmp.ne.s32.totalorder %s139, %s140
    %p149 = scmp.eq.s32.totalorder %s24, 0
    %p150 = por %p148, %p149
    %p151 = scmp.ne.s32.totalorder %s139, %s140
    %p152 = scmp.eq.s32.totalorder %s25, 3
    %p153 = por %p151, %p152
    %p155 = scmp.ne.s32.totalorder %s140, %s154
    %p156 = scmp.eq.s32.totalorder %s25, 0
    %p157 = por %p155, %p156
    %s159 = sadd.s32 %s158, 1
    %p162 = scmp.eq.s32.totalorder %s19, 3
    %p163 = scmp.ne.s32.totalorder %s158, %s160
    %p164 = scmp.eq.s32.totalorder %s19, 0
    %p165 = por %p163, %p164
    %p166 = scmp.ne.s32.totalorder %s158, %s160
    %p167 = scmp.eq.s32.totalorder %s24, 3
    %p168 = por %p166, %p167
    %p169 = scmp.ne.s32.totalorder %s160, %s161
    %p170 = scmp.eq.s32.totalorder %s24, 0
    %p171 = por %p169, %p170
    %p172 = scmp.ne.s32.totalorder %s160, %s161
    %p173 = scmp.eq.s32.totalorder %s25, 3
    %p174 = por %p172, %p173
    %p176 = scmp.ne.s32.totalorder %s161, %s175
    %p177 = scmp.eq.s32.totalorder %s25, 0
    %p178 = por %p176, %p177
    %s180 = sadd.s32 %s179, 1
    %p183 = scmp.eq.s32.totalorder %s19, 3
    %p184 = scmp.ne.s32.totalorder %s179, %s181
    %p185 = scmp.eq.s32.totalorder %s19, 0
    %p186 = por %p184, %p185
    %p187 = scmp.ne.s32.totalorder %s179, %s181
    %p188 = scmp.eq.s32.totalorder %s24, 3
    %p189 = por %p187, %p188
    %p190 = scmp.ne.s32.totalorder %s181, %s182
    %p191 = scmp.eq.s32.totalorder %s24, 0
    %p192 = por %p190, %p191
    %p193 = scmp.ne.s32.totalorder %s181, %s182
    %p194 = scmp.eq.s32.totalorder %s25, 3
    %p195 = por %p193, %p194
    %p197 = scmp.ne.s32.totalorder %s182, %s196
    %p198 = scmp.eq.s32.totalorder %s25, 0
    %p199 = por %p197, %p198
    %s201 = sadd.s32 %s200, 1
    %p204 = scmp.eq.s32.totalorder %s19, 3
    %p205 = scmp.ne.s32.totalorder %s200, %s202
    %p206 = scmp.eq.s32.totalorder %s19, 0
    %p207 = por %p205, %p206
    %p208 = scmp.ne.s32.totalorder %s200, %s202
    %p209 = scmp.eq.s32.totalorder %s24, 3
    %p210 = por %p208, %p209
    %p211 = scmp.ne.s32.totalorder %s202, %s203
    %p212 = scmp.eq.s32.totalorder %s24, 0
    %p213 = por %p211, %p212
    %p214 = scmp.ne.s32.totalorder %s202, %s203
    %p215 = scmp.eq.s32.totalorder %s25, 3
    %p216 = por %p214, %p215
    %p218 = scmp.ne.s32.totalorder %s203, %s217
    %p219 = scmp.eq.s32.totalorder %s25, 0
    %p220 = por %p218, %p219
    %s222 = sadd.s32 %s221, 1
    %p225 = scmp.eq.s32.totalorder %s19, 3
    %p226 = scmp.ne.s32.totalorder %s221, %s223
    %p227 = scmp.eq.s32.totalorder %s19, 0
    %p228 = por %p226, %p227
    %p229 = scmp.ne.s32.totalorder %s221, %s223
    %p230 = scmp.eq.s32.totalorder %s24, 3
    %p231 = por %p229, %p230
    %p232 = scmp.ne.s32.totalorder %s223, %s224
    %p233 = scmp.eq.s32.totalorder %s24, 0
    %p234 = por %p232, %p233
    %p235 = scmp.ne.s32.totalorder %s223, %s224
    %p236 = scmp.eq.s32.totalorder %s25, 3
    %p237 = por %p235, %p236
    %p239 = scmp.ne.s32.totalorder %s224, %s238
    %p240 = scmp.eq.s32.totalorder %s25, 0
    %p241 = por %p239, %p240
    %s243 = sadd.s32 %s242, 1
    %p246 = scmp.eq.s32.totalorder %s19, 3
    %p247 = scmp.ne.s32.totalorder %s242, %s244
    %p248 = scmp.eq.s32.totalorder %s19, 0
    %p249 = por %p247, %p248
    %p250 = scmp.ne.s32.totalorder %s242, %s244
    %p251 = scmp.eq.s32.totalorder %s24, 3
    %p252 = por %p250, %p251
    %p253 = scmp.ne.s32.totalorder %s244, %s245
    %p254 = scmp.eq.s32.totalorder %s24, 0
    %p255 = por %p253, %p254
    %p256 = scmp.ne.s32.totalorder %s244, %s245
    %p257 = scmp.eq.s32.totalorder %s25, 3
    %p258 = por %p256, %p257
    %p260 = scmp.ne.s32.totalorder %s245, %s259
    %p261 = scmp.eq.s32.totalorder %s25, 0
    %p262 = por %p260, %p261
    %s264 = sadd.s32 %s263, 1
    %p267 = scmp.eq.s32.totalorder %s19, 3
    %p268 = scmp.ne.s32.totalorder %s263, %s265
    %p269 = scmp.eq.s32.totalorder %s19, 0
    %p270 = por %p268, %p269
    %p271 = scmp.ne.s32.totalorder %s263, %s265
    %p272 = scmp.eq.s32.totalorder %s24, 3
    %p273 = por %p271, %p272
    %p274 = scmp.ne.s32.totalorder %s265, %s266
    %p275 = scmp.eq.s32.totalorder %s24, 0
    %p276 = por %p274, %p275
    %p277 = scmp.ne.s32.totalorder %s265, %s266
    %p278 = scmp.eq.s32.totalorder %s25, 3
    %p279 = por %p277, %p278
    %p281 = scmp.ne.s32.totalorder %s266, %s280
    %p282 = scmp.eq.s32.totalorder %s25, 0
    %p283 = por %p281, %p282
    %s285 = sadd.s32 %s284, 1
    %p288 = scmp.eq.s32.totalorder %s19, 3
    %p289 = scmp.ne.s32.totalorder %s284, %s286
    %p290 = scmp.eq.s32.totalorder %s19, 0
    %p291 = por %p289, %p290
    %p292 = scmp.ne.s32.totalorder %s284, %s286
    %p293 = scmp.eq.s32.totalorder %s24, 3
    %p294 = por %p292, %p293
    %p295 = scmp.ne.s32.totalorder %s286, %s287
    %p296 = scmp.eq.s32.totalorder %s24, 0
    %p297 = por %p295, %p296
    %p298 = scmp.ne.s32.totalorder %s286, %s287
    %p299 = scmp.eq.s32.totalorder %s25, 3
    %p300 = por %p298, %p299
    %p302 = scmp.ne.s32.totalorder %s287, %s301
    %p303 = scmp.eq.s32.totalorder %s25, 0
    %p304 = por %p302, %p303
    %s305 = ssub.s32 %s19, %s26
    %p306 = scmp.eq.s32.totalorder %s305, 0
    %s308 = sadd.s32 %s307, 1
    %s309 = scalar_select %p306, %s307, %s308
    %p312 = pneg %p306
    %p313 = scmp.eq.s32.totalorder %s19, 3
    %p314 = por %p312, %p313
    %p315 = scmp.ne.s32.totalorder %s307, %s310
    %p316 = scmp.eq.s32.totalorder %s19, 0
    %p317 = por %p315, %p316
    %p318 = scmp.ne.s32.totalorder %s307, %s310
    %p319 = scmp.eq.s32.totalorder %s24, 3
    %p320 = por %p318, %p319
    %p321 = scmp.ne.s32.totalorder %s310, %s311
    %p322 = scmp.eq.s32.totalorder %s24, 0
    %p323 = por %p321, %p322
    %p324 = scmp.ne.s32.totalorder %s310, %s311
    %p325 = scmp.eq.s32.totalorder %s25, 3
    %p326 = por %p324, %p325
    %p328 = scmp.ne.s32.totalorder %s311, %s327
    %p329 = scmp.eq.s32.totalorder %s25, 0
    %p330 = por %p328, %p329
    %p331 = scmp.le.s32.totalorder 1, %s19
    %p332 = scmp.lt.s32.totalorder %s19, 5
    %p333 = pnand %p331, %p332
    %p334 = pneg %p333
    // Predicated region
    $region9: #{_lambda_.9} parent=5 // pred_check
      _
    $region10: #{_lambda_.9} parent=5 // pred_check_branch
      %336 = sbr.rel (%p333) target = $region12
    $region11: #{_lambda_.9} parent=5 // pred_region
      %s337 = ssub.s32 %s19, 1
      // Predicated region
      $region13: #{_lambda_.9} parent=11 // pred_check
        %p338 = pneg %p66
      $region14: #{_lambda_.9} parent=11 // pred_check_branch
        %340 = sbr.rel (%p338) target = $region16
      $region15: #{_lambda_.9} parent=11 // pred_region
        _
      $region16: #{_lambda_.9} parent=11 // pred_fallthru
        _
      // Predicated region
      $region17: #{_lambda_.9} parent=11 // pred_check
        %p341 = pneg %p87
      $region18: #{_lambda_.9} parent=11 // pred_check_branch
        %343 = sbr.rel (%p341) target = $region20
      $region19: #{_lambda_.9} parent=11 // pred_region
        _
      $region20: #{_lambda_.9} parent=11 // pred_fallthru
        _
      // Predicated region
      $region21: #{_lambda_.9} parent=11 // pred_check
        %p344 = pneg %p108
      $region22: #{_lambda_.9} parent=11 // pred_check_branch
        %346 = sbr.rel (%p344) target = $region24
      $region23: #{_lambda_.9} parent=11 // pred_region
        _
      $region24: #{_lambda_.9} parent=11 // pred_fallthru
        _
      // Predicated region
      $region25: #{_lambda_.9} parent=11 // pred_check
        %p347 = pneg %p129
      $region26: #{_lambda_.9} parent=11 // pred_check_branch
        %349 = sbr.rel (%p347) target = $region28
      $region27: #{_lambda_.9} parent=11 // pred_region
        _
      $region28: #{_lambda_.9} parent=11 // pred_fallthru
        _
      // Predicated region
      $region29: #{_lambda_.9} parent=11 // pred_check
        %p350 = pneg %p150
      $region30: #{_lambda_.9} parent=11 // pred_check_branch
        %352 = sbr.rel (%p350) target = $region32
      $region31: #{_lambda_.9} parent=11 // pred_region
        _
      $region32: #{_lambda_.9} parent=11 // pred_fallthru
        _
      // Predicated region
      $region33: #{_lambda_.9} parent=11 // pred_check
        %p353 = pneg %p171
      $region34: #{_lambda_.9} parent=11 // pred_check_branch
        %355 = sbr.rel (%p353) target = $region36
      $region35: #{_lambda_.9} parent=11 // pred_region
        _
      $region36: #{_lambda_.9} parent=11 // pred_fallthru
        _
      // Predicated region
      $region37: #{_lambda_.9} parent=11 // pred_check
        %p356 = pneg %p192
      $region38: #{_lambda_.9} parent=11 // pred_check_branch
        %358 = sbr.rel (%p356) target = $region40
      $region39: #{_lambda_.9} parent=11 // pred_region
        _
      $region40: #{_lambda_.9} parent=11 // pred_fallthru
        _
      // Predicated region
      $region41: #{_lambda_.9} parent=11 // pred_check
        %p359 = pneg %p213
      $region42: #{_lambda_.9} parent=11 // pred_check_branch
        %361 = sbr.rel (%p359) target = $region44
      $region43: #{_lambda_.9} parent=11 // pred_region
        _
      $region44: #{_lambda_.9} parent=11 // pred_fallthru
        _
      // Predicated region
      $region45: #{_lambda_.9} parent=11 // pred_check
        %p362 = pneg %p234
      $region46: #{_lambda_.9} parent=11 // pred_check_branch
        %364 = sbr.rel (%p362) target = $region48
      $region47: #{_lambda_.9} parent=11 // pred_region
        _
      $region48: #{_lambda_.9} parent=11 // pred_fallthru
        _
      // Predicated region
      $region49: #{_lambda_.9} parent=11 // pred_check
        %p365 = pneg %p255
      $region50: #{_lambda_.9} parent=11 // pred_check_branch
        %367 = sbr.rel (%p365) target = $region52
      $region51: #{_lambda_.9} parent=11 // pred_region
        _
      $region52: #{_lambda_.9} parent=11 // pred_fallthru
        _
      // Predicated region
      $region53: #{_lambda_.9} parent=11 // pred_check
        %p368 = pneg %p276
      $region54: #{_lambda_.9} parent=11 // pred_check_branch
        %370 = sbr.rel (%p368) target = $region56
      $region55: #{_lambda_.9} parent=11 // pred_region
        _
      $region56: #{_lambda_.9} parent=11 // pred_fallthru
        _
      // Predicated region
      $region57: #{_lambda_.9} parent=11 // pred_check
        %p371 = pneg %p297
      $region58: #{_lambda_.9} parent=11 // pred_check_branch
        %373 = sbr.rel (%p371) target = $region60
      $region59: #{_lambda_.9} parent=11 // pred_region
        _
      $region60: #{_lambda_.9} parent=11 // pred_fallthru
        _
    $region12: #{_lambda_.9} parent=5 // pred_fallthru
      _
    %p374 = scmp.lt.s32.totalorder %s19, 4
    // Predicated region
    $region61: #{_lambda_.9} parent=5 // pred_check
      %p375 = pneg %p374
    $region62: #{_lambda_.9} parent=5 // pred_check_branch
      %377 = sbr.rel (%p375) target = $region64
    $region63: #{_lambda_.9} parent=5 // pred_region
      // Predicated region
      $region65: #{_lambda_.9} parent=63 // pred_check
        %p378 = pneg %p39
      $region66: #{_lambda_.9} parent=63 // pred_check_branch
        %380 = sbr.rel (%p378) target = $region68
      $region67: #{_lambda_.9} parent=63 // pred_region
        %p381 = scmp.lt.s32.totalorder %s19, 3
        %s382 = scalar_select %p381, %s19, 3
        %s383 = smul.addr %s382, 8
        %s384 = smul.addr %s383, 8
        %s385 = scalar_lea.vmem %s0, %s384
      $region68: #{_lambda_.9} parent=63 // pred_fallthru
        _
    $region64: #{_lambda_.9} parent=5 // pred_fallthru
      _
    %p386 = scmp.le.s32.totalorder 1, %s19
    %p387 = scmp.lt.s32.totalorder %s19, 5
    %p388 = pnand %p386, %p387
    %p389 = pneg %p388
    // Predicated region
    $region69: #{_lambda_.9} parent=5 // pred_check
      _
    $region70: #{_lambda_.9} parent=5 // pred_check_branch
      %391 = sbr.rel (%p388) target = $region72
    $region71: #{_lambda_.9} parent=5 // pred_region
      %s392 = ssub.s32 %s19, 1
      %p393 = scmp.lt.s32.totalorder %s24, 3
      %s394 = scalar_select %p393, %s24, 3
      %s395 = smul.addr %s394, 8
      %s396 = smul.addr %s395, 8
      %s397 = scalar_lea.vmem %s0, %s396
      %p398 = pneg %p45
      %p399 = pneg %p42
      %p400 = pneg %p66
      %p401 = pneg %p63
      %p402 = pneg %p87
      %p403 = pneg %p84
      %p404 = pneg %p108
      %p405 = pneg %p105
      %p406 = pneg %p129
      %p407 = pneg %p126
      %p408 = pneg %p150
      %p409 = pneg %p147
      %p410 = pneg %p171
      %p411 = pneg %p168
      %p412 = pneg %p192
      %p413 = pneg %p189
      %p414 = pneg %p213
      %p415 = pneg %p210
      %p416 = pneg %p234
      %p417 = pneg %p231
      %p418 = pneg %p255
      %p419 = pneg %p252
      %p420 = pneg %p276
      %p421 = pneg %p273
      %p422 = pneg %p297
      %p423 = pneg %p294
      %p424 = pneg %p323
      %p425 = pneg %p320
      %p426 = scmp.lt.s32.totalorder %s24, 3
      %s427 = scalar_select %p426, %s24, 3
      %s428 = smul.addr %s427, 8
      %s429 = smul.addr %s428, 8
      %s430 = scalar_lea.vmem %s13, %s429
      %p431 = scmp.lt.s32.totalorder %s24, 3
      %s432 = scalar_select %p431, %s24, 3
      %s433 = smul.addr %s432, 8
      %s434 = smul.addr %s433, 8
      %s435 = scalar_lea.vmem %s0, %s434
      %p436 = scmp.lt.s32.totalorder %s24, 3
      %s437 = scalar_select %p436, %s24, 3
      %s438 = smul.addr %s437, 8
      %s439 = smul.addr %s438, 8
      %s440 = scalar_lea.vmem %s13, %s439
      %v442 = vld [vmem:[%s435] sm:$0xff]
      %v443 = vld [vmem:[%s435 + $0x8] sm:$0xff]
      %v444 = vld [vmem:[%s435 + $0x10] sm:$0xff]
      %v445 = vld [vmem:[%s435 + $0x18] sm:$0xff]
      %v446 = vld [vmem:[%s435 + $0x20] sm:$0xff]
      %v447 = vld [vmem:[%s435 + $0x28] sm:$0xff]
      %v448 = vld [vmem:[%s435 + $0x30] sm:$0xff]
      %v449 = vld [vmem:[%s435 + $0x38] sm:$0xff]
      %v450 = vpack.c.bf16 %v443, %v442
      %v451 = vpack.c.bf16 %v445, %v444
      %v452 = vpack.c.bf16 %v447, %v446
      %v453 = vpack.c.bf16 %v449, %v448
      %v454 = vld [vmem:[%s1] sm:$0xff]
      %v455 = vld [vmem:[%s1 + $0x8] sm:$0xf]
      %v456 = vld [vmem:[%s1 + $0xc] sm:$0xff]
      %v457 = vld [vmem:[%s1 + $0x14] sm:$0xf]
      %v458 = vld [vmem:[%s1 + $0x18] sm:$0xff]
      %v459 = vld [vmem:[%s1 + $0x20] sm:$0xf]
      %v460 = vld [vmem:[%s1 + $0x24] sm:$0xff]
      %v461 = vld [vmem:[%s1 + $0x2c] sm:$0xf]
      %v462 = vld [vmem:[%s1 + $0x30] sm:$0xff]
      %v463 = vld [vmem:[%s1 + $0x38] sm:$0xf]
      %v464 = vld [vmem:[%s1 + $0x3c] sm:$0xff]
      %v465 = vld [vmem:[%s1 + $0x44] sm:$0xf]
      %v466 = vld [vmem:[%s1 + $0x48] sm:$0xff]
      %v467 = vld [vmem:[%s1 + $0x50] sm:$0xf]
      %v468 = vld [vmem:[%s1 + $0x54] sm:$0xff]
      %v469 = vld [vmem:[%s1 + $0x5c] sm:$0xf]
      %v470 = vld [vmem:[%s1 + $0x60] sm:$0xff]
      %v471 = vld [vmem:[%s1 + $0x68] sm:$0xf]
      %v472 = vld [vmem:[%s1 + $0x6c] sm:$0xff]
      %v473 = vld [vmem:[%s1 + $0x74] sm:$0xf]
      %v474 = vld [vmem:[%s1 + $0x78] sm:$0xff]
      %v475 = vld [vmem:[%s1 + $0x80] sm:$0xf]
      %v476 = vld [vmem:[%s1 + $0x84] sm:$0xff]
      %v477 = vld [vmem:[%s1 + $0x8c] sm:$0xf]
      %v478 = vld [vmem:[%s1 + $0x90] sm:$0xff]
      %v479 = vld [vmem:[%s1 + $0x98] sm:$0xf]
      %v480 = vld [vmem:[%s1 + $0x9c] sm:$0xff]
      %v481 = vld [vmem:[%s1 + $0xa4] sm:$0xf]
      %v482 = vld [vmem:[%s1 + $0xa8] sm:$0xff]
      %v483 = vld [vmem:[%s1 + $0xb0] sm:$0xf]
      %v484 = vld [vmem:[%s1 + $0xb4] sm:$0xff]
      %v485 = vld [vmem:[%s1 + $0xbc] sm:$0xf]
      %v486 = vld [vmem:[%s2] sm:$0x7]
      %v488 = vlaneseq
      %v489 = vshrl.u32 %v488, 7
      %v490 = vsub.s32 0, %v489
      %v491 = vrot.slane %v486, %v490
      %v492 = vlaneseq
      %v493 = vshrl.u32 %v492, 7
      %v494 = vsub.s32 1, %v493
      %v495 = vrot.slane %v486, %v494
      %v496 = vlaneseq
      %v497 = vshrl.u32 %v496, 7
      %v498 = vsub.s32 2, %v497
      %v499 = vrot.slane %v486, %v498
      %v535 = vunpack.c.l.b16 %v454
      %v536 = vunpack.c.h.b16 %v454
      %v537 = vunpack.c.l.b16 %v455
      %v538 = vunpack.c.l.b16 %v456
      %v539 = vunpack.c.h.b16 %v456
      %v540 = vunpack.c.l.b16 %v457
      %v541 = vunpack.c.l.b16 %v458
      %v542 = vunpack.c.h.b16 %v458
      %v543 = vunpack.c.l.b16 %v459
      %v544 = vunpack.c.l.b16 %v460
      %v545 = vunpack.c.h.b16 %v460
      %v546 = vunpack.c.l.b16 %v461
      %v547 = vunpack.c.l.b16 %v462
      %v548 = vunpack.c.h.b16 %v462
      %v549 = vunpack.c.l.b16 %v463
      %v550 = vunpack.c.l.b16 %v464
      %v551 = vunpack.c.h.b16 %v464
      %v552 = vunpack.c.l.b16 %v465
      %v553 = vunpack.c.l.b16 %v466
      %v554 = vunpack.c.h.b16 %v466
      %v555 = vunpack.c.l.b16 %v467
      %v556 = vunpack.c.l.b16 %v468
      %v557 = vunpack.c.h.b16 %v468
      %v558 = vunpack.c.l.b16 %v469
      %v559 = vunpack.c.l.b16 %v470
      %v560 = vunpack.c.h.b16 %v470
      %v561 = vunpack.c.l.b16 %v471
      %v562 = vunpack.c.l.b16 %v472
      %v563 = vunpack.c.h.b16 %v472
      %v564 = vunpack.c.l.b16 %v473
      %v565 = vunpack.c.l.b16 %v474
      %v566 = vunpack.c.h.b16 %v474
      %v567 = vunpack.c.l.b16 %v475
      %v568 = vunpack.c.l.b16 %v476
      %v569 = vunpack.c.h.b16 %v476
      %v570 = vunpack.c.l.b16 %v477
      %v571 = vunpack.c.l.b16 %v478
      %v572 = vunpack.c.h.b16 %v478
      %v573 = vunpack.c.l.b16 %v479
      %v574 = vunpack.c.l.b16 %v480
      %v575 = vunpack.c.h.b16 %v480
      %v576 = vunpack.c.l.b16 %v481
      %v577 = vunpack.c.l.b16 %v482
      %v578 = vunpack.c.h.b16 %v482
      %v579 = vunpack.c.l.b16 %v483
      %v580 = vunpack.c.l.b16 %v484
      %v581 = vunpack.c.h.b16 %v484
      %v582 = vunpack.c.l.b16 %v485
      %v583 = vpack.c.b16 %v538, %v535
      %v584 = vpack.c.b16 %v539, %v536
      %v585 = vpack.c.b16 %v540, %v537
      %v586 = vpack.c.b16 %v544, %v541
      %v587 = vpack.c.b16 %v545, %v542
      %v588 = vpack.c.b16 %v546, %v543
      %v589 = vpack.c.b16 %v550, %v547
      %v590 = vpack.c.b16 %v551, %v548
      %v591 = vpack.c.b16 %v552, %v549
      %v592 = vpack.c.b16 %v556, %v553
      %v593 = vpack.c.b16 %v557, %v554
      %v594 = vpack.c.b16 %v558, %v555
      %v595 = vpack.c.b16 %v562, %v559
      %v596 = vpack.c.b16 %v563, %v560
      %v597 = vpack.c.b16 %v564, %v561
      %v598 = vpack.c.b16 %v568, %v565
      %v599 = vpack.c.b16 %v569, %v566
      %v600 = vpack.c.b16 %v570, %v567
      %v601 = vpack.c.b16 %v574, %v571
      %v602 = vpack.c.b16 %v575, %v572
      %v603 = vpack.c.b16 %v576, %v573
      %v604 = vpack.c.b16 %v580, %v577
      %v605 = vpack.c.b16 %v581, %v578
      %v606 = vpack.c.b16 %v582, %v579
      %631 = vmatprep.subr.bf16.mxu0 %v605
      %632 = vmatpush1.bf16.msra.mxu0 %v604
      %633 = vmatprep.subr.bf16.mxu0 %v602
      %634 = vmatpush1.bf16.msra.mxu0 %v601
      %635 = vmatprep.subr.bf16.mxu0 %v599
      %636 = vmatpush1.bf16.msra.mxu0 %v598
      %637 = vmatprep.subr.bf16.mxu0 %v596
      %638 = vmatpush1.bf16.msra.mxu0 %v595
      %639 = vmatprep.subr.bf16.mxu0 %v593
      %640 = vmatpush1.bf16.msra.mxu0 %v592
      %641 = vmatprep.subr.bf16.mxu0 %v590
      %642 = vmatpush1.bf16.msra.mxu0 %v589
      %643 = vmatprep.subr.bf16.mxu0 %v587
      %644 = vmatpush1.bf16.msra.mxu0 %v586
      %645 = vmatprep.subr.bf16.mxu0 %v584
      %646 = vmatpush1.bf16.msra.mxu0 %v583
      %647 = vmatprep.subr.bf16.mxu0 0
      %648 = vmatpush2.bf16.msra.mxu0 0
      %649 = vmatprep.subr.bf16.mxu0 0
      %650 = vmatpush2.bf16.msra.mxu0 0
      %651 = vmatprep.subr.bf16.mxu0 0
      %652 = vmatpush2.bf16.msra.mxu0 0
      %653 = vmatprep.subr.bf16.mxu0 0
      %654 = vmatpush2.bf16.msra.mxu0 0
      %655 = vmatprep.subr.bf16.mxu0 0
      %656 = vmatpush2.bf16.msra.mxu0 0
      %657 = vmatprep.subr.bf16.mxu0 0
      %658 = vmatpush2.bf16.msra.mxu0 0
      %659 = vmatprep.subr.bf16.mxu0 0
      %660 = vmatpush2.bf16.msra.mxu0 0
      %661 = vmatprep.subr.bf16.mxu0 0
      %662 = vmatpush2.bf16.msra.mxu0 0
      %663 = vmatprep.mubr.bf16.mxu0 0
      %664 = vmatmul.mubr.bf16.gmra.mxu0 %v450
      %v665 = vpop.f32.mrf.mxu0
      %v666 = vadd.f32 %v491, %v665
      %v667 = vpop.f32.mrf.mxu0
      %v668 = vadd.f32 %v495, %v667
      %v669 = vpop.f32.mrf.mxu0
      %v670 = vadd.f32 %v491, %v669
      %v671 = vpop.f32.mrf.mxu0
      %v672 = vadd.f32 %v495, %v671
      %673 = vmatprep.mubr.bf16.mxu0 0
      %674 = vmatmul.mubr.bf16.gmra.mxu0 %v451
      %v675 = vpop.f32.mrf.mxu0
      %v676 = vadd.f32 %v491, %v675
      %v677 = vpop.f32.mrf.mxu0
      %v678 = vadd.f32 %v495, %v677
      %v679 = vpop.f32.mrf.mxu0
      %v680 = vadd.f32 %v491, %v679
      %v681 = vpop.f32.mrf.mxu0
      %v682 = vadd.f32 %v495, %v681
      %683 = vmatprep.mubr.bf16.mxu0 0
      %684 = vmatmul.mubr.bf16.gmra.mxu0 %v452
      %v685 = vpop.f32.mrf.mxu0
      %v686 = vadd.f32 %v491, %v685
      %v687 = vpop.f32.mrf.mxu0
      %v688 = vadd.f32 %v495, %v687
      %v689 = vpop.f32.mrf.mxu0
      %v690 = vadd.f32 %v491, %v689
      %v691 = vpop.f32.mrf.mxu0
      %v692 = vadd.f32 %v495, %v691
      %693 = vmatprep.mubr.bf16.mxu0 0
      %694 = vmatmul.mubr.bf16.gmra.mxu0 %v453
      %v695 = vpop.f32.mrf.mxu0
      %v696 = vadd.f32 %v491, %v695
      %v697 = vpop.f32.mrf.mxu0
      %v698 = vadd.f32 %v495, %v697
      %v699 = vpop.f32.mrf.mxu0
      %v700 = vadd.f32 %v491, %v699
      %v701 = vpop.f32.mrf.mxu0
      %v702 = vadd.f32 %v495, %v701
      %703 = vdwg.mxu0
      %704 = vmatprep.subr.bf16.mxu0 0
      %705 = vmatpush1.bf16.msra.mxu0 %v606
      %706 = vmatprep.subr.bf16.mxu0 0
      %707 = vmatpush1.bf16.msra.mxu0 %v603
      %708 = vmatprep.subr.bf16.mxu0 0
      %709 = vmatpush1.bf16.msra.mxu0 %v600
      %710 = vmatprep.subr.bf16.mxu0 0
      %711 = vmatpush1.bf16.msra.mxu0 %v597
      %712 = vmatprep.subr.bf16.mxu0 0
      %713 = vmatpush1.bf16.msra.mxu0 %v594
      %714 = vmatprep.subr.bf16.mxu0 0
      %715 = vmatpush1.bf16.msra.mxu0 %v591
      %716 = vmatprep.subr.bf16.mxu0 0
      %717 = vmatpush1.bf16.msra.mxu0 %v588
      %718 = vmatprep.subr.bf16.mxu0 0
      %719 = vmatpush1.bf16.msra.mxu0 %v585
      %720 = vmatprep.subr.bf16.mxu0 0
      %721 = vmatpush2.bf16.msra.mxu0 0
      %722 = vmatprep.subr.bf16.mxu0 0
      %723 = vmatpush2.bf16.msra.mxu0 0
      %724 = vmatprep.subr.bf16.mxu0 0
      %725 = vmatpush2.bf16.msra.mxu0 0
      %726 = vmatprep.subr.bf16.mxu0 0
      %727 = vmatpush2.bf16.msra.mxu0 0
      %728 = vmatprep.subr.bf16.mxu0 0
      %729 = vmatpush2.bf16.msra.mxu0 0
      %730 = vmatprep.subr.bf16.mxu0 0
      %731 = vmatpush2.bf16.msra.mxu0 0
      %732 = vmatprep.subr.bf16.mxu0 0
      %733 = vmatpush2.bf16.msra.mxu0 0
      %734 = vmatprep.subr.bf16.mxu0 0
      %735 = vmatpush2.bf16.msra.mxu0 0
      %736 = vmatprep.mubr.bf16.mxu0 0
      %737 = vmatmul.mubr.bf16.gmra.mxu0 %v450
      %v738 = vpop.f32.mrf.mxu0
      %v739 = vadd.f32 %v499, %v738
      %v740 = vpop.f32.mrf.mxu0
      %v741 = vpop.f32.mrf.mxu0
      %v742 = vadd.f32 %v499, %v741
      %v743 = vpop.f32.mrf.mxu0
      %744 = vmatprep.mubr.bf16.mxu0 0
      %745 = vmatmul.mubr.bf16.gmra.mxu0 %v451
      %v746 = vpop.f32.mrf.mxu0
      %v747 = vadd.f32 %v499, %v746
      %v748 = vpop.f32.mrf.mxu0
      %v749 = vpop.f32.mrf.mxu0
      %v750 = vadd.f32 %v499, %v749
      %v751 = vpop.f32.mrf.mxu0
      %752 = vmatprep.mubr.bf16.mxu0 0
      %753 = vmatmul.mubr.bf16.gmra.mxu0 %v452
      %v754 = vpop.f32.mrf.mxu0
      %v755 = vadd.f32 %v499, %v754
      %v756 = vpop.f32.mrf.mxu0
      %v757 = vpop.f32.mrf.mxu0
      %v758 = vadd.f32 %v499, %v757
      %v759 = vpop.f32.mrf.mxu0
      %760 = vmatprep.mubr.bf16.mxu0 0
      %761 = vmatmul.mubr.bf16.gmra.mxu0 %v453
      %v762 = vpop.f32.mrf.mxu0
      %v763 = vadd.f32 %v499, %v762
      %v764 = vpop.f32.mrf.mxu0
      %v765 = vpop.f32.mrf.mxu0
      %v766 = vadd.f32 %v499, %v765
      %v767 = vpop.f32.mrf.mxu0
      %768 = vdwg.mxu0
      %v769 = vpack.c.bf16 %v670, %v666
      %v770 = vpack.c.bf16 %v680, %v676
      %v771 = vpack.c.bf16 %v690, %v686
      %v772 = vpack.c.bf16 %v700, %v696
      %v773 = vpack.c.bf16 %v672, %v668
      %v774 = vpack.c.bf16 %v682, %v678
      %v775 = vpack.c.bf16 %v692, %v688
      %v776 = vpack.c.bf16 %v702, %v698
      %v777 = vpack.c.bf16 %v742, %v739
      %v778 = vpack.c.bf16 %v750, %v747
      %v779 = vpack.c.bf16 %v758, %v755
      %v780 = vpack.c.bf16 %v766, %v763
      %v781 = vlaneseq
      %v782 = vand.u32 %v781, 127
      %vm783 = vcmp.lt.s32.totalorder %v782, 61
      %vm784 = vcmask 130048
      %v786 = vsel %vm784, %v769, 0
      %v789 = vsel %vm784, %v770, 0
      %v792 = vsel %vm784, %v771, 0
      %v795 = vsel %vm784, %v772, 0
      %v798 = vsel %vm784, %v773, 0
      %v801 = vsel %vm784, %v774, 0
      %v804 = vsel %vm784, %v775, 0
      %v807 = vsel %vm784, %v776, 0
      %809 = vmatprep.subr.bf16.mxu0 0
      %810 = vmatpush1.bf16.xpose.msra.mxu0 0
      %811 = vmatprep.subr.bf16.mxu0 0
      %812 = vmatpush1.bf16.xpose.msra.mxu0 0
      %813 = vmatprep.subr.bf16.mxu0 0
      %814 = vmatpush1.bf16.xpose.msra.mxu0 0
      %815 = vmatprep.subr.bf16.mxu0 0
      %816 = vmatpush1.bf16.xpose.msra.mxu0 0
      %817 = vmatprep.subr.bf16.mxu0 0
      %818 = vmatpush1.bf16.xpose.msra.mxu0 %v807
      %819 = vmatprep.subr.bf16.mxu0 0
      %820 = vmatpush1.bf16.xpose.msra.mxu0 %v804
      %821 = vmatprep.subr.bf16.mxu0 0
      %822 = vmatpush1.bf16.xpose.msra.mxu0 %v801
      %823 = vmatprep.subr.bf16.mxu0 0
      %824 = vmatpush1.bf16.xpose.msra.mxu0 %v798
      %825 = vmatprep.subr.bf16.mxu0 0
      %826 = vmatpush2.bf16.xpose.msra.mxu0 0
      %827 = vmatprep.subr.bf16.mxu0 0
      %828 = vmatpush2.bf16.xpose.msra.mxu0 0
      %829 = vmatprep.subr.bf16.mxu0 0
      %830 = vmatpush2.bf16.xpose.msra.mxu0 0
      %831 = vmatprep.subr.bf16.mxu0 0
      %832 = vmatpush2.bf16.xpose.msra.mxu0 0
      %833 = vmatprep.subr.bf16.mxu0 0
      %834 = vmatpush2.bf16.xpose.msra.mxu0 0
      %835 = vmatprep.subr.bf16.mxu0 0
      %836 = vmatpush2.bf16.xpose.msra.mxu0 0
      %837 = vmatprep.subr.bf16.mxu0 0
      %838 = vmatpush2.bf16.xpose.msra.mxu0 0
      %839 = vmatprep.subr.bf16.mxu0 0
      %840 = vmatpush2.bf16.xpose.msra.mxu0 0
      %841 = vmatprep.mubr.bf16.mxu0 0
      %842 = vmatmul.mubr.bf16.gmra.mxu0 %v786
      %v843 = vpop.f32.mrf.mxu0
      %v844 = vadd.f32 0.0, %v843
      %v845 = vpop.f32.mrf.mxu0
      %v846 = vpop.f32.mrf.mxu0
      %v847 = vadd.f32 0.0, %v846
      %v848 = vpop.f32.mrf.mxu0
      %849 = vmatprep.mubr.bf16.mxu0 0
      %850 = vmatmul.mubr.bf16.gmra.mxu0 %v789
      %v851 = vpop.f32.mrf.mxu0
      %v852 = vadd.f32 0.0, %v851
      %v853 = vpop.f32.mrf.mxu0
      %v854 = vpop.f32.mrf.mxu0
      %v855 = vadd.f32 0.0, %v854
      %v856 = vpop.f32.mrf.mxu0
      %857 = vmatprep.mubr.bf16.mxu0 0
      %858 = vmatmul.mubr.bf16.gmra.mxu0 %v792
      %v859 = vpop.f32.mrf.mxu0
      %v860 = vadd.f32 0.0, %v859
      %v861 = vpop.f32.mrf.mxu0
      %v862 = vpop.f32.mrf.mxu0
      %v863 = vadd.f32 0.0, %v862
      %v864 = vpop.f32.mrf.mxu0
      %865 = vmatprep.mubr.bf16.mxu0 0
      %866 = vmatmul.mubr.bf16.gmra.mxu0 %v795
      %v867 = vpop.f32.mrf.mxu0
      %v868 = vadd.f32 0.0, %v867
      %v869 = vpop.f32.mrf.mxu0
      %v870 = vpop.f32.mrf.mxu0
      %v871 = vadd.f32 0.0, %v870
      %v872 = vpop.f32.mrf.mxu0
      %873 = vdwg.mxu0
      %v874 = vmul.f32 %v844, 0.25
      %v875 = vmul.f32 %v847, 0.25
      %v876 = vmul.f32 %v852, 0.25
      %v877 = vmul.f32 %v855, 0.25
      %v878 = vmul.f32 %v860, 0.25
      %v879 = vmul.f32 %v863, 0.25
      %v880 = vmul.f32 %v868, 0.25
      %v881 = vmul.f32 %v871, 0.25
      %v882 = vsel %vm783, %v874, -1e+30
      %v883 = vsel %vm783, %v875, -1e+30
      %v884 = vsel %vm783, %v876, -1e+30
      %v885 = vsel %vm783, %v877, -1e+30
      %v886 = vsel %vm783, %v878, -1e+30
      %v887 = vsel %vm783, %v879, -1e+30
      %v888 = vsel %vm783, %v880, -1e+30
      %v889 = vsel %vm783, %v881, -1e+30
      %vm890 = vcmask 523264
      %v891 = vsel %vm890, %v882, -inf
      %892 = vmax.xlane.f32.xlu0 %v891
      %v893 = vpop.xlane.xlu0 %892
      %v894 = vsel %vm890, %v883, -inf
      %895 = vmax.xlane.f32.xlu0 %v894
      %v896 = vpop.xlane.xlu0 %895
      %v897 = vsel %vm890, %v884, -inf
      %898 = vmax.xlane.f32.xlu0 %v897
      %v899 = vpop.xlane.xlu0 %898
      %v900 = vsel %vm890, %v885, -inf
      %901 = vmax.xlane.f32.xlu0 %v900
      %v902 = vpop.xlane.xlu0 %901
      %v903 = vsel %vm890, %v886, -inf
      %904 = vmax.xlane.f32.xlu0 %v903
      %v905 = vpop.xlane.xlu0 %904
      %v906 = vsel %vm890, %v887, -inf
      %907 = vmax.xlane.f32.xlu0 %v906
      %v908 = vpop.xlane.xlu0 %907
      %v909 = vsel %vm890, %v888, -inf
      %910 = vmax.xlane.f32.xlu0 %v909
      %v911 = vpop.xlane.xlu0 %910
      %v912 = vsel %vm890, %v889, -inf
      %913 = vmax.xlane.f32.xlu0 %v912
      %v914 = vpop.xlane.xlu0 %913
      %v915 = vsub.f32 %v882, %v893
      %v916 = vsub.f32 %v883, %v896
      %v917 = vsub.f32 %v884, %v899
      %v918 = vsub.f32 %v885, %v902
      %v919 = vsub.f32 %v886, %v905
      %v920 = vsub.f32 %v887, %v908
      %v921 = vsub.f32 %v888, %v911
      %v922 = vsub.f32 %v889, %v914
      %v923 = vmul.f32 %v915, 1.442695
      %v924 = vpow.pop %v923
      %v925 = vmul.f32 %v916, 1.442695
      %v926 = vpow.pop %v925
      %v927 = vmul.f32 %v917, 1.442695
      %v928 = vpow.pop %v927
      %v929 = vmul.f32 %v918, 1.442695
      %v930 = vpow.pop %v929
      %v931 = vmul.f32 %v919, 1.442695
      %v932 = vpow.pop %v931
      %v933 = vmul.f32 %v920, 1.442695
      %v934 = vpow.pop %v933
      %v935 = vmul.f32 %v921, 1.442695
      %v936 = vpow.pop %v935
      %v937 = vmul.f32 %v922, 1.442695
      %v938 = vpow.pop %v937
      %v939 = vsel %vm890, %v924, 0.0
      %940 = vadd.xlane.f32.xlu0 %v939
      %v941 = vpop.xlane.xlu0 %940
      %v942 = vsel %vm890, %v926, 0.0
      %943 = vadd.xlane.f32.xlu0 %v942
      %v944 = vpop.xlane.xlu0 %943
      %v945 = vsel %vm890, %v928, 0.0
      %946 = vadd.xlane.f32.xlu0 %v945
      %v947 = vpop.xlane.xlu0 %946
      %v948 = vsel %vm890, %v930, 0.0
      %949 = vadd.xlane.f32.xlu0 %v948
      %v950 = vpop.xlane.xlu0 %949
      %v951 = vsel %vm890, %v932, 0.0
      %952 = vadd.xlane.f32.xlu0 %v951
      %v953 = vpop.xlane.xlu0 %952
      %v954 = vsel %vm890, %v934, 0.0
      %955 = vadd.xlane.f32.xlu0 %v954
      %v956 = vpop.xlane.xlu0 %955
      %v957 = vsel %vm890, %v936, 0.0
      %958 = vadd.xlane.f32.xlu0 %v957
      %v959 = vpop.xlane.xlu0 %958
      %v960 = vsel %vm890, %v938, 0.0
      %961 = vadd.xlane.f32.xlu0 %v960
      %v962 = vpop.xlane.xlu0 %961
      %v963 = vrcp.pop %v941
      %v964 = vrcp.pop %v944
      %v965 = vrcp.pop %v947
      %v966 = vrcp.pop %v950
      %v967 = vrcp.pop %v953
      %v968 = vrcp.pop %v956
      %v969 = vrcp.pop %v959
      %v970 = vrcp.pop %v962
      %v971 = vmul.f32 %v924, %v963
      %v972 = vmul.f32 %v926, %v964
      %v973 = vmul.f32 %v928, %v965
      %v974 = vmul.f32 %v930, %v966
      %v975 = vmul.f32 %v932, %v967
      %v976 = vmul.f32 %v934, %v968
      %v977 = vmul.f32 %v936, %v969
      %v978 = vmul.f32 %v938, %v970
      %v979 = vpack.c.bf16 %v972, %v971
      %v980 = vpack.c.bf16 %v974, %v973
      %v981 = vpack.c.bf16 %v976, %v975
      %v982 = vpack.c.bf16 %v978, %v977
      %v984 = vsel %vm890, %v979, 0
      %v987 = vsel %vm890, %v980, 0
      %v990 = vsel %vm890, %v981, 0
      %v993 = vsel %vm890, %v982, 0
      %995 = vmatprep.subr.bf16.mxu0 0
      %996 = vmatpush1.bf16.msra.mxu0 0
      %997 = vmatprep.subr.bf16.mxu0 0
      %998 = vmatpush1.bf16.msra.mxu0 0
      %999 = vmatprep.subr.bf16.mxu0 0
      %1000 = vmatpush1.bf16.msra.mxu0 0
      %1001 = vmatprep.subr.bf16.mxu0 0
      %1002 = vmatpush1.bf16.msra.mxu0 0
      %1003 = vmatprep.subr.bf16.mxu0 0
      %1004 = vmatpush1.bf16.msra.mxu0 %v780
      %1005 = vmatprep.subr.bf16.mxu0 0
      %1006 = vmatpush1.bf16.msra.mxu0 %v779
      %1007 = vmatprep.subr.bf16.mxu0 0
      %1008 = vmatpush1.bf16.msra.mxu0 %v778
      %1009 = vmatprep.subr.bf16.mxu0 0
      %1010 = vmatpush1.bf16.msra.mxu0 %v777
      %1011 = vmatprep.subr.bf16.mxu0 0
      %1012 = vmatpush2.bf16.msra.mxu0 0
      %1013 = vmatprep.subr.bf16.mxu0 0
      %1014 = vmatpush2.bf16.msra.mxu0 0
      %1015 = vmatprep.subr.bf16.mxu0 0
      %1016 = vmatpush2.bf16.msra.mxu0 0
      %1017 = vmatprep.subr.bf16.mxu0 0
      %1018 = vmatpush2.bf16.msra.mxu0 0
      %1019 = vmatprep.subr.bf16.mxu0 0
      %1020 = vmatpush2.bf16.msra.mxu0 0
      %1021 = vmatprep.subr.bf16.mxu0 0
      %1022 = vmatpush2.bf16.msra.mxu0 0
      %1023 = vmatprep.subr.bf16.mxu0 0
      %1024 = vmatpush2.bf16.msra.mxu0 0
      %1025 = vmatprep.subr.bf16.mxu0 0
      %1026 = vmatpush2.bf16.msra.mxu0 0
      %1027 = vmatprep.mubr.bf16.mxu0 0
      %1028 = vmatmul.mubr.bf16.gmra.mxu0 %v984
      %v1029 = vpop.f32.mrf.mxu0
      %v1030 = vadd.f32 0.0, %v1029
      %v1031 = vpop.f32.mrf.mxu0
      %v1032 = vpop.f32.mrf.mxu0
      %v1033 = vadd.f32 0.0, %v1032
      %v1034 = vpop.f32.mrf.mxu0
      %1035 = vmatprep.mubr.bf16.mxu0 0
      %1036 = vmatmul.mubr.bf16.gmra.mxu0 %v987
      %v1037 = vpop.f32.mrf.mxu0
      %v1038 = vadd.f32 0.0, %v1037
      %v1039 = vpop.f32.mrf.mxu0
      %v1040 = vpop.f32.mrf.mxu0
      %v1041 = vadd.f32 0.0, %v1040
      %v1042 = vpop.f32.mrf.mxu0
      %1043 = vmatprep.mubr.bf16.mxu0 0
      %1044 = vmatmul.mubr.bf16.gmra.mxu0 %v990
      %v1045 = vpop.f32.mrf.mxu0
      %v1046 = vadd.f32 0.0, %v1045
      %v1047 = vpop.f32.mrf.mxu0
      %v1048 = vpop.f32.mrf.mxu0
      %v1049 = vadd.f32 0.0, %v1048
      %v1050 = vpop.f32.mrf.mxu0
      %1051 = vmatprep.mubr.bf16.mxu0 0
      %1052 = vmatmul.mubr.bf16.gmra.mxu0 %v993
      %v1053 = vpop.f32.mrf.mxu0
      %v1054 = vadd.f32 0.0, %v1053
      %v1055 = vpop.f32.mrf.mxu0
      %v1056 = vpop.f32.mrf.mxu0
      %v1057 = vadd.f32 0.0, %v1056
      %v1058 = vpop.f32.mrf.mxu0
      %1059 = vdwg.mxu0
      %1064 = vrot.lane.b32.xlu0 %v769, 112
      %v1065 = vpop.permute.xlu0 %1064
      %1066 = vrot.lane.b32.xlu0 %v770, 112
      %v1067 = vpop.permute.xlu0 %1066
      %1068 = vrot.lane.b32.xlu0 %v771, 112
      %v1069 = vpop.permute.xlu0 %1068
      %1070 = vrot.lane.b32.xlu0 %v772, 112
      %v1071 = vpop.permute.xlu0 %1070
      %1076 = vrot.lane.b32.xlu0 %v773, 112
      %v1077 = vpop.permute.xlu0 %1076
      %1078 = vrot.lane.b32.xlu0 %v774, 112
      %v1079 = vpop.permute.xlu0 %1078
      %1080 = vrot.lane.b32.xlu0 %v775, 112
      %v1081 = vpop.permute.xlu0 %1080
      %1082 = vrot.lane.b32.xlu0 %v776, 112
      %v1083 = vpop.permute.xlu0 %1082
      %v1085 = vsel %vm784, %v1065, 0
      %v1088 = vsel %vm784, %v1067, 0
      %v1091 = vsel %vm784, %v1069, 0
      %v1094 = vsel %vm784, %v1071, 0
      %v1097 = vsel %vm784, %v1077, 0
      %v1100 = vsel %vm784, %v1079, 0
      %v1103 = vsel %vm784, %v1081, 0
      %v1106 = vsel %vm784, %v1083, 0
      %1108 = vmatprep.subr.bf16.mxu0 0
      %1109 = vmatpush1.bf16.xpose.msra.mxu0 0
      %1110 = vmatprep.subr.bf16.mxu0 0
      %1111 = vmatpush1.bf16.xpose.msra.mxu0 0
      %1112 = vmatprep.subr.bf16.mxu0 0
      %1113 = vmatpush1.bf16.xpose.msra.mxu0 0
      %1114 = vmatprep.subr.bf16.mxu0 0
      %1115 = vmatpush1.bf16.xpose.msra.mxu0 0
      %1116 = vmatprep.subr.bf16.mxu0 0
      %1117 = vmatpush1.bf16.xpose.msra.mxu0 %v1106
      %1118 = vmatprep.subr.bf16.mxu0 0
      %1119 = vmatpush1.bf16.xpose.msra.mxu0 %v1103
      %1120 = vmatprep.subr.bf16.mxu0 0
      %1121 = vmatpush1.bf16.xpose.msra.mxu0 %v1100
      %1122 = vmatprep.subr.bf16.mxu0 0
      %1123 = vmatpush1.bf16.xpose.msra.mxu0 %v1097
      %1124 = vmatprep.subr.bf16.mxu0 0
      %1125 = vmatpush2.bf16.xpose.msra.mxu0 0
      %1126 = vmatprep.subr.bf16.mxu0 0
      %1127 = vmatpush2.bf16.xpose.msra.mxu0 0
      %1128 = vmatprep.subr.bf16.mxu0 0
      %1129 = vmatpush2.bf16.xpose.msra.mxu0 0
      %1130 = vmatprep.subr.bf16.mxu0 0
      %1131 = vmatpush2.bf16.xpose.msra.mxu0 0
      %1132 = vmatprep.subr.bf16.mxu0 0
      %1133 = vmatpush2.bf16.xpose.msra.mxu0 0
      %1134 = vmatprep.subr.bf16.mxu0 0
      %1135 = vmatpush2.bf16.xpose.msra.mxu0 0
      %1136 = vmatprep.subr.bf16.mxu0 0
      %1137 = vmatpush2.bf16.xpose.msra.mxu0 0
      %1138 = vmatprep.subr.bf16.mxu0 0
      %1139 = vmatpush2.bf16.xpose.msra.mxu0 0
      %1140 = vmatprep.mubr.bf16.mxu0 0
      %1141 = vmatmul.mubr.bf16.gmra.mxu0 %v1085
      %v1142 = vpop.f32.mrf.mxu0
      %v1143 = vadd.f32 0.0, %v1142
      %v1144 = vpop.f32.mrf.mxu0
      %v1145 = vpop.f32.mrf.mxu0
      %v1146 = vadd.f32 0.0, %v1145
      %v1147 = vpop.f32.mrf.mxu0
      %1148 = vmatprep.mubr.bf16.mxu0 0
      %1149 = vmatmul.mubr.bf16.gmra.mxu0 %v1088
      %v1150 = vpop.f32.mrf.mxu0
      %v1151 = vadd.f32 0.0, %v1150
      %v1152 = vpop.f32.mrf.mxu0
      %v1153 = vpop.f32.mrf.mxu0
      %v1154 = vadd.f32 0.0, %v1153
      %v1155 = vpop.f32.mrf.mxu0
      %1156 = vmatprep.mubr.bf16.mxu0 0
      %1157 = vmatmul.mubr.bf16.gmra.mxu0 %v1091
      %v1158 = vpop.f32.mrf.mxu0
      %v1159 = vadd.f32 0.0, %v1158
      %v1160 = vpop.f32.mrf.mxu0
      %v1161 = vpop.f32.mrf.mxu0
      %v1162 = vadd.f32 0.0, %v1161
      %v1163 = vpop.f32.mrf.mxu0
      %1164 = vmatprep.mubr.bf16.mxu0 0
      %1165 = vmatmul.mubr.bf16.gmra.mxu0 %v1094
      %v1166 = vpop.f32.mrf.mxu0
      %v1167 = vadd.f32 0.0, %v1166
      %v1168 = vpop.f32.mrf.mxu0
      %v1169 = vpop.f32.mrf.mxu0
      %v1170 = vadd.f32 0.0, %v1169
      %v1171 = vpop.f32.mrf.mxu0
      %1172 = vdwg.mxu0
      %v1173 = vmul.f32 %v1143, 0.25
      %v1174 = vmul.f32 %v1146, 0.25
      %v1175 = vmul.f32 %v1151, 0.25
      %v1176 = vmul.f32 %v1154, 0.25
      %v1177 = vmul.f32 %v1159, 0.25
      %v1178 = vmul.f32 %v1162, 0.25
      %v1179 = vmul.f32 %v1167, 0.25
      %v1180 = vmul.f32 %v1170, 0.25
      %v1181 = vsel %vm783, %v1173, -1e+30
      %v1182 = vsel %vm783, %v1174, -1e+30
      %v1183 = vsel %vm783, %v1175, -1e+30
      %v1184 = vsel %vm783, %v1176, -1e+30
      %v1185 = vsel %vm783, %v1177, -1e+30
      %v1186 = vsel %vm783, %v1178, -1e+30
      %v1187 = vsel %vm783, %v1179, -1e+30
      %v1188 = vsel %vm783, %v1180, -1e+30
      %v1189 = vsel %vm890, %v1181, -inf
      %1190 = vmax.xlane.f32.xlu0 %v1189
      %v1191 = vpop.xlane.xlu0 %1190
      %v1192 = vsel %vm890, %v1182, -inf
      %1193 = vmax.xlane.f32.xlu0 %v1192
      %v1194 = vpop.xlane.xlu0 %1193
      %v1195 = vsel %vm890, %v1183, -inf
      %1196 = vmax.xlane.f32.xlu0 %v1195
      %v1197 = vpop.xlane.xlu0 %1196
      %v1198 = vsel %vm890, %v1184, -inf
      %1199 = vmax.xlane.f32.xlu0 %v1198
      %v1200 = vpop.xlane.xlu0 %1199
      %v1201 = vsel %vm890, %v1185, -inf
      %1202 = vmax.xlane.f32.xlu0 %v1201
      %v1203 = vpop.xlane.xlu0 %1202
      %v1204 = vsel %vm890, %v1186, -inf
      %1205 = vmax.xlane.f32.xlu0 %v1204
      %v1206 = vpop.xlane.xlu0 %1205
      %v1207 = vsel %vm890, %v1187, -inf
      %1208 = vmax.xlane.f32.xlu0 %v1207
      %v1209 = vpop.xlane.xlu0 %1208
      %v1210 = vsel %vm890, %v1188, -inf
      %1211 = vmax.xlane.f32.xlu0 %v1210
      %v1212 = vpop.xlane.xlu0 %1211
      %v1213 = vsub.f32 %v1181, %v1191
      %v1214 = vsub.f32 %v1182, %v1194
      %v1215 = vsub.f32 %v1183, %v1197
      %v1216 = vsub.f32 %v1184, %v1200
      %v1217 = vsub.f32 %v1185, %v1203
      %v1218 = vsub.f32 %v1186, %v1206
      %v1219 = vsub.f32 %v1187, %v1209
      %v1220 = vsub.f32 %v1188, %v1212
      %v1221 = vmul.f32 %v1213, 1.442695
      %v1222 = vpow.pop %v1221
      %v1223 = vmul.f32 %v1214, 1.442695
      %v1224 = vpow.pop %v1223
      %v1225 = vmul.f32 %v1215, 1.442695
      %v1226 = vpow.pop %v1225
      %v1227 = vmul.f32 %v1216, 1.442695
      %v1228 = vpow.pop %v1227
      %v1229 = vmul.f32 %v1217, 1.442695
      %v1230 = vpow.pop %v1229
      %v1231 = vmul.f32 %v1218, 1.442695
      %v1232 = vpow.pop %v1231
      %v1233 = vmul.f32 %v1219, 1.442695
      %v1234 = vpow.pop %v1233
      %v1235 = vmul.f32 %v1220, 1.442695
      %v1236 = vpow.pop %v1235
      %v1237 = vsel %vm890, %v1222, 0.0
      %1238 = vadd.xlane.f32.xlu0 %v1237
      %v1239 = vpop.xlane.xlu0 %1238
      %v1240 = vsel %vm890, %v1224, 0.0
      %1241 = vadd.xlane.f32.xlu0 %v1240
      %v1242 = vpop.xlane.xlu0 %1241
      %v1243 = vsel %vm890, %v1226, 0.0
      %1244 = vadd.xlane.f32.xlu0 %v1243
      %v1245 = vpop.xlane.xlu0 %1244
      %v1246 = vsel %vm890, %v1228, 0.0
      %1247 = vadd.xlane.f32.xlu0 %v1246
      %v1248 = vpop.xlane.xlu0 %1247
      %v1249 = vsel %vm890, %v1230, 0.0
      %1250 = vadd.xlane.f32.xlu0 %v1249
      %v1251 = vpop.xlane.xlu0 %1250
      %v1252 = vsel %vm890, %v1232, 0.0
      %1253 = vadd.xlane.f32.xlu0 %v1252
      %v1254 = vpop.xlane.xlu0 %1253
      %v1255 = vsel %vm890, %v1234, 0.0
      %1256 = vadd.xlane.f32.xlu0 %v1255
      %v1257 = vpop.xlane.xlu0 %1256
      %v1258 = vsel %vm890, %v1236, 0.0
      %1259 = vadd.xlane.f32.xlu0 %v1258
      %v1260 = vpop.xlane.xlu0 %1259
      %v1261 = vrcp.pop %v1239
      %v1262 = vrcp.pop %v1242
      %v1263 = vrcp.pop %v1245
      %v1264 = vrcp.pop %v1248
      %v1265 = vrcp.pop %v1251
      %v1266 = vrcp.pop %v1254
      %v1267 = vrcp.pop %v1257
      %v1268 = vrcp.pop %v1260
      %v1269 = vmul.f32 %v1222, %v1261
      %v1270 = vmul.f32 %v1224, %v1262
      %v1271 = vmul.f32 %v1226, %v1263
      %v1272 = vmul.f32 %v1228, %v1264
      %v1273 = vmul.f32 %v1230, %v1265
      %v1274 = vmul.f32 %v1232, %v1266
      %v1275 = vmul.f32 %v1234, %v1267
      %v1276 = vmul.f32 %v1236, %v1268
      %v1277 = vpack.c.bf16 %v1270, %v1269
      %v1278 = vpack.c.bf16 %v1272, %v1271
      %v1279 = vpack.c.bf16 %v1274, %v1273
      %v1280 = vpack.c.bf16 %v1276, %v1275
      %1285 = vrot.lane.b32.xlu0 %v777, 112
      %v1286 = vpop.permute.xlu0 %1285
      %1287 = vrot.lane.b32.xlu0 %v778, 112
      %v1288 = vpop.permute.xlu0 %1287
      %1289 = vrot.lane.b32.xlu0 %v779, 112
      %v1290 = vpop.permute.xlu0 %1289
      %1291 = vrot.lane.b32.xlu0 %v780, 112
      %v1292 = vpop.permute.xlu0 %1291
      %v1298 = vsel %vm890, %v1277, 0
      %v1301 = vsel %vm890, %v1278, 0
      %v1304 = vsel %vm890, %v1279, 0
      %v1307 = vsel %vm890, %v1280, 0
      %1309 = vmatprep.subr.bf16.mxu0 0
      %1310 = vmatpush1.bf16.msra.mxu0 0
      %1311 = vmatprep.subr.bf16.mxu0 0
      %1312 = vmatpush1.bf16.msra.mxu0 0
      %1313 = vmatprep.subr.bf16.mxu0 0
      %1314 = vmatpush1.bf16.msra.mxu0 0
      %1315 = vmatprep.subr.bf16.mxu0 0
      %1316 = vmatpush1.bf16.msra.mxu0 0
      %1317 = vmatprep.subr.bf16.mxu0 0
      %1318 = vmatpush1.bf16.msra.mxu0 %v1292
      %1319 = vmatprep.subr.bf16.mxu0 0
      %1320 = vmatpush1.bf16.msra.mxu0 %v1290
      %1321 = vmatprep.subr.bf16.mxu0 0
      %1322 = vmatpush1.bf16.msra.mxu0 %v1288
      %1323 = vmatprep.subr.bf16.mxu0 0
      %1324 = vmatpush1.bf16.msra.mxu0 %v1286
      %1325 = vmatprep.subr.bf16.mxu0 0
      %1326 = vmatpush2.bf16.msra.mxu0 0
      %1327 = vmatprep.subr.bf16.mxu0 0
      %1328 = vmatpush2.bf16.msra.mxu0 0
      %1329 = vmatprep.subr.bf16.mxu0 0
      %1330 = vmatpush2.bf16.msra.mxu0 0
      %1331 = vmatprep.subr.bf16.mxu0 0
      %1332 = vmatpush2.bf16.msra.mxu0 0
      %1333 = vmatprep.subr.bf16.mxu0 0
      %1334 = vmatpush2.bf16.msra.mxu0 0
      %1335 = vmatprep.subr.bf16.mxu0 0
      %1336 = vmatpush2.bf16.msra.mxu0 0
      %1337 = vmatprep.subr.bf16.mxu0 0
      %1338 = vmatpush2.bf16.msra.mxu0 0
      %1339 = vmatprep.subr.bf16.mxu0 0
      %1340 = vmatpush2.bf16.msra.mxu0 0
      %1341 = vmatprep.mubr.bf16.mxu0 0
      %1342 = vmatmul.mubr.bf16.gmra.mxu0 %v1298
      %v1343 = vpop.f32.mrf.mxu0
      %v1344 = vadd.f32 0.0, %v1343
      %v1345 = vpop.f32.mrf.mxu0
      %v1346 = vpop.f32.mrf.mxu0
      %v1347 = vadd.f32 0.0, %v1346
      %v1348 = vpop.f32.mrf.mxu0
      %1349 = vmatprep.mubr.bf16.mxu0 0
      %1350 = vmatmul.mubr.bf16.gmra.mxu0 %v1301
      %v1351 = vpop.f32.mrf.mxu0
      %v1352 = vadd.f32 0.0, %v1351
      %v1353 = vpop.f32.mrf.mxu0
      %v1354 = vpop.f32.mrf.mxu0
      %v1355 = vadd.f32 0.0, %v1354
      %v1356 = vpop.f32.mrf.mxu0
      %1357 = vmatprep.mubr.bf16.mxu0 0
      %1358 = vmatmul.mubr.bf16.gmra.mxu0 %v1304
      %v1359 = vpop.f32.mrf.mxu0
      %v1360 = vadd.f32 0.0, %v1359
      %v1361 = vpop.f32.mrf.mxu0
      %v1362 = vpop.f32.mrf.mxu0
      %v1363 = vadd.f32 0.0, %v1362
      %v1364 = vpop.f32.mrf.mxu0
      %1365 = vmatprep.mubr.bf16.mxu0 0
      %1366 = vmatmul.mubr.bf16.gmra.mxu0 %v1307
      %v1367 = vpop.f32.mrf.mxu0
      %v1368 = vadd.f32 0.0, %v1367
      %v1369 = vpop.f32.mrf.mxu0
      %v1370 = vpop.f32.mrf.mxu0
      %v1371 = vadd.f32 0.0, %v1370
      %v1372 = vpop.f32.mrf.mxu0
      %1373 = vdwg.mxu0
      %1374 = vrot.lane.b32.xlu0 %v769, 96
      %v1375 = vpop.permute.xlu0 %1374
      %1376 = vrot.lane.b32.xlu0 %v770, 96
      %v1377 = vpop.permute.xlu0 %1376
      %1378 = vrot.lane.b32.xlu0 %v771, 96
      %v1379 = vpop.permute.xlu0 %1378
      %1380 = vrot.lane.b32.xlu0 %v772, 96
      %v1381 = vpop.permute.xlu0 %1380
      %1382 = vrot.lane.b32.xlu0 %v773, 96
      %v1383 = vpop.permute.xlu0 %1382
      %1384 = vrot.lane.b32.xlu0 %v774, 96
      %v1385 = vpop.permute.xlu0 %1384
      %1386 = vrot.lane.b32.xlu0 %v775, 96
      %v1387 = vpop.permute.xlu0 %1386
      %1388 = vrot.lane.b32.xlu0 %v776, 96
      %v1389 = vpop.permute.xlu0 %1388
      %v1391 = vsel %vm784, %v1375, 0
      %v1394 = vsel %vm784, %v1377, 0
      %v1397 = vsel %vm784, %v1379, 0
      %v1400 = vsel %vm784, %v1381, 0
      %v1403 = vsel %vm784, %v1383, 0
      %v1406 = vsel %vm784, %v1385, 0
      %v1409 = vsel %vm784, %v1387, 0
      %v1412 = vsel %vm784, %v1389, 0
      %1414 = vmatprep.subr.bf16.mxu0 0
      %1415 = vmatpush1.bf16.xpose.msra.mxu0 0
      %1416 = vmatprep.subr.bf16.mxu0 0
      %1417 = vmatpush1.bf16.xpose.msra.mxu0 0
      %1418 = vmatprep.subr.bf16.mxu0 0
      %1419 = vmatpush1.bf16.xpose.msra.mxu0 0
      %1420 = vmatprep.subr.bf16.mxu0 0
      %1421 = vmatpush1.bf16.xpose.msra.mxu0 0
      %1422 = vmatprep.subr.bf16.mxu0 0
      %1423 = vmatpush1.bf16.xpose.msra.mxu0 %v1412
      %1424 = vmatprep.subr.bf16.mxu0 0
      %1425 = vmatpush1.bf16.xpose.msra.mxu0 %v1409
      %1426 = vmatprep.subr.bf16.mxu0 0
      %1427 = vmatpush1.bf16.xpose.msra.mxu0 %v1406
      %1428 = vmatprep.subr.bf16.mxu0 0
      %1429 = vmatpush1.bf16.xpose.msra.mxu0 %v1403
      %1430 = vmatprep.subr.bf16.mxu0 0
      %1431 = vmatpush2.bf16.xpose.msra.mxu0 0
      %1432 = vmatprep.subr.bf16.mxu0 0
      %1433 = vmatpush2.bf16.xpose.msra.mxu0 0
      %1434 = vmatprep.subr.bf16.mxu0 0
      %1435 = vmatpush2.bf16.xpose.msra.mxu0 0
      %1436 = vmatprep.subr.bf16.mxu0 0
      %1437 = vmatpush2.bf16.xpose.msra.mxu0 0
      %1438 = vmatprep.subr.bf16.mxu0 0
      %1439 = vmatpush2.bf16.xpose.msra.mxu0 0
      %1440 = vmatprep.subr.bf16.mxu0 0
      %1441 = vmatpush2.bf16.xpose.msra.mxu0 0
      %1442 = vmatprep.subr.bf16.mxu0 0
      %1443 = vmatpush2.bf16.xpose.msra.mxu0 0
      %1444 = vmatprep.subr.bf16.mxu0 0
      %1445 = vmatpush2.bf16.xpose.msra.mxu0 0
      %1446 = vmatprep.mubr.bf16.mxu0 0
      %1447 = vmatmul.mubr.bf16.gmra.mxu0 %v1391
      %v1448 = vpop.f32.mrf.mxu0
      %v1449 = vadd.f32 0.0, %v1448
      %v1450 = vpop.f32.mrf.mxu0
      %v1451 = vpop.f32.mrf.mxu0
      %v1452 = vadd.f32 0.0, %v1451
      %v1453 = vpop.f32.mrf.mxu0
      %1454 = vmatprep.mubr.bf16.mxu0 0
      %1455 = vmatmul.mubr.bf16.gmra.mxu0 %v1394
      %v1456 = vpop.f32.mrf.mxu0
      %v1457 = vadd.f32 0.0, %v1456
      %v1458 = vpop.f32.mrf.mxu0
      %v1459 = vpop.f32.mrf.mxu0
      %v1460 = vadd.f32 0.0, %v1459
      %v1461 = vpop.f32.mrf.mxu0
      %1462 = vmatprep.mubr.bf16.mxu0 0
      %1463 = vmatmul.mubr.bf16.gmra.mxu0 %v1397
      %v1464 = vpop.f32.mrf.mxu0
      %v1465 = vadd.f32 0.0, %v1464
      %v1466 = vpop.f32.mrf.mxu0
      %v1467 = vpop.f32.mrf.mxu0
      %v1468 = vadd.f32 0.0, %v1467
      %v1469 = vpop.f32.mrf.mxu0
      %1470 = vmatprep.mubr.bf16.mxu0 0
      %1471 = vmatmul.mubr.bf16.gmra.mxu0 %v1400
      %v1472 = vpop.f32.mrf.mxu0
      %v1473 = vadd.f32 0.0, %v1472
      %v1474 = vpop.f32.mrf.mxu0
      %v1475 = vpop.f32.mrf.mxu0
      %v1476 = vadd.f32 0.0, %v1475
      %v1477 = vpop.f32.mrf.mxu0
      %1478 = vdwg.mxu0
      %v1479 = vmul.f32 %v1449, 0.25
      %v1480 = vmul.f32 %v1452, 0.25
      %v1481 = vmul.f32 %v1457, 0.25
      %v1482 = vmul.f32 %v1460, 0.25
      %v1483 = vmul.f32 %v1465, 0.25
      %v1484 = vmul.f32 %v1468, 0.25
      %v1485 = vmul.f32 %v1473, 0.25
      %v1486 = vmul.f32 %v1476, 0.25
      %v1487 = vsel %vm783, %v1479, -1e+30
      %v1488 = vsel %vm783, %v1480, -1e+30
      %v1489 = vsel %vm783, %v1481, -1e+30
      %v1490 = vsel %vm783, %v1482, -1e+30
      %v1491 = vsel %vm783, %v1483, -1e+30
      %v1492 = vsel %vm783, %v1484, -1e+30
      %v1493 = vsel %vm783, %v1485, -1e+30
      %v1494 = vsel %vm783, %v1486, -1e+30
      %v1495 = vsel %vm890, %v1487, -inf
      %1496 = vmax.xlane.f32.xlu0 %v1495
      %v1497 = vpop.xlane.xlu0 %1496
      %v1498 = vsel %vm890, %v1488, -inf
      %1499 = vmax.xlane.f32.xlu0 %v1498
      %v1500 = vpop.xlane.xlu0 %1499
      %v1501 = vsel %vm890, %v1489, -inf
      %1502 = vmax.xlane.f32.xlu0 %v1501
      %v1503 = vpop.xlane.xlu0 %1502
      %v1504 = vsel %vm890, %v1490, -inf
      %1505 = vmax.xlane.f32.xlu0 %v1504
      %v1506 = vpop.xlane.xlu0 %1505
      %v1507 = vsel %vm890, %v1491, -inf
      %1508 = vmax.xlane.f32.xlu0 %v1507
      %v1509 = vpop.xlane.xlu0 %1508
      %v1510 = vsel %vm890, %v1492, -inf
      %1511 = vmax.xlane.f32.xlu0 %v1510
      %v1512 = vpop.xlane.xlu0 %1511
      %v1513 = vsel %vm890, %v1493, -inf
      %1514 = vmax.xlane.f32.xlu0 %v1513
      %v1515 = vpop.xlane.xlu0 %1514
      %v1516 = vsel %vm890, %v1494, -inf
      %1517 = vmax.xlane.f32.xlu0 %v1516
      %v1518 = vpop.xlane.xlu0 %1517
      %v1519 = vsub.f32 %v1487, %v1497
      %v1520 = vsub.f32 %v1488, %v1500
      %v1521 = vsub.f32 %v1489, %v1503
      %v1522 = vsub.f32 %v1490, %v1506
      %v1523 = vsub.f32 %v1491, %v1509
      %v1524 = vsub.f32 %v1492, %v1512
      %v1525 = vsub.f32 %v1493, %v1515
      %v1526 = vsub.f32 %v1494, %v1518
      %v1527 = vmul.f32 %v1519, 1.442695
      %v1528 = vpow.pop %v1527
      %v1529 = vmul.f32 %v1520, 1.442695
      %v1530 = vpow.pop %v1529
      %v1531 = vmul.f32 %v1521, 1.442695
      %v1532 = vpow.pop %v1531
      %v1533 = vmul.f32 %v1522, 1.442695
      %v1534 = vpow.pop %v1533
      %v1535 = vmul.f32 %v1523, 1.442695
      %v1536 = vpow.pop %v1535
      %v1537 = vmul.f32 %v1524, 1.442695
      %v1538 = vpow.pop %v1537
      %v1539 = vmul.f32 %v1525, 1.442695
      %v1540 = vpow.pop %v1539
      %v1541 = vmul.f32 %v1526, 1.442695
      %v1542 = vpow.pop %v1541
      %v1543 = vsel %vm890, %v1528, 0.0
      %1544 = vadd.xlane.f32.xlu0 %v1543
      %v1545 = vpop.xlane.xlu0 %1544
      %v1546 = vsel %vm890, %v1530, 0.0
      %1547 = vadd.xlane.f32.xlu0 %v1546
      %v1548 = vpop.xlane.xlu0 %1547
      %v1549 = vsel %vm890, %v1532, 0.0
      %1550 = vadd.xlane.f32.xlu0 %v1549
      %v1551 = vpop.xlane.xlu0 %1550
      %v1552 = vsel %vm890, %v1534, 0.0
      %1553 = vadd.xlane.f32.xlu0 %v1552
      %v1554 = vpop.xlane.xlu0 %1553
      %v1555 = vsel %vm890, %v1536, 0.0
      %1556 = vadd.xlane.f32.xlu0 %v1555
      %v1557 = vpop.xlane.xlu0 %1556
      %v1558 = vsel %vm890, %v1538, 0.0
      %1559 = vadd.xlane.f32.xlu0 %v1558
      %v1560 = vpop.xlane.xlu0 %1559
      %v1561 = vsel %vm890, %v1540, 0.0
      %1562 = vadd.xlane.f32.xlu0 %v1561
      %v1563 = vpop.xlane.xlu0 %1562
      %v1564 = vsel %vm890, %v1542, 0.0
      %1565 = vadd.xlane.f32.xlu0 %v1564
      %v1566 = vpop.xlane.xlu0 %1565
      %v1567 = vrcp.pop %v1545
      %v1568 = vrcp.pop %v1548
      %v1569 = vrcp.pop %v1551
      %v1570 = vrcp.pop %v1554
      %v1571 = vrcp.pop %v1557
      %v1572 = vrcp.pop %v1560
      %v1573 = vrcp.pop %v1563
      %v1574 = vrcp.pop %v1566
      %v1575 = vmul.f32 %v1528, %v1567
      %v1576 = vmul.f32 %v1530, %v1568
      %v1577 = vmul.f32 %v1532, %v1569
      %v1578 = vmul.f32 %v1534, %v1570
      %v1579 = vmul.f32 %v1536, %v1571
      %v1580 = vmul.f32 %v1538, %v1572
      %v1581 = vmul.f32 %v1540, %v1573
      %v1582 = vmul.f32 %v1542, %v1574
      %v1583 = vpack.c.bf16 %v1576, %v1575
      %v1584 = vpack.c.bf16 %v1578, %v1577
      %v1585 = vpack.c.bf16 %v1580, %v1579
      %v1586 = vpack.c.bf16 %v1582, %v1581
      %1587 = vrot.lane.b32.xlu0 %v777, 96
      %v1588 = vpop.permute.xlu0 %1587
      %1589 = vrot.lane.b32.xlu0 %v778, 96
      %v1590 = vpop.permute.xlu0 %1589
      %1591 = vrot.lane.b32.xlu0 %v779, 96
      %v1592 = vpop.permute.xlu0 %1591
      %1593 = vrot.lane.b32.xlu0 %v780, 96
      %v1594 = vpop.permute.xlu0 %1593
      %v1600 = vsel %vm890, %v1583, 0
      %v1603 = vsel %vm890, %v1584, 0
      %v1606 = vsel %vm890, %v1585, 0
      %v1609 = vsel %vm890, %v1586, 0
      %1611 = vmatprep.subr.bf16.mxu0 0
      %1612 = vmatpush1.bf16.msra.mxu0 0
      %1613 = vmatprep.subr.bf16.mxu0 0
      %1614 = vmatpush1.bf16.msra.mxu0 0
      %1615 = vmatprep.subr.bf16.mxu0 0
      %1616 = vmatpush1.bf16.msra.mxu0 0
      %1617 = vmatprep.subr.bf16.mxu0 0
      %1618 = vmatpush1.bf16.msra.mxu0 0
      %1619 = vmatprep.subr.bf16.mxu0 0
      %1620 = vmatpush1.bf16.msra.mxu0 %v1594
      %1621 = vmatprep.subr.bf16.mxu0 0
      %1622 = vmatpush1.bf16.msra.mxu0 %v1592
      %1623 = vmatprep.subr.bf16.mxu0 0
      %1624 = vmatpush1.bf16.msra.mxu0 %v1590
      %1625 = vmatprep.subr.bf16.mxu0 0
      %1626 = vmatpush1.bf16.msra.mxu0 %v1588
      %1627 = vmatprep.subr.bf16.mxu0 0
      %1628 = vmatpush2.bf16.msra.mxu0 0
      %1629 = vmatprep.subr.bf16.mxu0 0
      %1630 = vmatpush2.bf16.msra.mxu0 0
      %1631 = vmatprep.subr.bf16.mxu0 0
      %1632 = vmatpush2.bf16.msra.mxu0 0
      %1633 = vmatprep.subr.bf16.mxu0 0
      %1634 = vmatpush2.bf16.msra.mxu0 0
      %1635 = vmatprep.subr.bf16.mxu0 0
      %1636 = vmatpush2.bf16.msra.mxu0 0
      %1637 = vmatprep.subr.bf16.mxu0 0
      %1638 = vmatpush2.bf16.msra.mxu0 0
      %1639 = vmatprep.subr.bf16.mxu0 0
      %1640 = vmatpush2.bf16.msra.mxu0 0
      %1641 = vmatprep.subr.bf16.mxu0 0
      %1642 = vmatpush2.bf16.msra.mxu0 0
      %1643 = vmatprep.mubr.bf16.mxu0 0
      %1644 = vmatmul.mubr.bf16.gmra.mxu0 %v1600
      %v1645 = vpop.f32.mrf.mxu0
      %v1646 = vadd.f32 0.0, %v1645
      %v1647 = vpop.f32.mrf.mxu0
      %v1648 = vpop.f32.mrf.mxu0
      %v1649 = vadd.f32 0.0, %v1648
      %v1650 = vpop.f32.mrf.mxu0
      %1651 = vmatprep.mubr.bf16.mxu0 0
      %1652 = vmatmul.mubr.bf16.gmra.mxu0 %v1603
      %v1653 = vpop.f32.mrf.mxu0
      %v1654 = vadd.f32 0.0, %v1653
      %v1655 = vpop.f32.mrf.mxu0
      %v1656 = vpop.f32.mrf.mxu0
      %v1657 = vadd.f32 0.0, %v1656
      %v1658 = vpop.f32.mrf.mxu0
      %1659 = vmatprep.mubr.bf16.mxu0 0
      %1660 = vmatmul.mubr.bf16.gmra.mxu0 %v1606
      %v1661 = vpop.f32.mrf.mxu0
      %v1662 = vadd.f32 0.0, %v1661
      %v1663 = vpop.f32.mrf.mxu0
      %v1664 = vpop.f32.mrf.mxu0
      %v1665 = vadd.f32 0.0, %v1664
      %v1666 = vpop.f32.mrf.mxu0
      %1667 = vmatprep.mubr.bf16.mxu0 0
      %1668 = vmatmul.mubr.bf16.gmra.mxu0 %v1609
      %v1669 = vpop.f32.mrf.mxu0
      %v1670 = vadd.f32 0.0, %v1669
      %v1671 = vpop.f32.mrf.mxu0
      %v1672 = vpop.f32.mrf.mxu0
      %v1673 = vadd.f32 0.0, %v1672
      %v1674 = vpop.f32.mrf.mxu0
      %1675 = vdwg.mxu0
      %1676 = vrot.lane.b32.xlu0 %v769, 80
      %v1677 = vpop.permute.xlu0 %1676
      %1678 = vrot.lane.b32.xlu0 %v770, 80
      %v1679 = vpop.permute.xlu0 %1678
      %1680 = vrot.lane.b32.xlu0 %v771, 80
      %v1681 = vpop.permute.xlu0 %1680
      %1682 = vrot.lane.b32.xlu0 %v772, 80
      %v1683 = vpop.permute.xlu0 %1682
      %1684 = vrot.lane.b32.xlu0 %v773, 80
      %v1685 = vpop.permute.xlu0 %1684
      %1686 = vrot.lane.b32.xlu0 %v774, 80
      %v1687 = vpop.permute.xlu0 %1686
      %1688 = vrot.lane.b32.xlu0 %v775, 80
      %v1689 = vpop.permute.xlu0 %1688
      %1690 = vrot.lane.b32.xlu0 %v776, 80
      %v1691 = vpop.permute.xlu0 %1690
      %v1693 = vsel %vm784, %v1677, 0
      %v1696 = vsel %vm784, %v1679, 0
      %v1699 = vsel %vm784, %v1681, 0
      %v1702 = vsel %vm784, %v1683, 0
      %v1705 = vsel %vm784, %v1685, 0
      %v1708 = vsel %vm784, %v1687, 0
      %v1711 = vsel %vm784, %v1689, 0
      %v1714 = vsel %vm784, %v1691, 0
      %1716 = vmatprep.subr.bf16.mxu0 0
      %1717 = vmatpush1.bf16.xpose.msra.mxu0 0
      %1718 = vmatprep.subr.bf16.mxu0 0
      %1719 = vmatpush1.bf16.xpose.msra.mxu0 0
      %1720 = vmatprep.subr.bf16.mxu0 0
      %1721 = vmatpush1.bf16.xpose.msra.mxu0 0
      %1722 = vmatprep.subr.bf16.mxu0 0
      %1723 = vmatpush1.bf16.xpose.msra.mxu0 0
      %1724 = vmatprep.subr.bf16.mxu0 0
      %1725 = vmatpush1.bf16.xpose.msra.mxu0 %v1714
      %1726 = vmatprep.subr.bf16.mxu0 0
      %1727 = vmatpush1.bf16.xpose.msra.mxu0 %v1711
      %1728 = vmatprep.subr.bf16.mxu0 0
      %1729 = vmatpush1.bf16.xpose.msra.mxu0 %v1708
      %1730 = vmatprep.subr.bf16.mxu0 0
      %1731 = vmatpush1.bf16.xpose.msra.mxu0 %v1705
      %1732 = vmatprep.subr.bf16.mxu0 0
      %1733 = vmatpush2.bf16.xpose.msra.mxu0 0
      %1734 = vmatprep.subr.bf16.mxu0 0
      %1735 = vmatpush2.bf16.xpose.msra.mxu0 0
      %1736 = vmatprep.subr.bf16.mxu0 0
      %1737 = vmatpush2.bf16.xpose.msra.mxu0 0
      %1738 = vmatprep.subr.bf16.mxu0 0
      %1739 = vmatpush2.bf16.xpose.msra.mxu0 0
      %1740 = vmatprep.subr.bf16.mxu0 0
      %1741 = vmatpush2.bf16.xpose.msra.mxu0 0
      %1742 = vmatprep.subr.bf16.mxu0 0
      %1743 = vmatpush2.bf16.xpose.msra.mxu0 0
      %1744 = vmatprep.subr.bf16.mxu0 0
      %1745 = vmatpush2.bf16.xpose.msra.mxu0 0
      %1746 = vmatprep.subr.bf16.mxu0 0
      %1747 = vmatpush2.bf16.xpose.msra.mxu0 0
      %1748 = vmatprep.mubr.bf16.mxu0 0
      %1749 = vmatmul.mubr.bf16.gmra.mxu0 %v1693
      %v1750 = vpop.f32.mrf.mxu0
      %v1751 = vadd.f32 0.0, %v1750
      %v1752 = vpop.f32.mrf.mxu0
      %v1753 = vpop.f32.mrf.mxu0
      %v1754 = vadd.f32 0.0, %v1753
      %v1755 = vpop.f32.mrf.mxu0
      %1756 = vmatprep.mubr.bf16.mxu0 0
      %1757 = vmatmul.mubr.bf16.gmra.mxu0 %v1696
      %v1758 = vpop.f32.mrf.mxu0
      %v1759 = vadd.f32 0.0, %v1758
      %v1760 = vpop.f32.mrf.mxu0
      %v1761 = vpop.f32.mrf.mxu0
      %v1762 = vadd.f32 0.0, %v1761
      %v1763 = vpop.f32.mrf.mxu0
      %1764 = vmatprep.mubr.bf16.mxu0 0
      %1765 = vmatmul.mubr.bf16.gmra.mxu0 %v1699
      %v1766 = vpop.f32.mrf.mxu0
      %v1767 = vadd.f32 0.0, %v1766
      %v1768 = vpop.f32.mrf.mxu0
      %v1769 = vpop.f32.mrf.mxu0
      %v1770 = vadd.f32 0.0, %v1769
      %v1771 = vpop.f32.mrf.mxu0
      %1772 = vmatprep.mubr.bf16.mxu0 0
      %1773 = vmatmul.mubr.bf16.gmra.mxu0 %v1702
      %v1774 = vpop.f32.mrf.mxu0
      %v1775 = vadd.f32 0.0, %v1774
      %v1776 = vpop.f32.mrf.mxu0
      %v1777 = vpop.f32.mrf.mxu0
      %v1778 = vadd.f32 0.0, %v1777
      %v1779 = vpop.f32.mrf.mxu0
      %1780 = vdwg.mxu0
      %v1781 = vmul.f32 %v1751, 0.25
      %v1782 = vmul.f32 %v1754, 0.25
      %v1783 = vmul.f32 %v1759, 0.25
      %v1784 = vmul.f32 %v1762, 0.25
      %v1785 = vmul.f32 %v1767, 0.25
      %v1786 = vmul.f32 %v1770, 0.25
      %v1787 = vmul.f32 %v1775, 0.25
      %v1788 = vmul.f32 %v1778, 0.25
      %v1789 = vsel %vm783, %v1781, -1e+30
      %v1790 = vsel %vm783, %v1782, -1e+30
      %v1791 = vsel %vm783, %v1783, -1e+30
      %v1792 = vsel %vm783, %v1784, -1e+30
      %v1793 = vsel %vm783, %v1785, -1e+30
      %v1794 = vsel %vm783, %v1786, -1e+30
      %v1795 = vsel %vm783, %v1787, -1e+30
      %v1796 = vsel %vm783, %v1788, -1e+30
      %v1797 = vsel %vm890, %v1789, -inf
      %1798 = vmax.xlane.f32.xlu0 %v1797
      %v1799 = vpop.xlane.xlu0 %1798
      %v1800 = vsel %vm890, %v1790, -inf
      %1801 = vmax.xlane.f32.xlu0 %v1800
      %v1802 = vpop.xlane.xlu0 %1801
      %v1803 = vsel %vm890, %v1791, -inf
      %1804 = vmax.xlane.f32.xlu0 %v1803
      %v1805 = vpop.xlane.xlu0 %1804
      %v1806 = vsel %vm890, %v1792, -inf
      %1807 = vmax.xlane.f32.xlu0 %v1806
      %v1808 = vpop.xlane.xlu0 %1807
      %v1809 = vsel %vm890, %v1793, -inf
      %1810 = vmax.xlane.f32.xlu0 %v1809
      %v1811 = vpop.xlane.xlu0 %1810
      %v1812 = vsel %vm890, %v1794, -inf
      %1813 = vmax.xlane.f32.xlu0 %v1812
      %v1814 = vpop.xlane.xlu0 %1813
      %v1815 = vsel %vm890, %v1795, -inf
      %1816 = vmax.xlane.f32.xlu0 %v1815
      %v1817 = vpop.xlane.xlu0 %1816
      %v1818 = vsel %vm890, %v1796, -inf
      %1819 = vmax.xlane.f32.xlu0 %v1818
      %v1820 = vpop.xlane.xlu0 %1819
      %v1821 = vsub.f32 %v1789, %v1799
      %v1822 = vsub.f32 %v1790, %v1802
      %v1823 = vsub.f32 %v1791, %v1805
      %v1824 = vsub.f32 %v1792, %v1808
      %v1825 = vsub.f32 %v1793, %v1811
      %v1826 = vsub.f32 %v1794, %v1814
      %v1827 = vsub.f32 %v1795, %v1817
      %v1828 = vsub.f32 %v1796, %v1820
      %v1829 = vmul.f32 %v1821, 1.442695
      %v1830 = vpow.pop %v1829
      %v1831 = vmul.f32 %v1822, 1.442695
      %v1832 = vpow.pop %v1831
      %v1833 = vmul.f32 %v1823, 1.442695
      %v1834 = vpow.pop %v1833
      %v1835 = vmul.f32 %v1824, 1.442695
      %v1836 = vpow.pop %v1835
      %v1837 = vmul.f32 %v1825, 1.442695
      %v1838 = vpow.pop %v1837
      %v1839 = vmul.f32 %v1826, 1.442695
      %v1840 = vpow.pop %v1839
      %v1841 = vmul.f32 %v1827, 1.442695
      %v1842 = vpow.pop %v1841
      %v1843 = vmul.f32 %v1828, 1.442695
      %v1844 = vpow.pop %v1843
      %v1845 = vsel %vm890, %v1830, 0.0
      %1846 = vadd.xlane.f32.xlu0 %v1845
      %v1847 = vpop.xlane.xlu0 %1846
      %v1848 = vsel %vm890, %v1832, 0.0
      %1849 = vadd.xlane.f32.xlu0 %v1848
      %v1850 = vpop.xlane.xlu0 %1849
      %v1851 = vsel %vm890, %v1834, 0.0
      %1852 = vadd.xlane.f32.xlu0 %v1851
      %v1853 = vpop.xlane.xlu0 %1852
      %v1854 = vsel %vm890, %v1836, 0.0
      %1855 = vadd.xlane.f32.xlu0 %v1854
      %v1856 = vpop.xlane.xlu0 %1855
      %v1857 = vsel %vm890, %v1838, 0.0
      %1858 = vadd.xlane.f32.xlu0 %v1857
      %v1859 = vpop.xlane.xlu0 %1858
      %v1860 = vsel %vm890, %v1840, 0.0
      %1861 = vadd.xlane.f32.xlu0 %v1860
      %v1862 = vpop.xlane.xlu0 %1861
      %v1863 = vsel %vm890, %v1842, 0.0
      %1864 = vadd.xlane.f32.xlu0 %v1863
      %v1865 = vpop.xlane.xlu0 %1864
      %v1866 = vsel %vm890, %v1844, 0.0
      %1867 = vadd.xlane.f32.xlu0 %v1866
      %v1868 = vpop.xlane.xlu0 %1867
      %v1869 = vrcp.pop %v1847
      %v1870 = vrcp.pop %v1850
      %v1871 = vrcp.pop %v1853
      %v1872 = vrcp.pop %v1856
      %v1873 = vrcp.pop %v1859
      %v1874 = vrcp.pop %v1862
      %v1875 = vrcp.pop %v1865
      %v1876 = vrcp.pop %v1868
      %v1877 = vmul.f32 %v1830, %v1869
      %v1878 = vmul.f32 %v1832, %v1870
      %v1879 = vmul.f32 %v1834, %v1871
      %v1880 = vmul.f32 %v1836, %v1872
      %v1881 = vmul.f32 %v1838, %v1873
      %v1882 = vmul.f32 %v1840, %v1874
      %v1883 = vmul.f32 %v1842, %v1875
      %v1884 = vmul.f32 %v1844, %v1876
      %v1885 = vpack.c.bf16 %v1878, %v1877
      %v1886 = vpack.c.bf16 %v1880, %v1879
      %v1887 = vpack.c.bf16 %v1882, %v1881
      %v1888 = vpack.c.bf16 %v1884, %v1883
      %1889 = vrot.lane.b32.xlu0 %v777, 80
      %v1890 = vpop.permute.xlu0 %1889
      %1891 = vrot.lane.b32.xlu0 %v778, 80
      %v1892 = vpop.permute.xlu0 %1891
      %1893 = vrot.lane.b32.xlu0 %v779, 80
      %v1894 = vpop.permute.xlu0 %1893
      %1895 = vrot.lane.b32.xlu0 %v780, 80
      %v1896 = vpop.permute.xlu0 %1895
      %v1902 = vsel %vm890, %v1885, 0
      %v1905 = vsel %vm890, %v1886, 0
      %v1908 = vsel %vm890, %v1887, 0
      %v1911 = vsel %vm890, %v1888, 0
      %1913 = vmatprep.subr.bf16.mxu0 0
      %1914 = vmatpush1.bf16.msra.mxu0 0
      %1915 = vmatprep.subr.bf16.mxu0 0
      %1916 = vmatpush1.bf16.msra.mxu0 0
      %1917 = vmatprep.subr.bf16.mxu0 0
      %1918 = vmatpush1.bf16.msra.mxu0 0
      %1919 = vmatprep.subr.bf16.mxu0 0
      %1920 = vmatpush1.bf16.msra.mxu0 0
      %1921 = vmatprep.subr.bf16.mxu0 0
      %1922 = vmatpush1.bf16.msra.mxu0 %v1896
      %1923 = vmatprep.subr.bf16.mxu0 0
      %1924 = vmatpush1.bf16.msra.mxu0 %v1894
      %1925 = vmatprep.subr.bf16.mxu0 0
      %1926 = vmatpush1.bf16.msra.mxu0 %v1892
      %1927 = vmatprep.subr.bf16.mxu0 0
      %1928 = vmatpush1.bf16.msra.mxu0 %v1890
      %1929 = vmatprep.subr.bf16.mxu0 0
      %1930 = vmatpush2.bf16.msra.mxu0 0
      %1931 = vmatprep.subr.bf16.mxu0 0
      %1932 = vmatpush2.bf16.msra.mxu0 0
      %1933 = vmatprep.subr.bf16.mxu0 0
      %1934 = vmatpush2.bf16.msra.mxu0 0
      %1935 = vmatprep.subr.bf16.mxu0 0
      %1936 = vmatpush2.bf16.msra.mxu0 0
      %1937 = vmatprep.subr.bf16.mxu0 0
      %1938 = vmatpush2.bf16.msra.mxu0 0
      %1939 = vmatprep.subr.bf16.mxu0 0
      %1940 = vmatpush2.bf16.msra.mxu0 0
      %1941 = vmatprep.subr.bf16.mxu0 0
      %1942 = vmatpush2.bf16.msra.mxu0 0
      %1943 = vmatprep.subr.bf16.mxu0 0
      %1944 = vmatpush2.bf16.msra.mxu0 0
      %1945 = vmatprep.mubr.bf16.mxu0 0
      %1946 = vmatmul.mubr.bf16.gmra.mxu0 %v1902
      %v1947 = vpop.f32.mrf.mxu0
      %v1948 = vadd.f32 0.0, %v1947
      %v1949 = vpop.f32.mrf.mxu0
      %v1950 = vpop.f32.mrf.mxu0
      %v1951 = vadd.f32 0.0, %v1950
      %v1952 = vpop.f32.mrf.mxu0
      %1953 = vmatprep.mubr.bf16.mxu0 0
      %1954 = vmatmul.mubr.bf16.gmra.mxu0 %v1905
      %v1955 = vpop.f32.mrf.mxu0
      %v1956 = vadd.f32 0.0, %v1955
      %v1957 = vpop.f32.mrf.mxu0
      %v1958 = vpop.f32.mrf.mxu0
      %v1959 = vadd.f32 0.0, %v1958
      %v1960 = vpop.f32.mrf.mxu0
      %1961 = vmatprep.mubr.bf16.mxu0 0
      %1962 = vmatmul.mubr.bf16.gmra.mxu0 %v1908
      %v1963 = vpop.f32.mrf.mxu0
      %v1964 = vadd.f32 0.0, %v1963
      %v1965 = vpop.f32.mrf.mxu0
      %v1966 = vpop.f32.mrf.mxu0
      %v1967 = vadd.f32 0.0, %v1966
      %v1968 = vpop.f32.mrf.mxu0
      %1969 = vmatprep.mubr.bf16.mxu0 0
      %1970 = vmatmul.mubr.bf16.gmra.mxu0 %v1911
      %v1971 = vpop.f32.mrf.mxu0
      %v1972 = vadd.f32 0.0, %v1971
      %v1973 = vpop.f32.mrf.mxu0
      %v1974 = vpop.f32.mrf.mxu0
      %v1975 = vadd.f32 0.0, %v1974
      %v1976 = vpop.f32.mrf.mxu0
      %1977 = vdwg.mxu0
      %1978 = vrot.lane.b32.xlu0 %v769, 64
      %v1979 = vpop.permute.xlu0 %1978
      %1980 = vrot.lane.b32.xlu0 %v770, 64
      %v1981 = vpop.permute.xlu0 %1980
      %1982 = vrot.lane.b32.xlu0 %v771, 64
      %v1983 = vpop.permute.xlu0 %1982
      %1984 = vrot.lane.b32.xlu0 %v772, 64
      %v1985 = vpop.permute.xlu0 %1984
      %1986 = vrot.lane.b32.xlu0 %v773, 64
      %v1987 = vpop.permute.xlu0 %1986
      %1988 = vrot.lane.b32.xlu0 %v774, 64
      %v1989 = vpop.permute.xlu0 %1988
      %1990 = vrot.lane.b32.xlu0 %v775, 64
      %v1991 = vpop.permute.xlu0 %1990
      %1992 = vrot.lane.b32.xlu0 %v776, 64
      %v1993 = vpop.permute.xlu0 %1992
      %v1995 = vsel %vm784, %v1979, 0
      %v1998 = vsel %vm784, %v1981, 0
      %v2001 = vsel %vm784, %v1983, 0
      %v2004 = vsel %vm784, %v1985, 0
      %v2007 = vsel %vm784, %v1987, 0
      %v2010 = vsel %vm784, %v1989, 0
      %v2013 = vsel %vm784, %v1991, 0
      %v2016 = vsel %vm784, %v1993, 0
      %2018 = vmatprep.subr.bf16.mxu0 0
      %2019 = vmatpush1.bf16.xpose.msra.mxu0 0
      %2020 = vmatprep.subr.bf16.mxu0 0
      %2021 = vmatpush1.bf16.xpose.msra.mxu0 0
      %2022 = vmatprep.subr.bf16.mxu0 0
      %2023 = vmatpush1.bf16.xpose.msra.mxu0 0
      %2024 = vmatprep.subr.bf16.mxu0 0
      %2025 = vmatpush1.bf16.xpose.msra.mxu0 0
      %2026 = vmatprep.subr.bf16.mxu0 0
      %2027 = vmatpush1.bf16.xpose.msra.mxu0 %v2016
      %2028 = vmatprep.subr.bf16.mxu0 0
      %2029 = vmatpush1.bf16.xpose.msra.mxu0 %v2013
      %2030 = vmatprep.subr.bf16.mxu0 0
      %2031 = vmatpush1.bf16.xpose.msra.mxu0 %v2010
      %2032 = vmatprep.subr.bf16.mxu0 0
      %2033 = vmatpush1.bf16.xpose.msra.mxu0 %v2007
      %2034 = vmatprep.subr.bf16.mxu0 0
      %2035 = vmatpush2.bf16.xpose.msra.mxu0 0
      %2036 = vmatprep.subr.bf16.mxu0 0
      %2037 = vmatpush2.bf16.xpose.msra.mxu0 0
      %2038 = vmatprep.subr.bf16.mxu0 0
      %2039 = vmatpush2.bf16.xpose.msra.mxu0 0
      %2040 = vmatprep.subr.bf16.mxu0 0
      %2041 = vmatpush2.bf16.xpose.msra.mxu0 0
      %2042 = vmatprep.subr.bf16.mxu0 0
      %2043 = vmatpush2.bf16.xpose.msra.mxu0 0
      %2044 = vmatprep.subr.bf16.mxu0 0
      %2045 = vmatpush2.bf16.xpose.msra.mxu0 0
      %2046 = vmatprep.subr.bf16.mxu0 0
      %2047 = vmatpush2.bf16.xpose.msra.mxu0 0
      %2048 = vmatprep.subr.bf16.mxu0 0
      %2049 = vmatpush2.bf16.xpose.msra.mxu0 0
      %2050 = vmatprep.mubr.bf16.mxu0 0
      %2051 = vmatmul.mubr.bf16.gmra.mxu0 %v1995
      %v2052 = vpop.f32.mrf.mxu0
      %v2053 = vadd.f32 0.0, %v2052
      %v2054 = vpop.f32.mrf.mxu0
      %v2055 = vpop.f32.mrf.mxu0
      %v2056 = vadd.f32 0.0, %v2055
      %v2057 = vpop.f32.mrf.mxu0
      %2058 = vmatprep.mubr.bf16.mxu0 0
      %2059 = vmatmul.mubr.bf16.gmra.mxu0 %v1998
      %v2060 = vpop.f32.mrf.mxu0
      %v2061 = vadd.f32 0.0, %v2060
      %v2062 = vpop.f32.mrf.mxu0
      %v2063 = vpop.f32.mrf.mxu0
      %v2064 = vadd.f32 0.0, %v2063
      %v2065 = vpop.f32.mrf.mxu0
      %2066 = vmatprep.mubr.bf16.mxu0 0
      %2067 = vmatmul.mubr.bf16.gmra.mxu0 %v2001
      %v2068 = vpop.f32.mrf.mxu0
      %v2069 = vadd.f32 0.0, %v2068
      %v2070 = vpop.f32.mrf.mxu0
      %v2071 = vpop.f32.mrf.mxu0
      %v2072 = vadd.f32 0.0, %v2071
      %v2073 = vpop.f32.mrf.mxu0
      %2074 = vmatprep.mubr.bf16.mxu0 0
      %2075 = vmatmul.mubr.bf16.gmra.mxu0 %v2004
      %v2076 = vpop.f32.mrf.mxu0
      %v2077 = vadd.f32 0.0, %v2076
      %v2078 = vpop.f32.mrf.mxu0
      %v2079 = vpop.f32.mrf.mxu0
      %v2080 = vadd.f32 0.0, %v2079
      %v2081 = vpop.f32.mrf.mxu0
      %2082 = vdwg.mxu0
      %v2083 = vmul.f32 %v2053, 0.25
      %v2084 = vmul.f32 %v2056, 0.25
      %v2085 = vmul.f32 %v2061, 0.25
      %v2086 = vmul.f32 %v2064, 0.25
      %v2087 = vmul.f32 %v2069, 0.25
      %v2088 = vmul.f32 %v2072, 0.25
      %v2089 = vmul.f32 %v2077, 0.25
      %v2090 = vmul.f32 %v2080, 0.25
      %v2091 = vsel %vm783, %v2083, -1e+30
      %v2092 = vsel %vm783, %v2084, -1e+30
      %v2093 = vsel %vm783, %v2085, -1e+30
      %v2094 = vsel %vm783, %v2086, -1e+30
      %v2095 = vsel %vm783, %v2087, -1e+30
      %v2096 = vsel %vm783, %v2088, -1e+30
      %v2097 = vsel %vm783, %v2089, -1e+30
      %v2098 = vsel %vm783, %v2090, -1e+30
      %v2099 = vsel %vm890, %v2091, -inf
      %2100 = vmax.xlane.f32.xlu0 %v2099
      %v2101 = vpop.xlane.xlu0 %2100
      %v2102 = vsel %vm890, %v2092, -inf
      %2103 = vmax.xlane.f32.xlu0 %v2102
      %v2104 = vpop.xlane.xlu0 %2103
      %v2105 = vsel %vm890, %v2093, -inf
      %2106 = vmax.xlane.f32.xlu0 %v2105
      %v2107 = vpop.xlane.xlu0 %2106
      %v2108 = vsel %vm890, %v2094, -inf
      %2109 = vmax.xlane.f32.xlu0 %v2108
      %v2110 = vpop.xlane.xlu0 %2109
      %v2111 = vsel %vm890, %v2095, -inf
      %2112 = vmax.xlane.f32.xlu0 %v2111
      %v2113 = vpop.xlane.xlu0 %2112
      %v2114 = vsel %vm890, %v2096, -inf
      %2115 = vmax.xlane.f32.xlu0 %v2114
      %v2116 = vpop.xlane.xlu0 %2115
      %v2117 = vsel %vm890, %v2097, -inf
      %2118 = vmax.xlane.f32.xlu0 %v2117
      %v2119 = vpop.xlane.xlu0 %2118
      %v2120 = vsel %vm890, %v2098, -inf
      %2121 = vmax.xlane.f32.xlu0 %v2120
      %v2122 = vpop.xlane.xlu0 %2121
      %v2123 = vsub.f32 %v2091, %v2101
      %v2124 = vsub.f32 %v2092, %v2104
      %v2125 = vsub.f32 %v2093, %v2107
      %v2126 = vsub.f32 %v2094, %v2110
      %v2127 = vsub.f32 %v2095, %v2113
      %v2128 = vsub.f32 %v2096, %v2116
      %v2129 = vsub.f32 %v2097, %v2119
      %v2130 = vsub.f32 %v2098, %v2122
      %v2131 = vmul.f32 %v2123, 1.442695
      %v2132 = vpow.pop %v2131
      %v2133 = vmul.f32 %v2124, 1.442695
      %v2134 = vpow.pop %v2133
      %v2135 = vmul.f32 %v2125, 1.442695
      %v2136 = vpow.pop %v2135
      %v2137 = vmul.f32 %v2126, 1.442695
      %v2138 = vpow.pop %v2137
      %v2139 = vmul.f32 %v2127, 1.442695
      %v2140 = vpow.pop %v2139
      %v2141 = vmul.f32 %v2128, 1.442695
      %v2142 = vpow.pop %v2141
      %v2143 = vmul.f32 %v2129, 1.442695
      %v2144 = vpow.pop %v2143
      %v2145 = vmul.f32 %v2130, 1.442695
      %v2146 = vpow.pop %v2145
      %v2147 = vsel %vm890, %v2132, 0.0
      %2148 = vadd.xlane.f32.xlu0 %v2147
      %v2149 = vpop.xlane.xlu0 %2148
      %v2150 = vsel %vm890, %v2134, 0.0
      %2151 = vadd.xlane.f32.xlu0 %v2150
      %v2152 = vpop.xlane.xlu0 %2151
      %v2153 = vsel %vm890, %v2136, 0.0
      %2154 = vadd.xlane.f32.xlu0 %v2153
      %v2155 = vpop.xlane.xlu0 %2154
      %v2156 = vsel %vm890, %v2138, 0.0
      %2157 = vadd.xlane.f32.xlu0 %v2156
      %v2158 = vpop.xlane.xlu0 %2157
      %v2159 = vsel %vm890, %v2140, 0.0
      %2160 = vadd.xlane.f32.xlu0 %v2159
      %v2161 = vpop.xlane.xlu0 %2160
      %v2162 = vsel %vm890, %v2142, 0.0
      %2163 = vadd.xlane.f32.xlu0 %v2162
      %v2164 = vpop.xlane.xlu0 %2163
      %v2165 = vsel %vm890, %v2144, 0.0
      %2166 = vadd.xlane.f32.xlu0 %v2165
      %v2167 = vpop.xlane.xlu0 %2166
      %v2168 = vsel %vm890, %v2146, 0.0
      %2169 = vadd.xlane.f32.xlu0 %v2168
      %v2170 = vpop.xlane.xlu0 %2169
      %v2171 = vrcp.pop %v2149
      %v2172 = vrcp.pop %v2152
      %v2173 = vrcp.pop %v2155
      %v2174 = vrcp.pop %v2158
      %v2175 = vrcp.pop %v2161
      %v2176 = vrcp.pop %v2164
      %v2177 = vrcp.pop %v2167
      %v2178 = vrcp.pop %v2170
      %v2179 = vmul.f32 %v2132, %v2171
      %v2180 = vmul.f32 %v2134, %v2172
      %v2181 = vmul.f32 %v2136, %v2173
      %v2182 = vmul.f32 %v2138, %v2174
      %v2183 = vmul.f32 %v2140, %v2175
      %v2184 = vmul.f32 %v2142, %v2176
      %v2185 = vmul.f32 %v2144, %v2177
      %v2186 = vmul.f32 %v2146, %v2178
      %v2187 = vpack.c.bf16 %v2180, %v2179
      %v2188 = vpack.c.bf16 %v2182, %v2181
      %v2189 = vpack.c.bf16 %v2184, %v2183
      %v2190 = vpack.c.bf16 %v2186, %v2185
      %2191 = vrot.lane.b32.xlu0 %v777, 64
      %v2192 = vpop.permute.xlu0 %2191
      %2193 = vrot.lane.b32.xlu0 %v778, 64
      %v2194 = vpop.permute.xlu0 %2193
      %2195 = vrot.lane.b32.xlu0 %v779, 64
      %v2196 = vpop.permute.xlu0 %2195
      %2197 = vrot.lane.b32.xlu0 %v780, 64
      %v2198 = vpop.permute.xlu0 %2197
      %v2204 = vsel %vm890, %v2187, 0
      %v2207 = vsel %vm890, %v2188, 0
      %v2210 = vsel %vm890, %v2189, 0
      %v2213 = vsel %vm890, %v2190, 0
      %2215 = vmatprep.subr.bf16.mxu0 0
      %2216 = vmatpush1.bf16.msra.mxu0 0
      %2217 = vmatprep.subr.bf16.mxu0 0
      %2218 = vmatpush1.bf16.msra.mxu0 0
      %2219 = vmatprep.subr.bf16.mxu0 0
      %2220 = vmatpush1.bf16.msra.mxu0 0
      %2221 = vmatprep.subr.bf16.mxu0 0
      %2222 = vmatpush1.bf16.msra.mxu0 0
      %2223 = vmatprep.subr.bf16.mxu0 0
      %2224 = vmatpush1.bf16.msra.mxu0 %v2198
      %2225 = vmatprep.subr.bf16.mxu0 0
      %2226 = vmatpush1.bf16.msra.mxu0 %v2196
      %2227 = vmatprep.subr.bf16.mxu0 0
      %2228 = vmatpush1.bf16.msra.mxu0 %v2194
      %2229 = vmatprep.subr.bf16.mxu0 0
      %2230 = vmatpush1.bf16.msra.mxu0 %v2192
      %2231 = vmatprep.subr.bf16.mxu0 0
      %2232 = vmatpush2.bf16.msra.mxu0 0
      %2233 = vmatprep.subr.bf16.mxu0 0
      %2234 = vmatpush2.bf16.msra.mxu0 0
      %2235 = vmatprep.subr.bf16.mxu0 0
      %2236 = vmatpush2.bf16.msra.mxu0 0
      %2237 = vmatprep.subr.bf16.mxu0 0
      %2238 = vmatpush2.bf16.msra.mxu0 0
      %2239 = vmatprep.subr.bf16.mxu0 0
      %2240 = vmatpush2.bf16.msra.mxu0 0
      %2241 = vmatprep.subr.bf16.mxu0 0
      %2242 = vmatpush2.bf16.msra.mxu0 0
      %2243 = vmatprep.subr.bf16.mxu0 0
      %2244 = vmatpush2.bf16.msra.mxu0 0
      %2245 = vmatprep.subr.bf16.mxu0 0
      %2246 = vmatpush2.bf16.msra.mxu0 0
      %2247 = vmatprep.mubr.bf16.mxu0 0
      %2248 = vmatmul.mubr.bf16.gmra.mxu0 %v2204
      %v2249 = vpop.f32.mrf.mxu0
      %v2250 = vadd.f32 0.0, %v2249
      %v2251 = vpop.f32.mrf.mxu0
      %v2252 = vpop.f32.mrf.mxu0
      %v2253 = vadd.f32 0.0, %v2252
      %v2254 = vpop.f32.mrf.mxu0
      %2255 = vmatprep.mubr.bf16.mxu0 0
      %2256 = vmatmul.mubr.bf16.gmra.mxu0 %v2207
      %v2257 = vpop.f32.mrf.mxu0
      %v2258 = vadd.f32 0.0, %v2257
      %v2259 = vpop.f32.mrf.mxu0
      %v2260 = vpop.f32.mrf.mxu0
      %v2261 = vadd.f32 0.0, %v2260
      %v2262 = vpop.f32.mrf.mxu0
      %2263 = vmatprep.mubr.bf16.mxu0 0
      %2264 = vmatmul.mubr.bf16.gmra.mxu0 %v2210
      %v2265 = vpop.f32.mrf.mxu0
      %v2266 = vadd.f32 0.0, %v2265
      %v2267 = vpop.f32.mrf.mxu0
      %v2268 = vpop.f32.mrf.mxu0
      %v2269 = vadd.f32 0.0, %v2268
      %v2270 = vpop.f32.mrf.mxu0
      %2271 = vmatprep.mubr.bf16.mxu0 0
      %2272 = vmatmul.mubr.bf16.gmra.mxu0 %v2213
      %v2273 = vpop.f32.mrf.mxu0
      %v2274 = vadd.f32 0.0, %v2273
      %v2275 = vpop.f32.mrf.mxu0
      %v2276 = vpop.f32.mrf.mxu0
      %v2277 = vadd.f32 0.0, %v2276
      %v2278 = vpop.f32.mrf.mxu0
      %2279 = vdwg.mxu0
      %2280 = vrot.lane.b32.xlu0 %v769, 48
      %v2281 = vpop.permute.xlu0 %2280
      %2282 = vrot.lane.b32.xlu0 %v770, 48
      %v2283 = vpop.permute.xlu0 %2282
      %2284 = vrot.lane.b32.xlu0 %v771, 48
      %v2285 = vpop.permute.xlu0 %2284
      %2286 = vrot.lane.b32.xlu0 %v772, 48
      %v2287 = vpop.permute.xlu0 %2286
      %2288 = vrot.lane.b32.xlu0 %v773, 48
      %v2289 = vpop.permute.xlu0 %2288
      %2290 = vrot.lane.b32.xlu0 %v774, 48
      %v2291 = vpop.permute.xlu0 %2290
      %2292 = vrot.lane.b32.xlu0 %v775, 48
      %v2293 = vpop.permute.xlu0 %2292
      %2294 = vrot.lane.b32.xlu0 %v776, 48
      %v2295 = vpop.permute.xlu0 %2294
      %v2297 = vsel %vm784, %v2281, 0
      %v2300 = vsel %vm784, %v2283, 0
      %v2303 = vsel %vm784, %v2285, 0
      %v2306 = vsel %vm784, %v2287, 0
      %v2309 = vsel %vm784, %v2289, 0
      %v2312 = vsel %vm784, %v2291, 0
      %v2315 = vsel %vm784, %v2293, 0
      %v2318 = vsel %vm784, %v2295, 0
      %2320 = vmatprep.subr.bf16.mxu0 0
      %2321 = vmatpush1.bf16.xpose.msra.mxu0 0
      %2322 = vmatprep.subr.bf16.mxu0 0
      %2323 = vmatpush1.bf16.xpose.msra.mxu0 0
      %2324 = vmatprep.subr.bf16.mxu0 0
      %2325 = vmatpush1.bf16.xpose.msra.mxu0 0
      %2326 = vmatprep.subr.bf16.mxu0 0
      %2327 = vmatpush1.bf16.xpose.msra.mxu0 0
      %2328 = vmatprep.subr.bf16.mxu0 0
      %2329 = vmatpush1.bf16.xpose.msra.mxu0 %v2318
      %2330 = vmatprep.subr.bf16.mxu0 0
      %2331 = vmatpush1.bf16.xpose.msra.mxu0 %v2315
      %2332 = vmatprep.subr.bf16.mxu0 0
      %2333 = vmatpush1.bf16.xpose.msra.mxu0 %v2312
      %2334 = vmatprep.subr.bf16.mxu0 0
      %2335 = vmatpush1.bf16.xpose.msra.mxu0 %v2309
      %2336 = vmatprep.subr.bf16.mxu0 0
      %2337 = vmatpush2.bf16.xpose.msra.mxu0 0
      %2338 = vmatprep.subr.bf16.mxu0 0
      %2339 = vmatpush2.bf16.xpose.msra.mxu0 0
      %2340 = vmatprep.subr.bf16.mxu0 0
      %2341 = vmatpush2.bf16.xpose.msra.mxu0 0
      %2342 = vmatprep.subr.bf16.mxu0 0
      %2343 = vmatpush2.bf16.xpose.msra.mxu0 0
      %2344 = vmatprep.subr.bf16.mxu0 0
      %2345 = vmatpush2.bf16.xpose.msra.mxu0 0
      %2346 = vmatprep.subr.bf16.mxu0 0
      %2347 = vmatpush2.bf16.xpose.msra.mxu0 0
      %2348 = vmatprep.subr.bf16.mxu0 0
      %2349 = vmatpush2.bf16.xpose.msra.mxu0 0
      %2350 = vmatprep.subr.bf16.mxu0 0
      %2351 = vmatpush2.bf16.xpose.msra.mxu0 0
      %2352 = vmatprep.mubr.bf16.mxu0 0
      %2353 = vmatmul.mubr.bf16.gmra.mxu0 %v2297
      %v2354 = vpop.f32.mrf.mxu0
      %v2355 = vadd.f32 0.0, %v2354
      %v2356 = vpop.f32.mrf.mxu0
      %v2357 = vpop.f32.mrf.mxu0
      %v2358 = vadd.f32 0.0, %v2357
      %v2359 = vpop.f32.mrf.mxu0
      %2360 = vmatprep.mubr.bf16.mxu0 0
      %2361 = vmatmul.mubr.bf16.gmra.mxu0 %v2300
      %v2362 = vpop.f32.mrf.mxu0
      %v2363 = vadd.f32 0.0, %v2362
      %v2364 = vpop.f32.mrf.mxu0
      %v2365 = vpop.f32.mrf.mxu0
      %v2366 = vadd.f32 0.0, %v2365
      %v2367 = vpop.f32.mrf.mxu0
      %2368 = vmatprep.mubr.bf16.mxu0 0
      %2369 = vmatmul.mubr.bf16.gmra.mxu0 %v2303
      %v2370 = vpop.f32.mrf.mxu0
      %v2371 = vadd.f32 0.0, %v2370
      %v2372 = vpop.f32.mrf.mxu0
      %v2373 = vpop.f32.mrf.mxu0
      %v2374 = vadd.f32 0.0, %v2373
      %v2375 = vpop.f32.mrf.mxu0
      %2376 = vmatprep.mubr.bf16.mxu0 0
      %2377 = vmatmul.mubr.bf16.gmra.mxu0 %v2306
      %v2378 = vpop.f32.mrf.mxu0
      %v2379 = vadd.f32 0.0, %v2378
      %v2380 = vpop.f32.mrf.mxu0
      %v2381 = vpop.f32.mrf.mxu0
      %v2382 = vadd.f32 0.0, %v2381
      %v2383 = vpop.f32.mrf.mxu0
      %2384 = vdwg.mxu0
      %v2385 = vmul.f32 %v2355, 0.25
      %v2386 = vmul.f32 %v2358, 0.25
      %v2387 = vmul.f32 %v2363, 0.25
      %v2388 = vmul.f32 %v2366, 0.25
      %v2389 = vmul.f32 %v2371, 0.25
      %v2390 = vmul.f32 %v2374, 0.25
      %v2391 = vmul.f32 %v2379, 0.25
      %v2392 = vmul.f32 %v2382, 0.25
      %v2393 = vsel %vm783, %v2385, -1e+30
      %v2394 = vsel %vm783, %v2386, -1e+30
      %v2395 = vsel %vm783, %v2387, -1e+30
      %v2396 = vsel %vm783, %v2388, -1e+30
      %v2397 = vsel %vm783, %v2389, -1e+30
      %v2398 = vsel %vm783, %v2390, -1e+30
      %v2399 = vsel %vm783, %v2391, -1e+30
      %v2400 = vsel %vm783, %v2392, -1e+30
      %v2401 = vsel %vm890, %v2393, -inf
      %2402 = vmax.xlane.f32.xlu0 %v2401
      %v2403 = vpop.xlane.xlu0 %2402
      %v2404 = vsel %vm890, %v2394, -inf
      %2405 = vmax.xlane.f32.xlu0 %v2404
      %v2406 = vpop.xlane.xlu0 %2405
      %v2407 = vsel %vm890, %v2395, -inf
      %2408 = vmax.xlane.f32.xlu0 %v2407
      %v2409 = vpop.xlane.xlu0 %2408
      %v2410 = vsel %vm890, %v2396, -inf
      %2411 = vmax.xlane.f32.xlu0 %v2410
      %v2412 = vpop.xlane.xlu0 %2411
      %v2413 = vsel %vm890, %v2397, -inf
      %2414 = vmax.xlane.f32.xlu0 %v2413
      %v2415 = vpop.xlane.xlu0 %2414
      %v2416 = vsel %vm890, %v2398, -inf
      %2417 = vmax.xlane.f32.xlu0 %v2416
      %v2418 = vpop.xlane.xlu0 %2417
      %v2419 = vsel %vm890, %v2399, -inf
      %2420 = vmax.xlane.f32.xlu0 %v2419
      %v2421 = vpop.xlane.xlu0 %2420
      %v2422 = vsel %vm890, %v2400, -inf
      %2423 = vmax.xlane.f32.xlu0 %v2422
      %v2424 = vpop.xlane.xlu0 %2423
      %v2425 = vsub.f32 %v2393, %v2403
      %v2426 = vsub.f32 %v2394, %v2406
      %v2427 = vsub.f32 %v2395, %v2409
      %v2428 = vsub.f32 %v2396, %v2412
      %v2429 = vsub.f32 %v2397, %v2415
      %v2430 = vsub.f32 %v2398, %v2418
      %v2431 = vsub.f32 %v2399, %v2421
      %v2432 = vsub.f32 %v2400, %v2424
      %v2433 = vmul.f32 %v2425, 1.442695
      %v2434 = vpow.pop %v2433
      %v2435 = vmul.f32 %v2426, 1.442695
      %v2436 = vpow.pop %v2435
      %v2437 = vmul.f32 %v2427, 1.442695
      %v2438 = vpow.pop %v2437
      %v2439 = vmul.f32 %v2428, 1.442695
      %v2440 = vpow.pop %v2439
      %v2441 = vmul.f32 %v2429, 1.442695
      %v2442 = vpow.pop %v2441
      %v2443 = vmul.f32 %v2430, 1.442695
      %v2444 = vpow.pop %v2443
      %v2445 = vmul.f32 %v2431, 1.442695
      %v2446 = vpow.pop %v2445
      %v2447 = vmul.f32 %v2432, 1.442695
      %v2448 = vpow.pop %v2447
      %v2449 = vsel %vm890, %v2434, 0.0
      %2450 = vadd.xlane.f32.xlu0 %v2449
      %v2451 = vpop.xlane.xlu0 %2450
      %v2452 = vsel %vm890, %v2436, 0.0
      %2453 = vadd.xlane.f32.xlu0 %v2452
      %v2454 = vpop.xlane.xlu0 %2453
      %v2455 = vsel %vm890, %v2438, 0.0
      %2456 = vadd.xlane.f32.xlu0 %v2455
      %v2457 = vpop.xlane.xlu0 %2456
      %v2458 = vsel %vm890, %v2440, 0.0
      %2459 = vadd.xlane.f32.xlu0 %v2458
      %v2460 = vpop.xlane.xlu0 %2459
      %v2461 = vsel %vm890, %v2442, 0.0
      %2462 = vadd.xlane.f32.xlu0 %v2461
      %v2463 = vpop.xlane.xlu0 %2462
      %v2464 = vsel %vm890, %v2444, 0.0
      %2465 = vadd.xlane.f32.xlu0 %v2464
      %v2466 = vpop.xlane.xlu0 %2465
      %v2467 = vsel %vm890, %v2446, 0.0
      %2468 = vadd.xlane.f32.xlu0 %v2467
      %v2469 = vpop.xlane.xlu0 %2468
      %v2470 = vsel %vm890, %v2448, 0.0
      %2471 = vadd.xlane.f32.xlu0 %v2470
      %v2472 = vpop.xlane.xlu0 %2471
      %v2473 = vrcp.pop %v2451
      %v2474 = vrcp.pop %v2454
      %v2475 = vrcp.pop %v2457
      %v2476 = vrcp.pop %v2460
      %v2477 = vrcp.pop %v2463
      %v2478 = vrcp.pop %v2466
      %v2479 = vrcp.pop %v2469
      %v2480 = vrcp.pop %v2472
      %v2481 = vmul.f32 %v2434, %v2473
      %v2482 = vmul.f32 %v2436, %v2474
      %v2483 = vmul.f32 %v2438, %v2475
      %v2484 = vmul.f32 %v2440, %v2476
      %v2485 = vmul.f32 %v2442, %v2477
      %v2486 = vmul.f32 %v2444, %v2478
      %v2487 = vmul.f32 %v2446, %v2479
      %v2488 = vmul.f32 %v2448, %v2480
      %v2489 = vpack.c.bf16 %v2482, %v2481
      %v2490 = vpack.c.bf16 %v2484, %v2483
      %v2491 = vpack.c.bf16 %v2486, %v2485
      %v2492 = vpack.c.bf16 %v2488, %v2487
      %2493 = vrot.lane.b32.xlu0 %v777, 48
      %v2494 = vpop.permute.xlu0 %2493
      %2495 = vrot.lane.b32.xlu0 %v778, 48
      %v2496 = vpop.permute.xlu0 %2495
      %2497 = vrot.lane.b32.xlu0 %v779, 48
      %v2498 = vpop.permute.xlu0 %2497
      %2499 = vrot.lane.b32.xlu0 %v780, 48
      %v2500 = vpop.permute.xlu0 %2499
      %v2506 = vsel %vm890, %v2489, 0
      %v2509 = vsel %vm890, %v2490, 0
      %v2512 = vsel %vm890, %v2491, 0
      %v2515 = vsel %vm890, %v2492, 0
      %2517 = vmatprep.subr.bf16.mxu0 0
      %2518 = vmatpush1.bf16.msra.mxu0 0
      %2519 = vmatprep.subr.bf16.mxu0 0
      %2520 = vmatpush1.bf16.msra.mxu0 0
      %2521 = vmatprep.subr.bf16.mxu0 0
      %2522 = vmatpush1.bf16.msra.mxu0 0
      %2523 = vmatprep.subr.bf16.mxu0 0
      %2524 = vmatpush1.bf16.msra.mxu0 0
      %2525 = vmatprep.subr.bf16.mxu0 0
      %2526 = vmatpush1.bf16.msra.mxu0 %v2500
      %2527 = vmatprep.subr.bf16.mxu0 0
      %2528 = vmatpush1.bf16.msra.mxu0 %v2498
      %2529 = vmatprep.subr.bf16.mxu0 0
      %2530 = vmatpush1.bf16.msra.mxu0 %v2496
      %2531 = vmatprep.subr.bf16.mxu0 0
      %2532 = vmatpush1.bf16.msra.mxu0 %v2494
      %2533 = vmatprep.subr.bf16.mxu0 0
      %2534 = vmatpush2.bf16.msra.mxu0 0
      %2535 = vmatprep.subr.bf16.mxu0 0
      %2536 = vmatpush2.bf16.msra.mxu0 0
      %2537 = vmatprep.subr.bf16.mxu0 0
      %2538 = vmatpush2.bf16.msra.mxu0 0
      %2539 = vmatprep.subr.bf16.mxu0 0
      %2540 = vmatpush2.bf16.msra.mxu0 0
      %2541 = vmatprep.subr.bf16.mxu0 0
      %2542 = vmatpush2.bf16.msra.mxu0 0
      %2543 = vmatprep.subr.bf16.mxu0 0
      %2544 = vmatpush2.bf16.msra.mxu0 0
      %2545 = vmatprep.subr.bf16.mxu0 0
      %2546 = vmatpush2.bf16.msra.mxu0 0
      %2547 = vmatprep.subr.bf16.mxu0 0
      %2548 = vmatpush2.bf16.msra.mxu0 0
      %2549 = vmatprep.mubr.bf16.mxu0 0
      %2550 = vmatmul.mubr.bf16.gmra.mxu0 %v2506
      %v2551 = vpop.f32.mrf.mxu0
      %v2552 = vadd.f32 0.0, %v2551
      %v2553 = vpop.f32.mrf.mxu0
      %v2554 = vpop.f32.mrf.mxu0
      %v2555 = vadd.f32 0.0, %v2554
      %v2556 = vpop.f32.mrf.mxu0
      %2557 = vmatprep.mubr.bf16.mxu0 0
      %2558 = vmatmul.mubr.bf16.gmra.mxu0 %v2509
      %v2559 = vpop.f32.mrf.mxu0
      %v2560 = vadd.f32 0.0, %v2559
      %v2561 = vpop.f32.mrf.mxu0
      %v2562 = vpop.f32.mrf.mxu0
      %v2563 = vadd.f32 0.0, %v2562
      %v2564 = vpop.f32.mrf.mxu0
      %2565 = vmatprep.mubr.bf16.mxu0 0
      %2566 = vmatmul.mubr.bf16.gmra.mxu0 %v2512
      %v2567 = vpop.f32.mrf.mxu0
      %v2568 = vadd.f32 0.0, %v2567
      %v2569 = vpop.f32.mrf.mxu0
      %v2570 = vpop.f32.mrf.mxu0
      %v2571 = vadd.f32 0.0, %v2570
      %v2572 = vpop.f32.mrf.mxu0
      %2573 = vmatprep.mubr.bf16.mxu0 0
      %2574 = vmatmul.mubr.bf16.gmra.mxu0 %v2515
      %v2575 = vpop.f32.mrf.mxu0
      %v2576 = vadd.f32 0.0, %v2575
      %v2577 = vpop.f32.mrf.mxu0
      %v2578 = vpop.f32.mrf.mxu0
      %v2579 = vadd.f32 0.0, %v2578
      %v2580 = vpop.f32.mrf.mxu0
      %2581 = vdwg.mxu0
      %2582 = vrot.lane.b32.xlu0 %v769, 32
      %v2583 = vpop.permute.xlu0 %2582
      %2584 = vrot.lane.b32.xlu0 %v770, 32
      %v2585 = vpop.permute.xlu0 %2584
      %2586 = vrot.lane.b32.xlu0 %v771, 32
      %v2587 = vpop.permute.xlu0 %2586
      %2588 = vrot.lane.b32.xlu0 %v772, 32
      %v2589 = vpop.permute.xlu0 %2588
      %2590 = vrot.lane.b32.xlu0 %v773, 32
      %v2591 = vpop.permute.xlu0 %2590
      %2592 = vrot.lane.b32.xlu0 %v774, 32
      %v2593 = vpop.permute.xlu0 %2592
      %2594 = vrot.lane.b32.xlu0 %v775, 32
      %v2595 = vpop.permute.xlu0 %2594
      %2596 = vrot.lane.b32.xlu0 %v776, 32
      %v2597 = vpop.permute.xlu0 %2596
      %v2599 = vsel %vm784, %v2583, 0
      %v2602 = vsel %vm784, %v2585, 0
      %v2605 = vsel %vm784, %v2587, 0
      %v2608 = vsel %vm784, %v2589, 0
      %v2611 = vsel %vm784, %v2591, 0
      %v2614 = vsel %vm784, %v2593, 0
      %v2617 = vsel %vm784, %v2595, 0
      %v2620 = vsel %vm784, %v2597, 0
      %2622 = vmatprep.subr.bf16.mxu0 0
      %2623 = vmatpush1.bf16.xpose.msra.mxu0 0
      %2624 = vmatprep.subr.bf16.mxu0 0
      %2625 = vmatpush1.bf16.xpose.msra.mxu0 0
      %2626 = vmatprep.subr.bf16.mxu0 0
      %2627 = vmatpush1.bf16.xpose.msra.mxu0 0
      %2628 = vmatprep.subr.bf16.mxu0 0
      %2629 = vmatpush1.bf16.xpose.msra.mxu0 0
      %2630 = vmatprep.subr.bf16.mxu0 0
      %2631 = vmatpush1.bf16.xpose.msra.mxu0 %v2620
      %2632 = vmatprep.subr.bf16.mxu0 0
      %2633 = vmatpush1.bf16.xpose.msra.mxu0 %v2617
      %2634 = vmatprep.subr.bf16.mxu0 0
      %2635 = vmatpush1.bf16.xpose.msra.mxu0 %v2614
      %2636 = vmatprep.subr.bf16.mxu0 0
      %2637 = vmatpush1.bf16.xpose.msra.mxu0 %v2611
      %2638 = vmatprep.subr.bf16.mxu0 0
      %2639 = vmatpush2.bf16.xpose.msra.mxu0 0
      %2640 = vmatprep.subr.bf16.mxu0 0
      %2641 = vmatpush2.bf16.xpose.msra.mxu0 0
      %2642 = vmatprep.subr.bf16.mxu0 0
      %2643 = vmatpush2.bf16.xpose.msra.mxu0 0
      %2644 = vmatprep.subr.bf16.mxu0 0
      %2645 = vmatpush2.bf16.xpose.msra.mxu0 0
      %2646 = vmatprep.subr.bf16.mxu0 0
      %2647 = vmatpush2.bf16.xpose.msra.mxu0 0
      %2648 = vmatprep.subr.bf16.mxu0 0
      %2649 = vmatpush2.bf16.xpose.msra.mxu0 0
      %2650 = vmatprep.subr.bf16.mxu0 0
      %2651 = vmatpush2.bf16.xpose.msra.mxu0 0
      %2652 = vmatprep.subr.bf16.mxu0 0
      %2653 = vmatpush2.bf16.xpose.msra.mxu0 0
      %2654 = vmatprep.mubr.bf16.mxu0 0
      %2655 = vmatmul.mubr.bf16.gmra.mxu0 %v2599
      %v2656 = vpop.f32.mrf.mxu0
      %v2657 = vadd.f32 0.0, %v2656
      %v2658 = vpop.f32.mrf.mxu0
      %v2659 = vpop.f32.mrf.mxu0
      %v2660 = vadd.f32 0.0, %v2659
      %v2661 = vpop.f32.mrf.mxu0
      %2662 = vmatprep.mubr.bf16.mxu0 0
      %2663 = vmatmul.mubr.bf16.gmra.mxu0 %v2602
      %v2664 = vpop.f32.mrf.mxu0
      %v2665 = vadd.f32 0.0, %v2664
      %v2666 = vpop.f32.mrf.mxu0
      %v2667 = vpop.f32.mrf.mxu0
      %v2668 = vadd.f32 0.0, %v2667
      %v2669 = vpop.f32.mrf.mxu0
      %2670 = vmatprep.mubr.bf16.mxu0 0
      %2671 = vmatmul.mubr.bf16.gmra.mxu0 %v2605
      %v2672 = vpop.f32.mrf.mxu0
      %v2673 = vadd.f32 0.0, %v2672
      %v2674 = vpop.f32.mrf.mxu0
      %v2675 = vpop.f32.mrf.mxu0
      %v2676 = vadd.f32 0.0, %v2675
      %v2677 = vpop.f32.mrf.mxu0
      %2678 = vmatprep.mubr.bf16.mxu0 0
      %2679 = vmatmul.mubr.bf16.gmra.mxu0 %v2608
      %v2680 = vpop.f32.mrf.mxu0
      %v2681 = vadd.f32 0.0, %v2680
      %v2682 = vpop.f32.mrf.mxu0
      %v2683 = vpop.f32.mrf.mxu0
      %v2684 = vadd.f32 0.0, %v2683
      %v2685 = vpop.f32.mrf.mxu0
      %2686 = vdwg.mxu0
      %v2687 = vmul.f32 %v2657, 0.25
      %v2688 = vmul.f32 %v2660, 0.25
      %v2689 = vmul.f32 %v2665, 0.25
      %v2690 = vmul.f32 %v2668, 0.25
      %v2691 = vmul.f32 %v2673, 0.25
      %v2692 = vmul.f32 %v2676, 0.25
      %v2693 = vmul.f32 %v2681, 0.25
      %v2694 = vmul.f32 %v2684, 0.25
      %v2695 = vsel %vm783, %v2687, -1e+30
      %v2696 = vsel %vm783, %v2688, -1e+30
      %v2697 = vsel %vm783, %v2689, -1e+30
      %v2698 = vsel %vm783, %v2690, -1e+30
      %v2699 = vsel %vm783, %v2691, -1e+30
      %v2700 = vsel %vm783, %v2692, -1e+30
      %v2701 = vsel %vm783, %v2693, -1e+30
      %v2702 = vsel %vm783, %v2694, -1e+30
      %v2703 = vsel %vm890, %v2695, -inf
      %2704 = vmax.xlane.f32.xlu0 %v2703
      %v2705 = vpop.xlane.xlu0 %2704
      %v2706 = vsel %vm890, %v2696, -inf
      %2707 = vmax.xlane.f32.xlu0 %v2706
      %v2708 = vpop.xlane.xlu0 %2707
      %v2709 = vsel %vm890, %v2697, -inf
      %2710 = vmax.xlane.f32.xlu0 %v2709
      %v2711 = vpop.xlane.xlu0 %2710
      %v2712 = vsel %vm890, %v2698, -inf
      %2713 = vmax.xlane.f32.xlu0 %v2712
      %v2714 = vpop.xlane.xlu0 %2713
      %v2715 = vsel %vm890, %v2699, -inf
      %2716 = vmax.xlane.f32.xlu0 %v2715
      %v2717 = vpop.xlane.xlu0 %2716
      %v2718 = vsel %vm890, %v2700, -inf
      %2719 = vmax.xlane.f32.xlu0 %v2718
      %v2720 = vpop.xlane.xlu0 %2719
      %v2721 = vsel %vm890, %v2701, -inf
      %2722 = vmax.xlane.f32.xlu0 %v2721
      %v2723 = vpop.xlane.xlu0 %2722
      %v2724 = vsel %vm890, %v2702, -inf
      %2725 = vmax.xlane.f32.xlu0 %v2724
      %v2726 = vpop.xlane.xlu0 %2725
      %v2727 = vsub.f32 %v2695, %v2705
      %v2728 = vsub.f32 %v2696, %v2708
      %v2729 = vsub.f32 %v2697, %v2711
      %v2730 = vsub.f32 %v2698, %v2714
      %v2731 = vsub.f32 %v2699, %v2717
      %v2732 = vsub.f32 %v2700, %v2720
      %v2733 = vsub.f32 %v2701, %v2723
      %v2734 = vsub.f32 %v2702, %v2726
      %v2735 = vmul.f32 %v2727, 1.442695
      %v2736 = vpow.pop %v2735
      %v2737 = vmul.f32 %v2728, 1.442695
      %v2738 = vpow.pop %v2737
      %v2739 = vmul.f32 %v2729, 1.442695
      %v2740 = vpow.pop %v2739
      %v2741 = vmul.f32 %v2730, 1.442695
      %v2742 = vpow.pop %v2741
      %v2743 = vmul.f32 %v2731, 1.442695
      %v2744 = vpow.pop %v2743
      %v2745 = vmul.f32 %v2732, 1.442695
      %v2746 = vpow.pop %v2745
      %v2747 = vmul.f32 %v2733, 1.442695
      %v2748 = vpow.pop %v2747
      %v2749 = vmul.f32 %v2734, 1.442695
      %v2750 = vpow.pop %v2749
      %v2751 = vsel %vm890, %v2736, 0.0
      %2752 = vadd.xlane.f32.xlu0 %v2751
      %v2753 = vpop.xlane.xlu0 %2752
      %v2754 = vsel %vm890, %v2738, 0.0
      %2755 = vadd.xlane.f32.xlu0 %v2754
      %v2756 = vpop.xlane.xlu0 %2755
      %v2757 = vsel %vm890, %v2740, 0.0
      %2758 = vadd.xlane.f32.xlu0 %v2757
      %v2759 = vpop.xlane.xlu0 %2758
      %v2760 = vsel %vm890, %v2742, 0.0
      %2761 = vadd.xlane.f32.xlu0 %v2760
      %v2762 = vpop.xlane.xlu0 %2761
      %v2763 = vsel %vm890, %v2744, 0.0
      %2764 = vadd.xlane.f32.xlu0 %v2763
      %v2765 = vpop.xlane.xlu0 %2764
      %v2766 = vsel %vm890, %v2746, 0.0
      %2767 = vadd.xlane.f32.xlu0 %v2766
      %v2768 = vpop.xlane.xlu0 %2767
      %v2769 = vsel %vm890, %v2748, 0.0
      %2770 = vadd.xlane.f32.xlu0 %v2769
      %v2771 = vpop.xlane.xlu0 %2770
      %v2772 = vsel %vm890, %v2750, 0.0
      %2773 = vadd.xlane.f32.xlu0 %v2772
      %v2774 = vpop.xlane.xlu0 %2773
      %v2775 = vrcp.pop %v2753
      %v2776 = vrcp.pop %v2756
      %v2777 = vrcp.pop %v2759
      %v2778 = vrcp.pop %v2762
      %v2779 = vrcp.pop %v2765
      %v2780 = vrcp.pop %v2768
      %v2781 = vrcp.pop %v2771
      %v2782 = vrcp.pop %v2774
      %v2783 = vmul.f32 %v2736, %v2775
      %v2784 = vmul.f32 %v2738, %v2776
      %v2785 = vmul.f32 %v2740, %v2777
      %v2786 = vmul.f32 %v2742, %v2778
      %v2787 = vmul.f32 %v2744, %v2779
      %v2788 = vmul.f32 %v2746, %v2780
      %v2789 = vmul.f32 %v2748, %v2781
      %v2790 = vmul.f32 %v2750, %v2782
      %v2791 = vpack.c.bf16 %v2784, %v2783
      %v2792 = vpack.c.bf16 %v2786, %v2785
      %v2793 = vpack.c.bf16 %v2788, %v2787
      %v2794 = vpack.c.bf16 %v2790, %v2789
      %2795 = vrot.lane.b32.xlu0 %v777, 32
      %v2796 = vpop.permute.xlu0 %2795
      %2797 = vrot.lane.b32.xlu0 %v778, 32
      %v2798 = vpop.permute.xlu0 %2797
      %2799 = vrot.lane.b32.xlu0 %v779, 32
      %v2800 = vpop.permute.xlu0 %2799
      %2801 = vrot.lane.b32.xlu0 %v780, 32
      %v2802 = vpop.permute.xlu0 %2801
      %v2808 = vsel %vm890, %v2791, 0
      %v2811 = vsel %vm890, %v2792, 0
      %v2814 = vsel %vm890, %v2793, 0
      %v2817 = vsel %vm890, %v2794, 0
      %2819 = vmatprep.subr.bf16.mxu0 0
      %2820 = vmatpush1.bf16.msra.mxu0 0
      %2821 = vmatprep.subr.bf16.mxu0 0
      %2822 = vmatpush1.bf16.msra.mxu0 0
      %2823 = vmatprep.subr.bf16.mxu0 0
      %2824 = vmatpush1.bf16.msra.mxu0 0
      %2825 = vmatprep.subr.bf16.mxu0 0
      %2826 = vmatpush1.bf16.msra.mxu0 0
      %2827 = vmatprep.subr.bf16.mxu0 0
      %2828 = vmatpush1.bf16.msra.mxu0 %v2802
      %2829 = vmatprep.subr.bf16.mxu0 0
      %2830 = vmatpush1.bf16.msra.mxu0 %v2800
      %2831 = vmatprep.subr.bf16.mxu0 0
      %2832 = vmatpush1.bf16.msra.mxu0 %v2798
      %2833 = vmatprep.subr.bf16.mxu0 0
      %2834 = vmatpush1.bf16.msra.mxu0 %v2796
      %2835 = vmatprep.subr.bf16.mxu0 0
      %2836 = vmatpush2.bf16.msra.mxu0 0
      %2837 = vmatprep.subr.bf16.mxu0 0
      %2838 = vmatpush2.bf16.msra.mxu0 0
      %2839 = vmatprep.subr.bf16.mxu0 0
      %2840 = vmatpush2.bf16.msra.mxu0 0
      %2841 = vmatprep.subr.bf16.mxu0 0
      %2842 = vmatpush2.bf16.msra.mxu0 0
      %2843 = vmatprep.subr.bf16.mxu0 0
      %2844 = vmatpush2.bf16.msra.mxu0 0
      %2845 = vmatprep.subr.bf16.mxu0 0
      %2846 = vmatpush2.bf16.msra.mxu0 0
      %2847 = vmatprep.subr.bf16.mxu0 0
      %2848 = vmatpush2.bf16.msra.mxu0 0
      %2849 = vmatprep.subr.bf16.mxu0 0
      %2850 = vmatpush2.bf16.msra.mxu0 0
      %2851 = vmatprep.mubr.bf16.mxu0 0
      %2852 = vmatmul.mubr.bf16.gmra.mxu0 %v2808
      %v2853 = vpop.f32.mrf.mxu0
      %v2854 = vadd.f32 0.0, %v2853
      %v2855 = vpop.f32.mrf.mxu0
      %v2856 = vpop.f32.mrf.mxu0
      %v2857 = vadd.f32 0.0, %v2856
      %v2858 = vpop.f32.mrf.mxu0
      %2859 = vmatprep.mubr.bf16.mxu0 0
      %2860 = vmatmul.mubr.bf16.gmra.mxu0 %v2811
      %v2861 = vpop.f32.mrf.mxu0
      %v2862 = vadd.f32 0.0, %v2861
      %v2863 = vpop.f32.mrf.mxu0
      %v2864 = vpop.f32.mrf.mxu0
      %v2865 = vadd.f32 0.0, %v2864
      %v2866 = vpop.f32.mrf.mxu0
      %2867 = vmatprep.mubr.bf16.mxu0 0
      %2868 = vmatmul.mubr.bf16.gmra.mxu0 %v2814
      %v2869 = vpop.f32.mrf.mxu0
      %v2870 = vadd.f32 0.0, %v2869
      %v2871 = vpop.f32.mrf.mxu0
      %v2872 = vpop.f32.mrf.mxu0
      %v2873 = vadd.f32 0.0, %v2872
      %v2874 = vpop.f32.mrf.mxu0
      %2875 = vmatprep.mubr.bf16.mxu0 0
      %2876 = vmatmul.mubr.bf16.gmra.mxu0 %v2817
      %v2877 = vpop.f32.mrf.mxu0
      %v2878 = vadd.f32 0.0, %v2877
      %v2879 = vpop.f32.mrf.mxu0
      %v2880 = vpop.f32.mrf.mxu0
      %v2881 = vadd.f32 0.0, %v2880
      %v2882 = vpop.f32.mrf.mxu0
      %2883 = vdwg.mxu0
      %2884 = vrot.lane.b32.xlu0 %v769, 16
      %v2885 = vpop.permute.xlu0 %2884
      %2886 = vrot.lane.b32.xlu0 %v770, 16
      %v2887 = vpop.permute.xlu0 %2886
      %2888 = vrot.lane.b32.xlu0 %v771, 16
      %v2889 = vpop.permute.xlu0 %2888
      %2890 = vrot.lane.b32.xlu0 %v772, 16
      %v2891 = vpop.permute.xlu0 %2890
      %2892 = vrot.lane.b32.xlu0 %v773, 16
      %v2893 = vpop.permute.xlu0 %2892
      %2894 = vrot.lane.b32.xlu0 %v774, 16
      %v2895 = vpop.permute.xlu0 %2894
      %2896 = vrot.lane.b32.xlu0 %v775, 16
      %v2897 = vpop.permute.xlu0 %2896
      %2898 = vrot.lane.b32.xlu0 %v776, 16
      %v2899 = vpop.permute.xlu0 %2898
      %v2901 = vsel %vm784, %v2885, 0
      %v2904 = vsel %vm784, %v2887, 0
      %v2907 = vsel %vm784, %v2889, 0
      %v2910 = vsel %vm784, %v2891, 0
      %v2913 = vsel %vm784, %v2893, 0
      %v2916 = vsel %vm784, %v2895, 0
      %v2919 = vsel %vm784, %v2897, 0
      %v2922 = vsel %vm784, %v2899, 0
      %2924 = vmatprep.subr.bf16.mxu0 0
      %2925 = vmatpush1.bf16.xpose.msra.mxu0 0
      %2926 = vmatprep.subr.bf16.mxu0 0
      %2927 = vmatpush1.bf16.xpose.msra.mxu0 0
      %2928 = vmatprep.subr.bf16.mxu0 0
      %2929 = vmatpush1.bf16.xpose.msra.mxu0 0
      %2930 = vmatprep.subr.bf16.mxu0 0
      %2931 = vmatpush1.bf16.xpose.msra.mxu0 0
      %2932 = vmatprep.subr.bf16.mxu0 0
      %2933 = vmatpush1.bf16.xpose.msra.mxu0 %v2922
      %2934 = vmatprep.subr.bf16.mxu0 0
      %2935 = vmatpush1.bf16.xpose.msra.mxu0 %v2919
      %2936 = vmatprep.subr.bf16.mxu0 0
      %2937 = vmatpush1.bf16.xpose.msra.mxu0 %v2916
      %2938 = vmatprep.subr.bf16.mxu0 0
      %2939 = vmatpush1.bf16.xpose.msra.mxu0 %v2913
      %2940 = vmatprep.subr.bf16.mxu0 0
      %2941 = vmatpush2.bf16.xpose.msra.mxu0 0
      %2942 = vmatprep.subr.bf16.mxu0 0
      %2943 = vmatpush2.bf16.xpose.msra.mxu0 0
      %2944 = vmatprep.subr.bf16.mxu0 0
      %2945 = vmatpush2.bf16.xpose.msra.mxu0 0
      %2946 = vmatprep.subr.bf16.mxu0 0
      %2947 = vmatpush2.bf16.xpose.msra.mxu0 0
      %2948 = vmatprep.subr.bf16.mxu0 0
      %2949 = vmatpush2.bf16.xpose.msra.mxu0 0
      %2950 = vmatprep.subr.bf16.mxu0 0
      %2951 = vmatpush2.bf16.xpose.msra.mxu0 0
      %2952 = vmatprep.subr.bf16.mxu0 0
      %2953 = vmatpush2.bf16.xpose.msra.mxu0 0
      %2954 = vmatprep.subr.bf16.mxu0 0
      %2955 = vmatpush2.bf16.xpose.msra.mxu0 0
      %2956 = vmatprep.mubr.bf16.mxu0 0
      %2957 = vmatmul.mubr.bf16.gmra.mxu0 %v2901
      %v2958 = vpop.f32.mrf.mxu0
      %v2959 = vadd.f32 0.0, %v2958
      %v2960 = vpop.f32.mrf.mxu0
      %v2961 = vpop.f32.mrf.mxu0
      %v2962 = vadd.f32 0.0, %v2961
      %v2963 = vpop.f32.mrf.mxu0
      %2964 = vmatprep.mubr.bf16.mxu0 0
      %2965 = vmatmul.mubr.bf16.gmra.mxu0 %v2904
      %v2966 = vpop.f32.mrf.mxu0
      %v2967 = vadd.f32 0.0, %v2966
      %v2968 = vpop.f32.mrf.mxu0
      %v2969 = vpop.f32.mrf.mxu0
      %v2970 = vadd.f32 0.0, %v2969
      %v2971 = vpop.f32.mrf.mxu0
      %2972 = vmatprep.mubr.bf16.mxu0 0
      %2973 = vmatmul.mubr.bf16.gmra.mxu0 %v2907
      %v2974 = vpop.f32.mrf.mxu0
      %v2975 = vadd.f32 0.0, %v2974
      %v2976 = vpop.f32.mrf.mxu0
      %v2977 = vpop.f32.mrf.mxu0
      %v2978 = vadd.f32 0.0, %v2977
      %v2979 = vpop.f32.mrf.mxu0
      %2980 = vmatprep.mubr.bf16.mxu0 0
      %2981 = vmatmul.mubr.bf16.gmra.mxu0 %v2910
      %v2982 = vpop.f32.mrf.mxu0
      %v2983 = vadd.f32 0.0, %v2982
      %v2984 = vpop.f32.mrf.mxu0
      %v2985 = vpop.f32.mrf.mxu0
      %v2986 = vadd.f32 0.0, %v2985
      %v2987 = vpop.f32.mrf.mxu0
      %2988 = vdwg.mxu0
      %v2989 = vmul.f32 %v2959, 0.25
      %v2990 = vmul.f32 %v2962, 0.25
      %v2991 = vmul.f32 %v2967, 0.25
      %v2992 = vmul.f32 %v2970, 0.25
      %v2993 = vmul.f32 %v2975, 0.25
      %v2994 = vmul.f32 %v2978, 0.25
      %v2995 = vmul.f32 %v2983, 0.25
      %v2996 = vmul.f32 %v2986, 0.25
      %v2997 = vsel %vm783, %v2989, -1e+30
      %v2998 = vsel %vm783, %v2990, -1e+30
      %v2999 = vsel %vm783, %v2991, -1e+30
      %v3000 = vsel %vm783, %v2992, -1e+30
      %v3001 = vsel %vm783, %v2993, -1e+30
      %v3002 = vsel %vm783, %v2994, -1e+30
      %v3003 = vsel %vm783, %v2995, -1e+30
      %v3004 = vsel %vm783, %v2996, -1e+30
      %v3005 = vsel %vm890, %v2997, -inf
      %3006 = vmax.xlane.f32.xlu0 %v3005
      %v3007 = vpop.xlane.xlu0 %3006
      %v3008 = vsel %vm890, %v2998, -inf
      %3009 = vmax.xlane.f32.xlu0 %v3008
      %v3010 = vpop.xlane.xlu0 %3009
      %v3011 = vsel %vm890, %v2999, -inf
      %3012 = vmax.xlane.f32.xlu0 %v3011
      %v3013 = vpop.xlane.xlu0 %3012
      %v3014 = vsel %vm890, %v3000, -inf
      %3015 = vmax.xlane.f32.xlu0 %v3014
      %v3016 = vpop.xlane.xlu0 %3015
      %v3017 = vsel %vm890, %v3001, -inf
      %3018 = vmax.xlane.f32.xlu0 %v3017
      %v3019 = vpop.xlane.xlu0 %3018
      %v3020 = vsel %vm890, %v3002, -inf
      %3021 = vmax.xlane.f32.xlu0 %v3020
      %v3022 = vpop.xlane.xlu0 %3021
      %v3023 = vsel %vm890, %v3003, -inf
      %3024 = vmax.xlane.f32.xlu0 %v3023
      %v3025 = vpop.xlane.xlu0 %3024
      %v3026 = vsel %vm890, %v3004, -inf
      %3027 = vmax.xlane.f32.xlu0 %v3026
      %v3028 = vpop.xlane.xlu0 %3027
      %v3029 = vsub.f32 %v2997, %v3007
      %v3030 = vsub.f32 %v2998, %v3010
      %v3031 = vsub.f32 %v2999, %v3013
      %v3032 = vsub.f32 %v3000, %v3016
      %v3033 = vsub.f32 %v3001, %v3019
      %v3034 = vsub.f32 %v3002, %v3022
      %v3035 = vsub.f32 %v3003, %v3025
      %v3036 = vsub.f32 %v3004, %v3028
      %v3037 = vmul.f32 %v3029, 1.442695
      %v3038 = vpow.pop %v3037
      %v3039 = vmul.f32 %v3030, 1.442695
      %v3040 = vpow.pop %v3039
      %v3041 = vmul.f32 %v3031, 1.442695
      %v3042 = vpow.pop %v3041
      %v3043 = vmul.f32 %v3032, 1.442695
      %v3044 = vpow.pop %v3043
      %v3045 = vmul.f32 %v3033, 1.442695
      %v3046 = vpow.pop %v3045
      %v3047 = vmul.f32 %v3034, 1.442695
      %v3048 = vpow.pop %v3047
      %v3049 = vmul.f32 %v3035, 1.442695
      %v3050 = vpow.pop %v3049
      %v3051 = vmul.f32 %v3036, 1.442695
      %v3052 = vpow.pop %v3051
      %v3053 = vsel %vm890, %v3038, 0.0
      %3054 = vadd.xlane.f32.xlu0 %v3053
      %v3055 = vpop.xlane.xlu0 %3054
      %v3056 = vsel %vm890, %v3040, 0.0
      %3057 = vadd.xlane.f32.xlu0 %v3056
      %v3058 = vpop.xlane.xlu0 %3057
      %v3059 = vsel %vm890, %v3042, 0.0
      %3060 = vadd.xlane.f32.xlu0 %v3059
      %v3061 = vpop.xlane.xlu0 %3060
      %v3062 = vsel %vm890, %v3044, 0.0
      %3063 = vadd.xlane.f32.xlu0 %v3062
      %v3064 = vpop.xlane.xlu0 %3063
      %v3065 = vsel %vm890, %v3046, 0.0
      %3066 = vadd.xlane.f32.xlu0 %v3065
      %v3067 = vpop.xlane.xlu0 %3066
      %v3068 = vsel %vm890, %v3048, 0.0
      %3069 = vadd.xlane.f32.xlu0 %v3068
      %v3070 = vpop.xlane.xlu0 %3069
      %v3071 = vsel %vm890, %v3050, 0.0
      %3072 = vadd.xlane.f32.xlu0 %v3071
      %v3073 = vpop.xlane.xlu0 %3072
      %v3074 = vsel %vm890, %v3052, 0.0
      %3075 = vadd.xlane.f32.xlu0 %v3074
      %v3076 = vpop.xlane.xlu0 %3075
      %v3077 = vrcp.pop %v3055
      %v3078 = vrcp.pop %v3058
      %v3079 = vrcp.pop %v3061
      %v3080 = vrcp.pop %v3064
      %v3081 = vrcp.pop %v3067
      %v3082 = vrcp.pop %v3070
      %v3083 = vrcp.pop %v3073
      %v3084 = vrcp.pop %v3076
      %v3085 = vmul.f32 %v3038, %v3077
      %v3086 = vmul.f32 %v3040, %v3078
      %v3087 = vmul.f32 %v3042, %v3079
      %v3088 = vmul.f32 %v3044, %v3080
      %v3089 = vmul.f32 %v3046, %v3081
      %v3090 = vmul.f32 %v3048, %v3082
      %v3091 = vmul.f32 %v3050, %v3083
      %v3092 = vmul.f32 %v3052, %v3084
      %v3093 = vpack.c.bf16 %v3086, %v3085
      %v3094 = vpack.c.bf16 %v3088, %v3087
      %v3095 = vpack.c.bf16 %v3090, %v3089
      %v3096 = vpack.c.bf16 %v3092, %v3091
      %3097 = vrot.lane.b32.xlu0 %v777, 16
      %v3098 = vpop.permute.xlu0 %3097
      %3099 = vrot.lane.b32.xlu0 %v778, 16
      %v3100 = vpop.permute.xlu0 %3099
      %3101 = vrot.lane.b32.xlu0 %v779, 16
      %v3102 = vpop.permute.xlu0 %3101
      %3103 = vrot.lane.b32.xlu0 %v780, 16
      %v3104 = vpop.permute.xlu0 %3103
      %v3110 = vsel %vm890, %v3093, 0
      %v3113 = vsel %vm890, %v3094, 0
      %v3116 = vsel %vm890, %v3095, 0
      %v3119 = vsel %vm890, %v3096, 0
      %3121 = vmatprep.subr.bf16.mxu0 0
      %3122 = vmatpush1.bf16.msra.mxu0 0
      %3123 = vmatprep.subr.bf16.mxu0 0
      %3124 = vmatpush1.bf16.msra.mxu0 0
      %3125 = vmatprep.subr.bf16.mxu0 0
      %3126 = vmatpush1.bf16.msra.mxu0 0
      %3127 = vmatprep.subr.bf16.mxu0 0
      %3128 = vmatpush1.bf16.msra.mxu0 0
      %3129 = vmatprep.subr.bf16.mxu0 0
      %3130 = vmatpush1.bf16.msra.mxu0 %v3104
      %3131 = vmatprep.subr.bf16.mxu0 0
      %3132 = vmatpush1.bf16.msra.mxu0 %v3102
      %3133 = vmatprep.subr.bf16.mxu0 0
      %3134 = vmatpush1.bf16.msra.mxu0 %v3100
      %3135 = vmatprep.subr.bf16.mxu0 0
      %3136 = vmatpush1.bf16.msra.mxu0 %v3098
      %3137 = vmatprep.subr.bf16.mxu0 0
      %3138 = vmatpush2.bf16.msra.mxu0 0
      %3139 = vmatprep.subr.bf16.mxu0 0
      %3140 = vmatpush2.bf16.msra.mxu0 0
      %3141 = vmatprep.subr.bf16.mxu0 0
      %3142 = vmatpush2.bf16.msra.mxu0 0
      %3143 = vmatprep.subr.bf16.mxu0 0
      %3144 = vmatpush2.bf16.msra.mxu0 0
      %3145 = vmatprep.subr.bf16.mxu0 0
      %3146 = vmatpush2.bf16.msra.mxu0 0
      %3147 = vmatprep.subr.bf16.mxu0 0
      %3148 = vmatpush2.bf16.msra.mxu0 0
      %3149 = vmatprep.subr.bf16.mxu0 0
      %3150 = vmatpush2.bf16.msra.mxu0 0
      %3151 = vmatprep.subr.bf16.mxu0 0
      %3152 = vmatpush2.bf16.msra.mxu0 0
      %3153 = vmatprep.mubr.bf16.mxu0 0
      %3154 = vmatmul.mubr.bf16.gmra.mxu0 %v3110
      %v3155 = vpop.f32.mrf.mxu0
      %v3156 = vadd.f32 0.0, %v3155
      %v3157 = vpop.f32.mrf.mxu0
      %v3158 = vpop.f32.mrf.mxu0
      %v3159 = vadd.f32 0.0, %v3158
      %v3160 = vpop.f32.mrf.mxu0
      %3161 = vmatprep.mubr.bf16.mxu0 0
      %3162 = vmatmul.mubr.bf16.gmra.mxu0 %v3113
      %v3163 = vpop.f32.mrf.mxu0
      %v3164 = vadd.f32 0.0, %v3163
      %v3165 = vpop.f32.mrf.mxu0
      %v3166 = vpop.f32.mrf.mxu0
      %v3167 = vadd.f32 0.0, %v3166
      %v3168 = vpop.f32.mrf.mxu0
      %3169 = vmatprep.mubr.bf16.mxu0 0
      %3170 = vmatmul.mubr.bf16.gmra.mxu0 %v3116
      %v3171 = vpop.f32.mrf.mxu0
      %v3172 = vadd.f32 0.0, %v3171
      %v3173 = vpop.f32.mrf.mxu0
      %v3174 = vpop.f32.mrf.mxu0
      %v3175 = vadd.f32 0.0, %v3174
      %v3176 = vpop.f32.mrf.mxu0
      %3177 = vmatprep.mubr.bf16.mxu0 0
      %3178 = vmatmul.mubr.bf16.gmra.mxu0 %v3119
      %v3179 = vpop.f32.mrf.mxu0
      %v3180 = vadd.f32 0.0, %v3179
      %v3181 = vpop.f32.mrf.mxu0
      %v3182 = vpop.f32.mrf.mxu0
      %v3183 = vadd.f32 0.0, %v3182
      %v3184 = vpop.f32.mrf.mxu0
      %3185 = vdwg.mxu0
      %3194 = vrot.lane.b32.xlu0 %v1344, 16
      %v3195 = vpop.permute.xlu0 %3194
      %3196 = vrot.lane.b32.xlu0 %v1347, 16
      %v3197 = vpop.permute.xlu0 %3196
      %3198 = vrot.lane.b32.xlu0 %v1352, 16
      %v3199 = vpop.permute.xlu0 %3198
      %3200 = vrot.lane.b32.xlu0 %v1355, 16
      %v3201 = vpop.permute.xlu0 %3200
      %3202 = vrot.lane.b32.xlu0 %v1360, 16
      %v3203 = vpop.permute.xlu0 %3202
      %3204 = vrot.lane.b32.xlu0 %v1363, 16
      %v3205 = vpop.permute.xlu0 %3204
      %3206 = vrot.lane.b32.xlu0 %v1368, 16
      %v3207 = vpop.permute.xlu0 %3206
      %3208 = vrot.lane.b32.xlu0 %v1371, 16
      %v3209 = vpop.permute.xlu0 %3208
      %3226 = vrot.lane.b32.xlu0 %v1646, 32
      %v3227 = vpop.permute.xlu0 %3226
      %3228 = vrot.lane.b32.xlu0 %v1649, 32
      %v3229 = vpop.permute.xlu0 %3228
      %3230 = vrot.lane.b32.xlu0 %v1654, 32
      %v3231 = vpop.permute.xlu0 %3230
      %3232 = vrot.lane.b32.xlu0 %v1657, 32
      %v3233 = vpop.permute.xlu0 %3232
      %3234 = vrot.lane.b32.xlu0 %v1662, 32
      %v3235 = vpop.permute.xlu0 %3234
      %3236 = vrot.lane.b32.xlu0 %v1665, 32
      %v3237 = vpop.permute.xlu0 %3236
      %3238 = vrot.lane.b32.xlu0 %v1670, 32
      %v3239 = vpop.permute.xlu0 %3238
      %3240 = vrot.lane.b32.xlu0 %v1673, 32
      %v3241 = vpop.permute.xlu0 %3240
      %3258 = vrot.lane.b32.xlu0 %v1948, 48
      %v3259 = vpop.permute.xlu0 %3258
      %3260 = vrot.lane.b32.xlu0 %v1951, 48
      %v3261 = vpop.permute.xlu0 %3260
      %3262 = vrot.lane.b32.xlu0 %v1956, 48
      %v3263 = vpop.permute.xlu0 %3262
      %3264 = vrot.lane.b32.xlu0 %v1959, 48
      %v3265 = vpop.permute.xlu0 %3264
      %3266 = vrot.lane.b32.xlu0 %v1964, 48
      %v3267 = vpop.permute.xlu0 %3266
      %3268 = vrot.lane.b32.xlu0 %v1967, 48
      %v3269 = vpop.permute.xlu0 %3268
      %3270 = vrot.lane.b32.xlu0 %v1972, 48
      %v3271 = vpop.permute.xlu0 %3270
      %3272 = vrot.lane.b32.xlu0 %v1975, 48
      %v3273 = vpop.permute.xlu0 %3272
      %3290 = vrot.lane.b32.xlu0 %v2250, 64
      %v3291 = vpop.permute.xlu0 %3290
      %3292 = vrot.lane.b32.xlu0 %v2253, 64
      %v3293 = vpop.permute.xlu0 %3292
      %3294 = vrot.lane.b32.xlu0 %v2258, 64
      %v3295 = vpop.permute.xlu0 %3294
      %3296 = vrot.lane.b32.xlu0 %v2261, 64
      %v3297 = vpop.permute.xlu0 %3296
      %3298 = vrot.lane.b32.xlu0 %v2266, 64
      %v3299 = vpop.permute.xlu0 %3298
      %3300 = vrot.lane.b32.xlu0 %v2269, 64
      %v3301 = vpop.permute.xlu0 %3300
      %3302 = vrot.lane.b32.xlu0 %v2274, 64
      %v3303 = vpop.permute.xlu0 %3302
      %3304 = vrot.lane.b32.xlu0 %v2277, 64
      %v3305 = vpop.permute.xlu0 %3304
      %3322 = vrot.lane.b32.xlu0 %v2552, 80
      %v3323 = vpop.permute.xlu0 %3322
      %3324 = vrot.lane.b32.xlu0 %v2555, 80
      %v3325 = vpop.permute.xlu0 %3324
      %3326 = vrot.lane.b32.xlu0 %v2560, 80
      %v3327 = vpop.permute.xlu0 %3326
      %3328 = vrot.lane.b32.xlu0 %v2563, 80
      %v3329 = vpop.permute.xlu0 %3328
      %3330 = vrot.lane.b32.xlu0 %v2568, 80
      %v3331 = vpop.permute.xlu0 %3330
      %3332 = vrot.lane.b32.xlu0 %v2571, 80
      %v3333 = vpop.permute.xlu0 %3332
      %3334 = vrot.lane.b32.xlu0 %v2576, 80
      %v3335 = vpop.permute.xlu0 %3334
      %3336 = vrot.lane.b32.xlu0 %v2579, 80
      %v3337 = vpop.permute.xlu0 %3336
      %3354 = vrot.lane.b32.xlu0 %v2854, 96
      %v3355 = vpop.permute.xlu0 %3354
      %3356 = vrot.lane.b32.xlu0 %v2857, 96
      %v3357 = vpop.permute.xlu0 %3356
      %3358 = vrot.lane.b32.xlu0 %v2862, 96
      %v3359 = vpop.permute.xlu0 %3358
      %3360 = vrot.lane.b32.xlu0 %v2865, 96
      %v3361 = vpop.permute.xlu0 %3360
      %3362 = vrot.lane.b32.xlu0 %v2870, 96
      %v3363 = vpop.permute.xlu0 %3362
      %3364 = vrot.lane.b32.xlu0 %v2873, 96
      %v3365 = vpop.permute.xlu0 %3364
      %3366 = vrot.lane.b32.xlu0 %v2878, 96
      %v3367 = vpop.permute.xlu0 %3366
      %3368 = vrot.lane.b32.xlu0 %v2881, 96
      %v3369 = vpop.permute.xlu0 %3368
      %3386 = vrot.lane.b32.xlu0 %v3156, 112
      %v3387 = vpop.permute.xlu0 %3386
      %3388 = vrot.lane.b32.xlu0 %v3159, 112
      %v3389 = vpop.permute.xlu0 %3388
      %3390 = vrot.lane.b32.xlu0 %v3164, 112
      %v3391 = vpop.permute.xlu0 %3390
      %3392 = vrot.lane.b32.xlu0 %v3167, 112
      %v3393 = vpop.permute.xlu0 %3392
      %3394 = vrot.lane.b32.xlu0 %v3172, 112
      %v3395 = vpop.permute.xlu0 %3394
      %3396 = vrot.lane.b32.xlu0 %v3175, 112
      %v3397 = vpop.permute.xlu0 %3396
      %3398 = vrot.lane.b32.xlu0 %v3180, 112
      %v3399 = vpop.permute.xlu0 %3398
      %3400 = vrot.lane.b32.xlu0 %v3183, 112
      %v3401 = vpop.permute.xlu0 %3400
      %v3410 = vsel %vm784, %v1030, %v3195
      %v3411 = vsel %vm784, %v1033, %v3197
      %v3412 = vsel %vm784, %v1038, %v3199
      %v3413 = vsel %vm784, %v1041, %v3201
      %v3414 = vsel %vm784, %v1046, %v3203
      %v3415 = vsel %vm784, %v1049, %v3205
      %v3416 = vsel %vm784, %v1054, %v3207
      %v3417 = vsel %vm784, %v1057, %v3209
      %vm3418 = vcmask 261120
      %v3419 = vsel %vm3418, %v3410, %v3227
      %v3420 = vsel %vm3418, %v3411, %v3229
      %v3421 = vsel %vm3418, %v3412, %v3231
      %v3422 = vsel %vm3418, %v3413, %v3233
      %v3423 = vsel %vm3418, %v3414, %v3235
      %v3424 = vsel %vm3418, %v3415, %v3237
      %v3425 = vsel %vm3418, %v3416, %v3239
      %v3426 = vsel %vm3418, %v3417, %v3241
      %vm3427 = vcmask 392192
      %v3428 = vsel %vm3427, %v3419, %v3259
      %v3429 = vsel %vm3427, %v3420, %v3261
      %v3430 = vsel %vm3427, %v3421, %v3263
      %v3431 = vsel %vm3427, %v3422, %v3265
      %v3432 = vsel %vm3427, %v3423, %v3267
      %v3433 = vsel %vm3427, %v3424, %v3269
      %v3434 = vsel %vm3427, %v3425, %v3271
      %v3435 = vsel %vm3427, %v3426, %v3273
      %v3436 = vsel %vm890, %v3428, %v3291
      %v3437 = vsel %vm890, %v3429, %v3293
      %v3438 = vsel %vm890, %v3430, %v3295
      %v3439 = vsel %vm890, %v3431, %v3297
      %v3440 = vsel %vm890, %v3432, %v3299
      %v3441 = vsel %vm890, %v3433, %v3301
      %v3442 = vsel %vm890, %v3434, %v3303
      %v3443 = vsel %vm890, %v3435, %v3305
      %vm3444 = vcmask 654336
      %v3445 = vsel %vm3444, %v3436, %v3323
      %v3446 = vsel %vm3444, %v3437, %v3325
      %v3447 = vsel %vm3444, %v3438, %v3327
      %v3448 = vsel %vm3444, %v3439, %v3329
      %v3449 = vsel %vm3444, %v3440, %v3331
      %v3450 = vsel %vm3444, %v3441, %v3333
      %v3451 = vsel %vm3444, %v3442, %v3335
      %v3452 = vsel %vm3444, %v3443, %v3337
      %vm3453 = vcmask 785408
      %v3454 = vsel %vm3453, %v3445, %v3355
      %v3455 = vsel %vm3453, %v3446, %v3357
      %v3456 = vsel %vm3453, %v3447, %v3359
      %v3457 = vsel %vm3453, %v3448, %v3361
      %v3458 = vsel %vm3453, %v3449, %v3363
      %v3459 = vsel %vm3453, %v3450, %v3365
      %v3460 = vsel %vm3453, %v3451, %v3367
      %v3461 = vsel %vm3453, %v3452, %v3369
      %vm3462 = vcmask 916480
      %v3463 = vsel %vm3462, %v3454, %v3387
      %v3464 = vsel %vm3462, %v3455, %v3389
      %v3465 = vsel %vm3462, %v3456, %v3391
      %v3466 = vsel %vm3462, %v3457, %v3393
      %v3467 = vsel %vm3462, %v3458, %v3395
      %v3468 = vsel %vm3462, %v3459, %v3397
      %v3469 = vsel %vm3462, %v3460, %v3399
      %v3470 = vsel %vm3462, %v3461, %v3401
      %v3471 = vpack.c.bf16 %v3464, %v3463
      %v3472 = vpack.c.bf16 %v3466, %v3465
      %v3473 = vpack.c.bf16 %v3468, %v3467
      %v3474 = vpack.c.bf16 %v3470, %v3469
      %v3475 = vld [vmem:[%s3] sm:$0xf]
      %v3476 = vld [vmem:[%s3 + $0x4] sm:$0xf]
      %v3477 = vld [vmem:[%s3 + $0x8] sm:$0xf]
      %v3478 = vld [vmem:[%s3 + $0xc] sm:$0xf]
      %v3479 = vld [vmem:[%s3 + $0x10] sm:$0xf]
      %v3480 = vld [vmem:[%s3 + $0x14] sm:$0xf]
      %v3481 = vld [vmem:[%s3 + $0x18] sm:$0xf]
      %v3482 = vld [vmem:[%s3 + $0x1c] sm:$0xf]
      %v3483 = vld [vmem:[%s3 + $0x20] sm:$0xf]
      %v3484 = vld [vmem:[%s3 + $0x24] sm:$0xf]
      %v3485 = vld [vmem:[%s3 + $0x28] sm:$0xf]
      %v3486 = vld [vmem:[%s3 + $0x2c] sm:$0xf]
      %v3487 = vld [vmem:[%s3 + $0x30] sm:$0xf]
      %v3488 = vld [vmem:[%s3 + $0x34] sm:$0xf]
      %v3489 = vld [vmem:[%s3 + $0x38] sm:$0xf]
      %v3490 = vld [vmem:[%s3 + $0x3c] sm:$0xf]
      %v3491 = vld [vmem:[%s4] sm:$0x1]
      %v3493 = vlaneseq
      %v3494 = vshrl.u32 %v3493, 7
      %v3495 = vsub.s32 0, %v3494
      %v3496 = vrot.slane %v3491, %v3495
      %v3514 = vunpack.c.l.b16 %v3475
      %v3515 = vunpack.c.l.b16 %v3476
      %v3516 = vunpack.c.l.b16 %v3477
      %v3517 = vunpack.c.l.b16 %v3478
      %v3518 = vunpack.c.l.b16 %v3479
      %v3519 = vunpack.c.l.b16 %v3480
      %v3520 = vunpack.c.l.b16 %v3481
      %v3521 = vunpack.c.l.b16 %v3482
      %v3522 = vunpack.c.l.b16 %v3483
      %v3523 = vunpack.c.l.b16 %v3484
      %v3524 = vunpack.c.l.b16 %v3485
      %v3525 = vunpack.c.l.b16 %v3486
      %v3526 = vunpack.c.l.b16 %v3487
      %v3527 = vunpack.c.l.b16 %v3488
      %v3528 = vunpack.c.l.b16 %v3489
      %v3529 = vunpack.c.l.b16 %v3490
      %v3530 = vpack.c.b16 %v3515, %v3514
      %v3531 = vpack.c.b16 %v3517, %v3516
      %v3532 = vpack.c.b16 %v3519, %v3518
      %v3533 = vpack.c.b16 %v3521, %v3520
      %v3534 = vpack.c.b16 %v3523, %v3522
      %v3535 = vpack.c.b16 %v3525, %v3524
      %v3536 = vpack.c.b16 %v3527, %v3526
      %v3537 = vpack.c.b16 %v3529, %v3528
      %3546 = vmatprep.subr.bf16.mxu0 0
      %3547 = vmatpush1.bf16.msra.mxu0 %v3537
      %3548 = vmatprep.subr.bf16.mxu0 0
      %3549 = vmatpush1.bf16.msra.mxu0 %v3536
      %3550 = vmatprep.subr.bf16.mxu0 0
      %3551 = vmatpush1.bf16.msra.mxu0 %v3535
      %3552 = vmatprep.subr.bf16.mxu0 0
      %3553 = vmatpush1.bf16.msra.mxu0 %v3534
      %3554 = vmatprep.subr.bf16.mxu0 0
      %3555 = vmatpush1.bf16.msra.mxu0 %v3533
      %3556 = vmatprep.subr.bf16.mxu0 0
      %3557 = vmatpush1.bf16.msra.mxu0 %v3532
      %3558 = vmatprep.subr.bf16.mxu0 0
      %3559 = vmatpush1.bf16.msra.mxu0 %v3531
      %3560 = vmatprep.subr.bf16.mxu0 0
      %3561 = vmatpush1.bf16.msra.mxu0 %v3530
      %3562 = vmatprep.subr.bf16.mxu0 0
      %3563 = vmatpush2.bf16.msra.mxu0 0
      %3564 = vmatprep.subr.bf16.mxu0 0
      %3565 = vmatpush2.bf16.msra.mxu0 0
      %3566 = vmatprep.subr.bf16.mxu0 0
      %3567 = vmatpush2.bf16.msra.mxu0 0
      %3568 = vmatprep.subr.bf16.mxu0 0
      %3569 = vmatpush2.bf16.msra.mxu0 0
      %3570 = vmatprep.subr.bf16.mxu0 0
      %3571 = vmatpush2.bf16.msra.mxu0 0
      %3572 = vmatprep.subr.bf16.mxu0 0
      %3573 = vmatpush2.bf16.msra.mxu0 0
      %3574 = vmatprep.subr.bf16.mxu0 0
      %3575 = vmatpush2.bf16.msra.mxu0 0
      %3576 = vmatprep.subr.bf16.mxu0 0
      %3577 = vmatpush2.bf16.msra.mxu0 0
      %3578 = vmatprep.mubr.bf16.mxu0 0
      %3579 = vmatmul.mubr.bf16.gmra.mxu0 %v3471
      %v3580 = vpop.f32.mrf.mxu0
      %v3581 = vadd.f32 %v3496, %v3580
      %v3582 = vpop.f32.mrf.mxu0
      %v3583 = vpop.f32.mrf.mxu0
      %v3584 = vadd.f32 %v3496, %v3583
      %v3585 = vpop.f32.mrf.mxu0
      %3586 = vmatprep.mubr.bf16.mxu0 0
      %3587 = vmatmul.mubr.bf16.gmra.mxu0 %v3472
      %v3588 = vpop.f32.mrf.mxu0
      %v3589 = vadd.f32 %v3496, %v3588
      %v3590 = vpop.f32.mrf.mxu0
      %v3591 = vpop.f32.mrf.mxu0
      %v3592 = vadd.f32 %v3496, %v3591
      %v3593 = vpop.f32.mrf.mxu0
      %3594 = vmatprep.mubr.bf16.mxu0 0
      %3595 = vmatmul.mubr.bf16.gmra.mxu0 %v3473
      %v3596 = vpop.f32.mrf.mxu0
      %v3597 = vadd.f32 %v3496, %v3596
      %v3598 = vpop.f32.mrf.mxu0
      %v3599 = vpop.f32.mrf.mxu0
      %v3600 = vadd.f32 %v3496, %v3599
      %v3601 = vpop.f32.mrf.mxu0
      %3602 = vmatprep.mubr.bf16.mxu0 0
      %3603 = vmatmul.mubr.bf16.gmra.mxu0 %v3474
      %v3604 = vpop.f32.mrf.mxu0
      %v3605 = vadd.f32 %v3496, %v3604
      %v3606 = vpop.f32.mrf.mxu0
      %v3607 = vpop.f32.mrf.mxu0
      %v3608 = vadd.f32 %v3496, %v3607
      %v3609 = vpop.f32.mrf.mxu0
      %3610 = vdwg.mxu0
      %v3611 = vadd.f32 %v442, %v3581
      %v3612 = vadd.f32 %v443, %v3584
      %v3613 = vadd.f32 %v444, %v3589
      %v3614 = vadd.f32 %v445, %v3592
      %v3615 = vadd.f32 %v446, %v3597
      %v3616 = vadd.f32 %v447, %v3600
      %v3617 = vadd.f32 %v448, %v3605
      %v3618 = vadd.f32 %v449, %v3608
      %v3619 = vld [vmem:[%s5] sm:$0x1]
      %v3620 = vld [vmem:[%s6] sm:$0x1]
      %3621 = vadd.xlane.f32.xlu0 %v3611
      %v3622 = vpop.xlane.xlu0 %3621
      %3623 = vadd.xlane.f32.xlu0 %v3612
      %v3624 = vpop.xlane.xlu0 %3623
      %3625 = vadd.xlane.f32.xlu0 %v3613
      %v3626 = vpop.xlane.xlu0 %3625
      %3627 = vadd.xlane.f32.xlu0 %v3614
      %v3628 = vpop.xlane.xlu0 %3627
      %3629 = vadd.xlane.f32.xlu0 %v3615
      %v3630 = vpop.xlane.xlu0 %3629
      %3631 = vadd.xlane.f32.xlu0 %v3616
      %v3632 = vpop.xlane.xlu0 %3631
      %3633 = vadd.xlane.f32.xlu0 %v3617
      %v3634 = vpop.xlane.xlu0 %3633
      %3635 = vadd.xlane.f32.xlu0 %v3618
      %v3636 = vpop.xlane.xlu0 %3635
      %v3637 = vrcp.pop 128.0
      %v3638 = vmul.f32 %v3622, %v3637
      %v3639 = vmul.f32 %v3624, %v3637
      %v3640 = vmul.f32 %v3626, %v3637
      %v3641 = vmul.f32 %v3628, %v3637
      %v3642 = vmul.f32 %v3630, %v3637
      %v3643 = vmul.f32 %v3632, %v3637
      %v3644 = vmul.f32 %v3634, %v3637
      %v3645 = vmul.f32 %v3636, %v3637
      %v3646 = vsub.f32 %v3611, %v3638
      %v3647 = vsub.f32 %v3612, %v3639
      %v3648 = vsub.f32 %v3613, %v3640
      %v3649 = vsub.f32 %v3614, %v3641
      %v3650 = vsub.f32 %v3615, %v3642
      %v3651 = vsub.f32 %v3616, %v3643
      %v3652 = vsub.f32 %v3617, %v3644
      %v3653 = vsub.f32 %v3618, %v3645
      %v3654 = vmul.f32 %v3646, %v3646
      %v3655 = vmul.f32 %v3647, %v3647
      %v3656 = vmul.f32 %v3648, %v3648
      %v3657 = vmul.f32 %v3649, %v3649
      %v3658 = vmul.f32 %v3650, %v3650
      %v3659 = vmul.f32 %v3651, %v3651
      %v3660 = vmul.f32 %v3652, %v3652
      %v3661 = vmul.f32 %v3653, %v3653
      %3662 = vadd.xlane.f32.xlu0 %v3654
      %v3663 = vpop.xlane.xlu0 %3662
      %3664 = vadd.xlane.f32.xlu0 %v3655
      %v3665 = vpop.xlane.xlu0 %3664
      %3666 = vadd.xlane.f32.xlu0 %v3656
      %v3667 = vpop.xlane.xlu0 %3666
      %3668 = vadd.xlane.f32.xlu0 %v3657
      %v3669 = vpop.xlane.xlu0 %3668
      %3670 = vadd.xlane.f32.xlu0 %v3658
      %v3671 = vpop.xlane.xlu0 %3670
      %3672 = vadd.xlane.f32.xlu0 %v3659
      %v3673 = vpop.xlane.xlu0 %3672
      %3674 = vadd.xlane.f32.xlu0 %v3660
      %v3675 = vpop.xlane.xlu0 %3674
      %3676 = vadd.xlane.f32.xlu0 %v3661
      %v3677 = vpop.xlane.xlu0 %3676
      %v3678 = vmul.f32 %v3663, %v3637
      %v3679 = vmul.f32 %v3665, %v3637
      %v3680 = vmul.f32 %v3667, %v3637
      %v3681 = vmul.f32 %v3669, %v3637
      %v3682 = vmul.f32 %v3671, %v3637
      %v3683 = vmul.f32 %v3673, %v3637
      %v3684 = vmul.f32 %v3675, %v3637
      %v3685 = vmul.f32 %v3677, %v3637
      %v3686 = vadd.f32 %v3678, 1e-05
      %v3687 = vadd.f32 %v3679, 1e-05
      %v3688 = vadd.f32 %v3680, 1e-05
      %v3689 = vadd.f32 %v3681, 1e-05
      %v3690 = vadd.f32 %v3682, 1e-05
      %v3691 = vadd.f32 %v3683, 1e-05
      %v3692 = vadd.f32 %v3684, 1e-05
      %v3693 = vadd.f32 %v3685, 1e-05
      %v3694 = vrsqrt.pop %v3686
      %v3695 = vrsqrt.pop %v3687
      %v3696 = vrsqrt.pop %v3688
      %v3697 = vrsqrt.pop %v3689
      %v3698 = vrsqrt.pop %v3690
      %v3699 = vrsqrt.pop %v3691
      %v3700 = vrsqrt.pop %v3692
      %v3701 = vrsqrt.pop %v3693
      %v3702 = vmul.f32 %v3646, %v3694
      %v3703 = vmul.f32 %v3647, %v3695
      %v3704 = vmul.f32 %v3648, %v3696
      %v3705 = vmul.f32 %v3649, %v3697
      %v3706 = vmul.f32 %v3650, %v3698
      %v3707 = vmul.f32 %v3651, %v3699
      %v3708 = vmul.f32 %v3652, %v3700
      %v3709 = vmul.f32 %v3653, %v3701
      %v3711 = vlaneseq
      %v3712 = vshrl.u32 %v3711, 7
      %v3713 = vsub.s32 0, %v3712
      %v3714 = vrot.slane %v3619, %v3713
      %v3716 = vmul.f32 %v3702, %v3714
      %v3717 = vmul.f32 %v3703, %v3714
      %v3718 = vmul.f32 %v3704, %v3714
      %v3719 = vmul.f32 %v3705, %v3714
      %v3720 = vmul.f32 %v3706, %v3714
      %v3721 = vmul.f32 %v3707, %v3714
      %v3722 = vmul.f32 %v3708, %v3714
      %v3723 = vmul.f32 %v3709, %v3714
      %v3725 = vlaneseq
      %v3726 = vshrl.u32 %v3725, 7
      %v3727 = vsub.s32 0, %v3726
      %v3728 = vrot.slane %v3620, %v3727
      %v3730 = vadd.f32 %v3716, %v3728
      %v3731 = vadd.f32 %v3717, %v3728
      %v3732 = vadd.f32 %v3718, %v3728
      %v3733 = vadd.f32 %v3719, %v3728
      %v3734 = vadd.f32 %v3720, %v3728
      %v3735 = vadd.f32 %v3721, %v3728
      %v3736 = vadd.f32 %v3722, %v3728
      %v3737 = vadd.f32 %v3723, %v3728
      %v3738 = vpack.c.bf16 %v3731, %v3730
      %v3739 = vpack.c.bf16 %v3733, %v3732
      %v3740 = vpack.c.bf16 %v3735, %v3734
      %v3741 = vpack.c.bf16 %v3737, %v3736
      %v3742 = vld [vmem:[%s7] sm:$0xff]
      %v3743 = vld [vmem:[%s7 + $0x8] sm:$0xff]
      %v3744 = vld [vmem:[%s7 + $0x10] sm:$0xff]
      %v3745 = vld [vmem:[%s7 + $0x18] sm:$0xff]
      %v3746 = vld [vmem:[%s7 + $0x20] sm:$0xff]
      %v3747 = vld [vmem:[%s7 + $0x28] sm:$0xff]
      %v3748 = vld [vmem:[%s7 + $0x30] sm:$0xff]
      %v3749 = vld [vmem:[%s7 + $0x38] sm:$0xff]
      %v3750 = vld [vmem:[%s7 + $0x40] sm:$0xff]
      %v3751 = vld [vmem:[%s7 + $0x48] sm:$0xff]
      %v3752 = vld [vmem:[%s7 + $0x50] sm:$0xff]
      %v3753 = vld [vmem:[%s7 + $0x58] sm:$0xff]
      %v3754 = vld [vmem:[%s7 + $0x60] sm:$0xff]
      %v3755 = vld [vmem:[%s7 + $0x68] sm:$0xff]
      %v3756 = vld [vmem:[%s7 + $0x70] sm:$0xff]
      %v3757 = vld [vmem:[%s7 + $0x78] sm:$0xff]
      %v3758 = vld [vmem:[%s8] sm:$0x3]
      %v3760 = vlaneseq
      %v3761 = vshrl.u32 %v3760, 7
      %v3762 = vsub.s32 0, %v3761
      %v3763 = vrot.slane %v3758, %v3762
      %v3764 = vlaneseq
      %v3765 = vshrl.u32 %v3764, 7
      %v3766 = vsub.s32 1, %v3765
      %v3767 = vrot.slane %v3758, %v3766
      %v3786 = vunpack.c.l.b16 %v3742
      %v3787 = vunpack.c.h.b16 %v3742
      %v3788 = vunpack.c.l.b16 %v3743
      %v3789 = vunpack.c.h.b16 %v3743
      %v3790 = vunpack.c.l.b16 %v3744
      %v3791 = vunpack.c.h.b16 %v3744
      %v3792 = vunpack.c.l.b16 %v3745
      %v3793 = vunpack.c.h.b16 %v3745
      %v3794 = vunpack.c.l.b16 %v3746
      %v3795 = vunpack.c.h.b16 %v3746
      %v3796 = vunpack.c.l.b16 %v3747
      %v3797 = vunpack.c.h.b16 %v3747
      %v3798 = vunpack.c.l.b16 %v3748
      %v3799 = vunpack.c.h.b16 %v3748
      %v3800 = vunpack.c.l.b16 %v3749
      %v3801 = vunpack.c.h.b16 %v3749
      %v3802 = vunpack.c.l.b16 %v3750
      %v3803 = vunpack.c.h.b16 %v3750
      %v3804 = vunpack.c.l.b16 %v3751
      %v3805 = vunpack.c.h.b16 %v3751
      %v3806 = vunpack.c.l.b16 %v3752
      %v3807 = vunpack.c.h.b16 %v3752
      %v3808 = vunpack.c.l.b16 %v3753
      %v3809 = vunpack.c.h.b16 %v3753
      %v3810 = vunpack.c.l.b16 %v3754
      %v3811 = vunpack.c.h.b16 %v3754
      %v3812 = vunpack.c.l.b16 %v3755
      %v3813 = vunpack.c.h.b16 %v3755
      %v3814 = vunpack.c.l.b16 %v3756
      %v3815 = vunpack.c.h.b16 %v3756
      %v3816 = vunpack.c.l.b16 %v3757
      %v3817 = vunpack.c.h.b16 %v3757
      %v3818 = vpack.c.b16 %v3788, %v3786
      %v3819 = vpack.c.b16 %v3789, %v3787
      %v3820 = vpack.c.b16 %v3792, %v3790
      %v3821 = vpack.c.b16 %v3793, %v3791
      %v3822 = vpack.c.b16 %v3796, %v3794
      %v3823 = vpack.c.b16 %v3797, %v3795
      %v3824 = vpack.c.b16 %v3800, %v3798
      %v3825 = vpack.c.b16 %v3801, %v3799
      %v3826 = vpack.c.b16 %v3804, %v3802
      %v3827 = vpack.c.b16 %v3805, %v3803
      %v3828 = vpack.c.b16 %v3808, %v3806
      %v3829 = vpack.c.b16 %v3809, %v3807
      %v3830 = vpack.c.b16 %v3812, %v3810
      %v3831 = vpack.c.b16 %v3813, %v3811
      %v3832 = vpack.c.b16 %v3816, %v3814
      %v3833 = vpack.c.b16 %v3817, %v3815
      %3850 = vmatprep.subr.bf16.mxu0 %v3833
      %3851 = vmatpush1.bf16.msra.mxu0 %v3832
      %3852 = vmatprep.subr.bf16.mxu0 %v3831
      %3853 = vmatpush1.bf16.msra.mxu0 %v3830
      %3854 = vmatprep.subr.bf16.mxu0 %v3829
      %3855 = vmatpush1.bf16.msra.mxu0 %v3828
      %3856 = vmatprep.subr.bf16.mxu0 %v3827
      %3857 = vmatpush1.bf16.msra.mxu0 %v3826
      %3858 = vmatprep.subr.bf16.mxu0 %v3825
      %3859 = vmatpush1.bf16.msra.mxu0 %v3824
      %3860 = vmatprep.subr.bf16.mxu0 %v3823
      %3861 = vmatpush1.bf16.msra.mxu0 %v3822
      %3862 = vmatprep.subr.bf16.mxu0 %v3821
      %3863 = vmatpush1.bf16.msra.mxu0 %v3820
      %3864 = vmatprep.subr.bf16.mxu0 %v3819
      %3865 = vmatpush1.bf16.msra.mxu0 %v3818
      %3866 = vmatprep.subr.bf16.mxu0 0
      %3867 = vmatpush2.bf16.msra.mxu0 0
      %3868 = vmatprep.subr.bf16.mxu0 0
      %3869 = vmatpush2.bf16.msra.mxu0 0
      %3870 = vmatprep.subr.bf16.mxu0 0
      %3871 = vmatpush2.bf16.msra.mxu0 0
      %3872 = vmatprep.subr.bf16.mxu0 0
      %3873 = vmatpush2.bf16.msra.mxu0 0
      %3874 = vmatprep.subr.bf16.mxu0 0
      %3875 = vmatpush2.bf16.msra.mxu0 0
      %3876 = vmatprep.subr.bf16.mxu0 0
      %3877 = vmatpush2.bf16.msra.mxu0 0
      %3878 = vmatprep.subr.bf16.mxu0 0
      %3879 = vmatpush2.bf16.msra.mxu0 0
      %3880 = vmatprep.subr.bf16.mxu0 0
      %3881 = vmatpush2.bf16.msra.mxu0 0
      %3882 = vmatprep.mubr.bf16.mxu0 0
      %3883 = vmatmul.mubr.bf16.gmra.mxu0 %v3738
      %v3884 = vpop.f32.mrf.mxu0
      %v3885 = vadd.f32 %v3763, %v3884
      %v3886 = vpop.f32.mrf.mxu0
      %v3887 = vadd.f32 %v3767, %v3886
      %v3888 = vpop.f32.mrf.mxu0
      %v3889 = vadd.f32 %v3763, %v3888
      %v3890 = vpop.f32.mrf.mxu0
      %v3891 = vadd.f32 %v3767, %v3890
      %3892 = vmatprep.mubr.bf16.mxu0 0
      %3893 = vmatmul.mubr.bf16.gmra.mxu0 %v3739
      %v3894 = vpop.f32.mrf.mxu0
      %v3895 = vadd.f32 %v3763, %v3894
      %v3896 = vpop.f32.mrf.mxu0
      %v3897 = vadd.f32 %v3767, %v3896
      %v3898 = vpop.f32.mrf.mxu0
      %v3899 = vadd.f32 %v3763, %v3898
      %v3900 = vpop.f32.mrf.mxu0
      %v3901 = vadd.f32 %v3767, %v3900
      %3902 = vmatprep.mubr.bf16.mxu0 0
      %3903 = vmatmul.mubr.bf16.gmra.mxu0 %v3740
      %v3904 = vpop.f32.mrf.mxu0
      %v3905 = vadd.f32 %v3763, %v3904
      %v3906 = vpop.f32.mrf.mxu0
      %v3907 = vadd.f32 %v3767, %v3906
      %v3908 = vpop.f32.mrf.mxu0
      %v3909 = vadd.f32 %v3763, %v3908
      %v3910 = vpop.f32.mrf.mxu0
      %v3911 = vadd.f32 %v3767, %v3910
      %3912 = vmatprep.mubr.bf16.mxu0 0
      %3913 = vmatmul.mubr.bf16.gmra.mxu0 %v3741
      %v3914 = vpop.f32.mrf.mxu0
      %v3915 = vadd.f32 %v3763, %v3914
      %v3916 = vpop.f32.mrf.mxu0
      %v3917 = vadd.f32 %v3767, %v3916
      %v3918 = vpop.f32.mrf.mxu0
      %v3919 = vadd.f32 %v3763, %v3918
      %v3920 = vpop.f32.mrf.mxu0
      %v3921 = vadd.f32 %v3767, %v3920
      %3922 = vdwg.mxu0
      %v3923 = vmax.f32 %v3885, 0.0
      %v3924 = vmax.f32 %v3887, 0.0
      %v3925 = vmax.f32 %v3889, 0.0
      %v3926 = vmax.f32 %v3891, 0.0
      %v3927 = vmax.f32 %v3895, 0.0
      %v3928 = vmax.f32 %v3897, 0.0
      %v3929 = vmax.f32 %v3899, 0.0
      %v3930 = vmax.f32 %v3901, 0.0
      %v3931 = vmax.f32 %v3905, 0.0
      %v3932 = vmax.f32 %v3907, 0.0
      %v3933 = vmax.f32 %v3909, 0.0
      %v3934 = vmax.f32 %v3911, 0.0
      %v3935 = vmax.f32 %v3915, 0.0
      %v3936 = vmax.f32 %v3917, 0.0
      %v3937 = vmax.f32 %v3919, 0.0
      %v3938 = vmax.f32 %v3921, 0.0
      %v3939 = vpack.c.bf16 %v3925, %v3923
      %v3940 = vpack.c.bf16 %v3926, %v3924
      %v3941 = vpack.c.bf16 %v3929, %v3927
      %v3942 = vpack.c.bf16 %v3930, %v3928
      %v3943 = vpack.c.bf16 %v3933, %v3931
      %v3944 = vpack.c.bf16 %v3934, %v3932
      %v3945 = vpack.c.bf16 %v3937, %v3935
      %v3946 = vpack.c.bf16 %v3938, %v3936
      %v3947 = vld [vmem:[%s9] sm:$0xf]
      %v3948 = vld [vmem:[%s9 + $0x4] sm:$0xf]
      %v3949 = vld [vmem:[%s9 + $0x8] sm:$0xf]
      %v3950 = vld [vmem:[%s9 + $0xc] sm:$0xf]
      %v3951 = vld [vmem:[%s9 + $0x10] sm:$0xf]
      %v3952 = vld [vmem:[%s9 + $0x14] sm:$0xf]
      %v3953 = vld [vmem:[%s9 + $0x18] sm:$0xf]
      %v3954 = vld [vmem:[%s9 + $0x1c] sm:$0xf]
      %v3955 = vld [vmem:[%s9 + $0x20] sm:$0xf]
      %v3956 = vld [vmem:[%s9 + $0x24] sm:$0xf]
      %v3957 = vld [vmem:[%s9 + $0x28] sm:$0xf]
      %v3958 = vld [vmem:[%s9 + $0x2c] sm:$0xf]
      %v3959 = vld [vmem:[%s9 + $0x30] sm:$0xf]
      %v3960 = vld [vmem:[%s9 + $0x34] sm:$0xf]
      %v3961 = vld [vmem:[%s9 + $0x38] sm:$0xf]
      %v3962 = vld [vmem:[%s9 + $0x3c] sm:$0xf]
      %v3963 = vld [vmem:[%s9 + $0x40] sm:$0xf]
      %v3964 = vld [vmem:[%s9 + $0x44] sm:$0xf]
      %v3965 = vld [vmem:[%s9 + $0x48] sm:$0xf]
      %v3966 = vld [vmem:[%s9 + $0x4c] sm:$0xf]
      %v3967 = vld [vmem:[%s9 + $0x50] sm:$0xf]
      %v3968 = vld [vmem:[%s9 + $0x54] sm:$0xf]
      %v3969 = vld [vmem:[%s9 + $0x58] sm:$0xf]
      %v3970 = vld [vmem:[%s9 + $0x5c] sm:$0xf]
      %v3971 = vld [vmem:[%s9 + $0x60] sm:$0xf]
      %v3972 = vld [vmem:[%s9 + $0x64] sm:$0xf]
      %v3973 = vld [vmem:[%s9 + $0x68] sm:$0xf]
      %v3974 = vld [vmem:[%s9 + $0x6c] sm:$0xf]
      %v3975 = vld [vmem:[%s9 + $0x70] sm:$0xf]
      %v3976 = vld [vmem:[%s9 + $0x74] sm:$0xf]
      %v3977 = vld [vmem:[%s9 + $0x78] sm:$0xf]
      %v3978 = vld [vmem:[%s9 + $0x7c] sm:$0xf]
      %v3979 = vld [vmem:[%s10] sm:$0x1]
      %v3981 = vlaneseq
      %v3982 = vshrl.u32 %v3981, 7
      %v3983 = vsub.s32 0, %v3982
      %v3984 = vrot.slane %v3979, %v3983
      %v4018 = vunpack.c.l.b16 %v3947
      %v4019 = vunpack.c.l.b16 %v3948
      %v4020 = vunpack.c.l.b16 %v3949
      %v4021 = vunpack.c.l.b16 %v3950
      %v4022 = vunpack.c.l.b16 %v3951
      %v4023 = vunpack.c.l.b16 %v3952
      %v4024 = vunpack.c.l.b16 %v3953
      %v4025 = vunpack.c.l.b16 %v3954
      %v4026 = vunpack.c.l.b16 %v3955
      %v4027 = vunpack.c.l.b16 %v3956
      %v4028 = vunpack.c.l.b16 %v3957
      %v4029 = vunpack.c.l.b16 %v3958
      %v4030 = vunpack.c.l.b16 %v3959
      %v4031 = vunpack.c.l.b16 %v3960
      %v4032 = vunpack.c.l.b16 %v3961
      %v4033 = vunpack.c.l.b16 %v3962
      %v4034 = vunpack.c.l.b16 %v3963
      %v4035 = vunpack.c.l.b16 %v3964
      %v4036 = vunpack.c.l.b16 %v3965
      %v4037 = vunpack.c.l.b16 %v3966
      %v4038 = vunpack.c.l.b16 %v3967
      %v4039 = vunpack.c.l.b16 %v3968
      %v4040 = vunpack.c.l.b16 %v3969
      %v4041 = vunpack.c.l.b16 %v3970
      %v4042 = vunpack.c.l.b16 %v3971
      %v4043 = vunpack.c.l.b16 %v3972
      %v4044 = vunpack.c.l.b16 %v3973
      %v4045 = vunpack.c.l.b16 %v3974
      %v4046 = vunpack.c.l.b16 %v3975
      %v4047 = vunpack.c.l.b16 %v3976
      %v4048 = vunpack.c.l.b16 %v3977
      %v4049 = vunpack.c.l.b16 %v3978
      %v4050 = vpack.c.b16 %v4019, %v4018
      %v4051 = vpack.c.b16 %v4021, %v4020
      %v4052 = vpack.c.b16 %v4023, %v4022
      %v4053 = vpack.c.b16 %v4025, %v4024
      %v4054 = vpack.c.b16 %v4027, %v4026
      %v4055 = vpack.c.b16 %v4029, %v4028
      %v4056 = vpack.c.b16 %v4031, %v4030
      %v4057 = vpack.c.b16 %v4033, %v4032
      %v4058 = vpack.c.b16 %v4035, %v4034
      %v4059 = vpack.c.b16 %v4037, %v4036
      %v4060 = vpack.c.b16 %v4039, %v4038
      %v4061 = vpack.c.b16 %v4041, %v4040
      %v4062 = vpack.c.b16 %v4043, %v4042
      %v4063 = vpack.c.b16 %v4045, %v4044
      %v4064 = vpack.c.b16 %v4047, %v4046
      %v4065 = vpack.c.b16 %v4049, %v4048
      %4082 = vmatprep.subr.bf16.mxu0 0
      %4083 = vmatpush1.bf16.msra.mxu0 %v4057
      %4084 = vmatprep.subr.bf16.mxu0 0
      %4085 = vmatpush1.bf16.msra.mxu0 %v4056
      %4086 = vmatprep.subr.bf16.mxu0 0
      %4087 = vmatpush1.bf16.msra.mxu0 %v4055
      %4088 = vmatprep.subr.bf16.mxu0 0
      %4089 = vmatpush1.bf16.msra.mxu0 %v4054
      %4090 = vmatprep.subr.bf16.mxu0 0
      %4091 = vmatpush1.bf16.msra.mxu0 %v4053
      %4092 = vmatprep.subr.bf16.mxu0 0
      %4093 = vmatpush1.bf16.msra.mxu0 %v4052
      %4094 = vmatprep.subr.bf16.mxu0 0
      %4095 = vmatpush1.bf16.msra.mxu0 %v4051
      %4096 = vmatprep.subr.bf16.mxu0 0
      %4097 = vmatpush1.bf16.msra.mxu0 %v4050
      %4098 = vmatprep.subr.bf16.mxu0 0
      %4099 = vmatpush2.bf16.msra.mxu0 %v4065
      %4100 = vmatprep.subr.bf16.mxu0 0
      %4101 = vmatpush2.bf16.msra.mxu0 %v4064
      %4102 = vmatprep.subr.bf16.mxu0 0
      %4103 = vmatpush2.bf16.msra.mxu0 %v4063
      %4104 = vmatprep.subr.bf16.mxu0 0
      %4105 = vmatpush2.bf16.msra.mxu0 %v4062
      %4106 = vmatprep.subr.bf16.mxu0 0
      %4107 = vmatpush2.bf16.msra.mxu0 %v4061
      %4108 = vmatprep.subr.bf16.mxu0 0
      %4109 = vmatpush2.bf16.msra.mxu0 %v4060
      %4110 = vmatprep.subr.bf16.mxu0 0
      %4111 = vmatpush2.bf16.msra.mxu0 %v4059
      %4112 = vmatprep.subr.bf16.mxu0 0
      %4113 = vmatpush2.bf16.msra.mxu0 %v4058
      %4114 = vmatprep.mubr.bf16.mxu0 %v3940
      %4115 = vmatmul.mubr.bf16.gmra.mxu0 %v3939
      %v4116 = vpop.f32.mrf.mxu0
      %v4117 = vadd.f32 %v3984, %v4116
      %v4118 = vpop.f32.mrf.mxu0
      %v4119 = vpop.f32.mrf.mxu0
      %v4120 = vadd.f32 %v3984, %v4119
      %v4121 = vpop.f32.mrf.mxu0
      %4122 = vmatprep.mubr.bf16.mxu0 %v3942
      %4123 = vmatmul.mubr.bf16.gmra.mxu0 %v3941
      %v4124 = vpop.f32.mrf.mxu0
      %v4125 = vadd.f32 %v3984, %v4124
      %v4126 = vpop.f32.mrf.mxu0
      %v4127 = vpop.f32.mrf.mxu0
      %v4128 = vadd.f32 %v3984, %v4127
      %v4129 = vpop.f32.mrf.mxu0
      %4130 = vmatprep.mubr.bf16.mxu0 %v3944
      %4131 = vmatmul.mubr.bf16.gmra.mxu0 %v3943
      %v4132 = vpop.f32.mrf.mxu0
      %v4133 = vadd.f32 %v3984, %v4132
      %v4134 = vpop.f32.mrf.mxu0
      %v4135 = vpop.f32.mrf.mxu0
      %v4136 = vadd.f32 %v3984, %v4135
      %v4137 = vpop.f32.mrf.mxu0
      %4138 = vmatprep.mubr.bf16.mxu0 %v3946
      %4139 = vmatmul.mubr.bf16.gmra.mxu0 %v3945
      %v4140 = vpop.f32.mrf.mxu0
      %v4141 = vadd.f32 %v3984, %v4140
      %v4142 = vpop.f32.mrf.mxu0
      %v4143 = vpop.f32.mrf.mxu0
      %v4144 = vadd.f32 %v3984, %v4143
      %v4145 = vpop.f32.mrf.mxu0
      %4146 = vdwg.mxu0
      %v4147 = vadd.f32 %v3730, %v4117
      %v4148 = vadd.f32 %v3731, %v4120
      %v4149 = vadd.f32 %v3732, %v4125
      %v4150 = vadd.f32 %v3733, %v4128
      %v4151 = vadd.f32 %v3734, %v4133
      %v4152 = vadd.f32 %v3735, %v4136
      %v4153 = vadd.f32 %v3736, %v4141
      %v4154 = vadd.f32 %v3737, %v4144
      %v4155 = vld [vmem:[%s11] sm:$0x1]
      %v4156 = vld [vmem:[%s12] sm:$0x1]
      %4157 = vadd.xlane.f32.xlu0 %v4147
      %v4158 = vpop.xlane.xlu0 %4157
      %4159 = vadd.xlane.f32.xlu0 %v4148
      %v4160 = vpop.xlane.xlu0 %4159
      %4161 = vadd.xlane.f32.xlu0 %v4149
      %v4162 = vpop.xlane.xlu0 %4161
      %4163 = vadd.xlane.f32.xlu0 %v4150
      %v4164 = vpop.xlane.xlu0 %4163
      %4165 = vadd.xlane.f32.xlu0 %v4151
      %v4166 = vpop.xlane.xlu0 %4165
      %4167 = vadd.xlane.f32.xlu0 %v4152
      %v4168 = vpop.xlane.xlu0 %4167
      %4169 = vadd.xlane.f32.xlu0 %v4153
      %v4170 = vpop.xlane.xlu0 %4169
      %4171 = vadd.xlane.f32.xlu0 %v4154
      %v4172 = vpop.xlane.xlu0 %4171
      %v4173 = vmul.f32 %v4158, %v3637
      %v4174 = vmul.f32 %v4160, %v3637
      %v4175 = vmul.f32 %v4162, %v3637
      %v4176 = vmul.f32 %v4164, %v3637
      %v4177 = vmul.f32 %v4166, %v3637
      %v4178 = vmul.f32 %v4168, %v3637
      %v4179 = vmul.f32 %v4170, %v3637
      %v4180 = vmul.f32 %v4172, %v3637
      %v4181 = vsub.f32 %v4147, %v4173
      %v4182 = vsub.f32 %v4148, %v4174
      %v4183 = vsub.f32 %v4149, %v4175
      %v4184 = vsub.f32 %v4150, %v4176
      %v4185 = vsub.f32 %v4151, %v4177
      %v4186 = vsub.f32 %v4152, %v4178
      %v4187 = vsub.f32 %v4153, %v4179
      %v4188 = vsub.f32 %v4154, %v4180
      %v4189 = vmul.f32 %v4181, %v4181
      %v4190 = vmul.f32 %v4182, %v4182
      %v4191 = vmul.f32 %v4183, %v4183
      %v4192 = vmul.f32 %v4184, %v4184
      %v4193 = vmul.f32 %v4185, %v4185
      %v4194 = vmul.f32 %v4186, %v4186
      %v4195 = vmul.f32 %v4187, %v4187
      %v4196 = vmul.f32 %v4188, %v4188
      %4197 = vadd.xlane.f32.xlu0 %v4189
      %v4198 = vpop.xlane.xlu0 %4197
      %4199 = vadd.xlane.f32.xlu0 %v4190
      %v4200 = vpop.xlane.xlu0 %4199
      %4201 = vadd.xlane.f32.xlu0 %v4191
      %v4202 = vpop.xlane.xlu0 %4201
      %4203 = vadd.xlane.f32.xlu0 %v4192
      %v4204 = vpop.xlane.xlu0 %4203
      %4205 = vadd.xlane.f32.xlu0 %v4193
      %v4206 = vpop.xlane.xlu0 %4205
      %4207 = vadd.xlane.f32.xlu0 %v4194
      %v4208 = vpop.xlane.xlu0 %4207
      %4209 = vadd.xlane.f32.xlu0 %v4195
      %v4210 = vpop.xlane.xlu0 %4209
      %4211 = vadd.xlane.f32.xlu0 %v4196
      %v4212 = vpop.xlane.xlu0 %4211
      %v4213 = vmul.f32 %v4198, %v3637
      %v4214 = vmul.f32 %v4200, %v3637
      %v4215 = vmul.f32 %v4202, %v3637
      %v4216 = vmul.f32 %v4204, %v3637
      %v4217 = vmul.f32 %v4206, %v3637
      %v4218 = vmul.f32 %v4208, %v3637
      %v4219 = vmul.f32 %v4210, %v3637
      %v4220 = vmul.f32 %v4212, %v3637
      %v4221 = vadd.f32 %v4213, 1e-05
      %v4222 = vadd.f32 %v4214, 1e-05
      %v4223 = vadd.f32 %v4215, 1e-05
      %v4224 = vadd.f32 %v4216, 1e-05
      %v4225 = vadd.f32 %v4217, 1e-05
      %v4226 = vadd.f32 %v4218, 1e-05
      %v4227 = vadd.f32 %v4219, 1e-05
      %v4228 = vadd.f32 %v4220, 1e-05
      %v4229 = vrsqrt.pop %v4221
      %v4230 = vrsqrt.pop %v4222
      %v4231 = vrsqrt.pop %v4223
      %v4232 = vrsqrt.pop %v4224
      %v4233 = vrsqrt.pop %v4225
      %v4234 = vrsqrt.pop %v4226
      %v4235 = vrsqrt.pop %v4227
      %v4236 = vrsqrt.pop %v4228
      %v4237 = vmul.f32 %v4181, %v4229
      %v4238 = vmul.f32 %v4182, %v4230
      %v4239 = vmul.f32 %v4183, %v4231
      %v4240 = vmul.f32 %v4184, %v4232
      %v4241 = vmul.f32 %v4185, %v4233
      %v4242 = vmul.f32 %v4186, %v4234
      %v4243 = vmul.f32 %v4187, %v4235
      %v4244 = vmul.f32 %v4188, %v4236
      %v4246 = vlaneseq
      %v4247 = vshrl.u32 %v4246, 7
      %v4248 = vsub.s32 0, %v4247
      %v4249 = vrot.slane %v4155, %v4248
      %v4251 = vmul.f32 %v4237, %v4249
      %v4252 = vmul.f32 %v4238, %v4249
      %v4253 = vmul.f32 %v4239, %v4249
      %v4254 = vmul.f32 %v4240, %v4249
      %v4255 = vmul.f32 %v4241, %v4249
      %v4256 = vmul.f32 %v4242, %v4249
      %v4257 = vmul.f32 %v4243, %v4249
      %v4258 = vmul.f32 %v4244, %v4249
      %v4260 = vlaneseq
      %v4261 = vshrl.u32 %v4260, 7
      %v4262 = vsub.s32 0, %v4261
      %v4263 = vrot.slane %v4156, %v4262
      %v4265 = vadd.f32 %v4251, %v4263
      %v4266 = vadd.f32 %v4252, %v4263
      %v4267 = vadd.f32 %v4253, %v4263
      %v4268 = vadd.f32 %v4254, %v4263
      %v4269 = vadd.f32 %v4255, %v4263
      %v4270 = vadd.f32 %v4256, %v4263
      %v4271 = vadd.f32 %v4257, %v4263
      %v4272 = vadd.f32 %v4258, %v4263
      %4273 = vst [vmem:[%s440] sm:$0xff] %v4265
      %4274 = vst [vmem:[%s440 + $0x8] sm:$0xff] %v4266
      %4275 = vst [vmem:[%s440 + $0x10] sm:$0xff] %v4267
      %4276 = vst [vmem:[%s440 + $0x18] sm:$0xff] %v4268
      %4277 = vst [vmem:[%s440 + $0x20] sm:$0xff] %v4269
      %4278 = vst [vmem:[%s440 + $0x28] sm:$0xff] %v4270
      %4279 = vst [vmem:[%s440 + $0x30] sm:$0xff] %v4271
      %4280 = vst [vmem:[%s440 + $0x38] sm:$0xff] %v4272
      %p4281 = scmp.lt.s32.totalorder %s24, 3
      %s4282 = scalar_select %p4281, %s24, 3
      %s4283 = smul.addr %s4282, 8
      %s4284 = smul.addr %s4283, 8
      %s4285 = scalar_lea.vmem %s13, %s4284
      // Predicated region
      $region73: #{_lambda_.9} parent=71 // pred_check
        %p4286 = pneg %p320
      $region74: #{_lambda_.9} parent=71 // pred_check_branch
        %4288 = sbr.rel (%p4286) target = $region76
      $region75: #{_lambda_.9} parent=71 // pred_region
        _
      $region76: #{_lambda_.9} parent=71 // pred_fallthru
        _
    $region72: #{_lambda_.9} parent=5 // pred_fallthru
      _
    %p4289 = scmp.le.s32.totalorder 2, %s19
    // Predicated region
    $region77: #{_lambda_.9} parent=5 // pred_check
      %p4290 = pneg %p4289
    $region78: #{_lambda_.9} parent=5 // pred_check_branch
      %4292 = sbr.rel (%p4290) target = $region80
    $region79: #{_lambda_.9} parent=5 // pred_region
      %s4293 = ssub.s32 %s19, 2
      // Predicated region
      $region81: #{_lambda_.9} parent=79 // pred_check
        %p4294 = pneg %p326
      $region82: #{_lambda_.9} parent=79 // pred_check_branch
        %4296 = sbr.rel (%p4294) target = $region84
      $region83: #{_lambda_.9} parent=79 // pred_region
        %p4297 = scmp.lt.s32.totalorder %s25, 3
        %s4298 = scalar_select %p4297, %s25, 3
        %s4299 = smul.addr %s4298, 8
        %s4300 = smul.addr %s4299, 8
        %s4301 = scalar_lea.vmem %s13, %s4300
      $region84: #{_lambda_.9} parent=79 // pred_fallthru
        _
    $region80: #{_lambda_.9} parent=5 // pred_fallthru
      _
  $region6: #{_lambda_.9} parent=0 // loop_footer
    %s23 = sadd.s32 1, %s19
  $region7: #{_lambda_.9} parent=0 // loop_footer_branch
    %18 = sbr.rel target = $region3
  $region8: #{_lambda_.9} parent=0 // loop_exit
    _

</llo_original>
